<compile_context>
chip_gen: v7x
topology: tpu7x:2x2x1
jax: 0.10.0
libtpu: 0.0.40
codegen_flags: <defaults>
</compile_context>

<pallas_src>
import inspect

import jax
import jax.numpy as jnp
from jax.experimental import pallas as pl
from jax.experimental.pallas import tpu as pltpu

EPS = 1e-5

_HAS_BUFFERED = (hasattr(pl, "Buffered")
                 and "pipeline_mode" in inspect.signature(pl.BlockSpec).parameters)


def _round_up(x, m):
    return (x + m - 1) // m * m


def _resident_spec(block_shape, index_map):
    """Spec for a block whose index never changes (weights/scales/masks): single-buffer
    it to save VMEM headroom (v7x) when this JAX supports pipeline_mode."""
    if _HAS_BUFFERED:
        return pl.BlockSpec(block_shape, index_map, pipeline_mode=pl.Buffered(1))
    return pl.BlockSpec(block_shape, index_map)


# --------------------------------------------------------------------------- stage 1
def conv1x1_stats_kernel(x_ref, w_ref, y_ref, ssum_ref, ssq_ref):
    """One M-tile of the 1x1 conv: y = x @ w (bf16 operands, f32 accumulate), stored in
    bf16, plus per-tile per-channel f32 partial sums for the BN1 batch statistics."""
    y = jnp.dot(x_ref[...], w_ref[...], preferred_element_type=jnp.float32)
    y_ref[...] = y.astype(jnp.bfloat16)
    ssum_ref[...] = jnp.sum(y, axis=0, keepdims=True)[None]
    ssq_ref[...] = jnp.sum(y * y, axis=0, keepdims=True)[None]


# --------------------------------------------------------------------------- stage 2
def make_stage2_kernel(H, W, Wp, BH):
    """Per (image, row-band) step:
      1) build a zero-padded halo slab of the band's BN1(affine)+ReLU activation in a
         VMEM bf16 scratch (pad ring / out-of-image halo rows stay exactly zero),
      2) dilated 3x3 conv as a value chain of 9 shifted matmuls on the flat slab
         (tap (kh, kw) lives at flat row offset kh*2*Wp + kw*2),
      3) write the raw conv2 band + masked partial BN2 stats."""
    Lb = BH * Wp

    def kernel(x_ref, scale_ref, shift_ref, mo_ref, w_ref,
               y_ref, ssum_ref, ssq_ref, a_scr):
        band = pl.program_id(1)
        r0 = band * BH                       # first output row of this band

        # ---- halo slab: zero it, then scatter BN1+ReLU'd rows (cols [2, 2+W)) ------
        a_scr[...] = jnp.zeros_like(a_scr)
        scale = scale_ref[...]
        shift = shift_ref[...]
        for lr in range(BH + 4):             # padded rows r0 .. r0+BH+4 (2-row halo)
            img_row = r0 + lr - 2
            valid = jnp.logical_and(img_row >= 0, img_row < H)
            src = jnp.clip(img_row, 0, H - 1) * W
            row = x_ref[pl.ds(src, W), :].astype(jnp.float32)
            act = jnp.maximum(row * scale + shift, 0.0)
            act = act * valid.astype(jnp.float32)     # out-of-image halo rows -> 0
            a_scr[pl.ds(lr * Wp + 2, W), :] = act.astype(jnp.bfloat16)

        # ---- 9-tap dilated conv, value-chain accumulation (no scratch RMW) ---------
        acc = jnp.dot(a_scr[0:Lb, :], w_ref[0], preferred_element_type=jnp.float32)
        for k in range(1, 9):
            kh, kw = divmod(k, 3)
            off = kh * 2 * Wp + kw * 2
            acc = acc + jnp.dot(a_scr[off:off + Lb, :], w_ref[k],
                                preferred_element_type=jnp.float32)

        y_ref[...] = acc
        # BN2 partial stats over valid (non padded-width) columns; reuse the masked acc.
        am = acc * mo_ref[...]
        ssum_ref[...] = jnp.sum(am, axis=0, keepdims=True)[None]
        ssq_ref[...] = jnp.sum(acc * am, axis=0, keepdims=True)[None]

    return kernel


# --------------------------------------------------------------------------- stage 3
def bn_relu_kernel(y_ref, scale_ref, shift_ref, o_ref):
    o_ref[...] = jnp.maximum(y_ref[...] * scale_ref[...] + shift_ref[...], 0.0)


# --------------------------------------------------------------------------- wrapper
def model_forward(x_nchw, params):
    f32 = jnp.float32
    x = jnp.transpose(x_nchw, (0, 2, 3, 1))                       # NCHW -> NHWC
    N, H, W, Cin = x.shape
    C1 = params["w1"].shape[1]
    C2 = params["w2"].shape[-1]
    M = N * H * W
    HW = H * W

    w1 = params["w1"].astype(jnp.bfloat16)                        # (Cin, C1)
    w2 = params["w2"].reshape(9, C1, C2).astype(jnp.bfloat16)     # (kh*3+kw, C1, C2)

    cp1 = pltpu.CompilerParams(dimension_semantics=("parallel",),
                               vmem_limit_bytes=32 * 1024 * 1024)
    cp2 = pltpu.CompilerParams(dimension_semantics=("parallel", "parallel"),
                               vmem_limit_bytes=32 * 1024 * 1024)

    # ---------------- stage 1: tiled 1x1 conv (bf16 out) + BN1 partial stats --------
    TILE_M = 512 if M >= 512 else _round_up(M, 8)
    M_pad = _round_up(M, TILE_M)
    n_tiles = M_pad // TILE_M
    x2 = x.reshape(M, Cin).astype(jnp.bfloat16)
    if M_pad != M:
        x2 = jnp.pad(x2, ((0, M_pad - M), (0, 0)))    # zero rows contribute 0 to stats

    y1, s1, q1 = pl.pallas_call(
        conv1x1_stats_kernel,
        grid=(n_tiles,),
        in_specs=[pl.BlockSpec((TILE_M, Cin), lambda i: (i, 0)),
                  _resident_spec((Cin, C1), lambda i: (0, 0))],
        out_specs=(pl.BlockSpec((TILE_M, C1), lambda i: (i, 0)),
                   pl.BlockSpec((1, 1, C1), lambda i: (i, 0, 0)),
                   pl.BlockSpec((1, 1, C1), lambda i: (i, 0, 0))),
        out_shape=(jax.ShapeDtypeStruct((M_pad, C1), jnp.bfloat16),
                   jax.ShapeDtypeStruct((n_tiles, 1, C1), f32),
                   jax.ShapeDtypeStruct((n_tiles, 1, C1), f32)),
        compiler_params=cp1,
    )(x2, w1)

    mean1 = s1.sum(axis=(0, 1)) / M
    var1 = jnp.maximum(q1.sum(axis=(0, 1)) / M - mean1 * mean1, 0.0)
    inv1 = jax.lax.rsqrt(var1 + EPS)
    scale1 = (params["g1"] * inv1).reshape(1, C1).astype(f32)
    shift1 = (params["b1"] - mean1 * params["g1"] * inv1).reshape(1, C1).astype(f32)

    # ---------------- stage 2: fused BN1+ReLU + dilated 3x3 conv + BN2 stats --------
    NB = 2 if (H % 2 == 0 and H >= 4) else 1           # row bands per image
    BH = H // NB                                       # output rows per band
    Wp = _round_up(W + 4, 8)                           # padded width (sublane friendly)
    Lb = BH * Wp                                       # output rows per band (flat)
    S_rows = (BH + 4) * Wp + 8                         # halo slab rows (+ tail, mult of 8)
    # Static guards: tap offsets stay inside the slab; blocks stay sublane aligned.
    assert Wp >= W + 4
    assert S_rows >= Lb + 4 * Wp + 4, "halo slab too small for the 9-tap offsets"
    assert HW % 8 == 0 and Lb % 8 == 0, "H*W and band rows must be multiples of 8"

    mask_out = jnp.broadcast_to((jnp.arange(Wp) < W).astype(f32)[None, :],
                                (BH, Wp)).reshape(Lb, 1)

    stage2 = make_stage2_kernel(H, W, Wp, BH)
    y2, s2, q2 = pl.pallas_call(
        stage2,
        grid=(N, NB),
        in_specs=[pl.BlockSpec((HW, C1), lambda n, b: (n, 0)),
                  _resident_spec((1, C1), lambda n, b: (0, 0)),
                  _resident_spec((1, C1), lambda n, b: (0, 0)),
                  _resident_spec((Lb, 1), lambda n, b: (0, 0)),
                  _resident_spec((9, C1, C2), lambda n, b: (0, 0, 0))],
        out_specs=(pl.BlockSpec((Lb, C2), lambda n, b: (n * NB + b, 0)),
                   pl.BlockSpec((1, 1, C2), lambda n, b: (n * NB + b, 0, 0)),
                   pl.BlockSpec((1, 1, C2), lambda n, b: (n * NB + b, 0, 0))),
        out_shape=(jax.ShapeDtypeStruct((N * NB * Lb, C2), f32),
                   jax.ShapeDtypeStruct((N * NB, 1, C2), f32),
                   jax.ShapeDtypeStruct((N * NB, 1, C2), f32)),
        scratch_shapes=[pltpu.VMEM((S_rows, C1), jnp.bfloat16)],
        compiler_params=cp2,
    )(y1, scale1, shift1, mask_out, w2)

    cnt = N * H * W
    mean2 = s2.sum(axis=(0, 1)) / cnt
    var2 = jnp.maximum(q2.sum(axis=(0, 1)) / cnt - mean2 * mean2, 0.0)
    inv2 = jax.lax.rsqrt(var2 + EPS)
    scale2 = (params["g2"] * inv2).reshape(1, C2).astype(f32)
    shift2 = (params["b2"] - mean2 * params["g2"] * inv2).reshape(1, C2).astype(f32)

    # ---------------- stage 3: BN2 + ReLU epilogue (band tiled) ---------------------
    out_pad = pl.pallas_call(
        bn_relu_kernel,
        grid=(N * NB,),
        in_specs=[pl.BlockSpec((Lb, C2), lambda i: (i, 0)),
                  _resident_spec((1, C2), lambda i: (0, 0)),
                  _resident_spec((1, C2), lambda i: (0, 0))],
        out_specs=pl.BlockSpec((Lb, C2), lambda i: (i, 0)),
        out_shape=jax.ShapeDtypeStruct((N * NB * Lb, C2), f32),
        compiler_params=cp1,
    )(y2, scale2, shift2)

    # TODO(synk): emit NCHW (and drop the Wp-W dead columns) directly from stage 3 to
    # avoid this small XLA slice + relayout.
    out = out_pad.reshape(N, H, Wp, C2)[:, :, :W, :]
    return jnp.transpose(out, (0, 3, 1, 2))                       # NHWC -> NCHW


# --------------------------------------------------------------------------- reference
def _bn_stats(y):
    mean = jnp.mean(y, axis=(0, 1, 2))
    var = jnp.mean(jnp.square(y - mean), axis=(0, 1, 2))          # biased var (PyTorch)
    return mean, var


def reference_forward(x_nchw, params):
    # Mirrors the kernel's numerics: bf16 matmul operands, f32 accumulation, f32
    # BN/ReLU math, bf16 storage of the conv1 output and of the conv2 input.
    f32 = jnp.float32
    x = jnp.transpose(x_nchw, (0, 2, 3, 1)).astype(jnp.bfloat16)
    Cin, C1 = params["w1"].shape
    y1 = jax.lax.conv_general_dilated(
        x, params["w1"].reshape(1, 1, Cin, C1).astype(jnp.bfloat16),
        window_strides=(1, 1), padding=((0, 0), (0, 0)),
        dimension_numbers=("NHWC", "HWIO", "NHWC"),
        preferred_element_type=f32)
    mean1, var1 = _bn_stats(y1)
    scale1 = params["g1"] * jax.lax.rsqrt(var1 + EPS)
    shift1 = params["b1"] - mean1 * scale1
    y1b = y1.astype(jnp.bfloat16).astype(f32)                     # kernel stores y1 bf16
    a = jnp.maximum(y1b * scale1 + shift1, 0.0)
    y2 = jax.lax.conv_general_dilated(
        a.astype(jnp.bfloat16), params["w2"].astype(jnp.bfloat16),
        window_strides=(1, 1), padding=((2, 2), (2, 2)),
        rhs_dilation=(2, 2),
        dimension_numbers=("NHWC", "HWIO", "NHWC"),
        preferred_element_type=f32)
    mean2, var2 = _bn_stats(y2)
    scale2 = params["g2"] * jax.lax.rsqrt(var2 + EPS)
    shift2 = params["b2"] - mean2 * scale2
    out = jnp.maximum(y2 * scale2 + shift2, 0.0)
    return jnp.transpose(out, (0, 3, 1, 2))


# --------------------------------------------------------------------------- main
if __name__ == "__main__":
    # Small shapes consistent with the module structure (real module: 1x1024x28x28,
    # C1 = C2 = 256).
    N, Cin, H, W = 2, 256, 16, 16
    C1 = C2 = 128

    key = jax.random.PRNGKey(0)
    k_x, k_w1, k_w2, k_g1, k_b1, k_g2, k_b2 = jax.random.split(key, 7)

    x = jax.random.normal(k_x, (N, Cin, H, W), jnp.float32)       # NCHW input

    params = {
        "w1": jax.random.normal(k_w1, (Cin, C1), jnp.float32) * 0.05,       # 1x1 conv (Cin, Cout)
        "w2": jax.random.normal(k_w2, (3, 3, C1, C2), jnp.float32) * 0.05,  # 3x3 dilated conv (HWIO)
        "g1": 1.0 + 0.1 * jax.random.normal(k_g1, (C1,), jnp.float32),
        "b1": 0.1 * jax.random.normal(k_b1, (C1,), jnp.float32),
        "g2": 1.0 + 0.1 * jax.random.normal(k_g2, (C2,), jnp.float32),
        "b2": 0.1 * jax.random.normal(k_b2, (C2,), jnp.float32),
    }

    out = jax.block_until_ready(jax.jit(model_forward)(x, params))
    ref = jax.block_until_ready(jax.jit(reference_forward)(x, params))

    assert out.shape == (N, C2, H, W), out.shape
    max_err = float(jnp.max(jnp.abs(out - ref)))
    assert jnp.allclose(out, ref, rtol=2e-3, atol=2e-3), max_err

    print("KERNEL_OK")
</pallas_src>

<mosaic_0001>
module attributes {stable_mosaic.version = 11 : i64} {
  func.func @conv1x1_stats_kernel(%arg0: i32, %arg1: memref<512x256xbf16, #tpu.memory_space<vmem>>, %arg2: memref<256x128xbf16, #tpu.memory_space<vmem>>, %arg3: memref<512x128xbf16, #tpu.memory_space<vmem>>, %arg4: memref<1x1x128xf32, #tpu.memory_space<vmem>>, %arg5: memref<1x1x128xf32, #tpu.memory_space<vmem>>) attributes {dimension_semantics = [#tpu.dimension_semantics<parallel>], iteration_bounds = array<i64: 1>, scalar_prefetch = 0 : i64, scratch_operands = 0 : i64, tpu.core_type = #tpu.core_type<tc>, window_params = [{transform_indices = @transform_0, window_bounds = array<i64: 512, 256>}, {pipeline_mode = #tpu.pipeline_mode<synchronous>, transform_indices = @transform_1, window_bounds = array<i64: 256, 128>}, {transform_indices = @transform_2, window_bounds = array<i64: 512, 128>}, {transform_indices = @transform_3, window_bounds = array<i64: 1, 1, 128>}, {transform_indices = @transform_4, window_bounds = array<i64: 1, 1, 128>}]} {
    %c0 = arith.constant 0 : index
    %c0_0 = arith.constant 0 : index
    %0 = vector.load %arg1[%c0, %c0_0] : memref<512x256xbf16, #tpu.memory_space<vmem>>, vector<512x256xbf16>
    %c0_1 = arith.constant 0 : index
    %c0_2 = arith.constant 0 : index
    %1 = vector.load %arg2[%c0_1, %c0_2] : memref<256x128xbf16, #tpu.memory_space<vmem>>, vector<256x128xbf16>
    %cst = arith.constant dense<0.000000e+00> : vector<512x128xf32>
    %2 = tpu.matmul %0, %1, %cst {dimension_numbers = #tpu.dot_dimension_numbers<[1], [0], [0], [1], [0, 0, 1, 1], [], []>} : vector<512x256xbf16>, vector<256x128xbf16>, vector<512x128xf32> -> vector<512x128xf32>
    %3 = arith.truncf %2 : vector<512x128xf32> to vector<512x128xbf16>
    %c0_3 = arith.constant 0 : index
    %c0_4 = arith.constant 0 : index
    %4 = vector.load %arg3[%c0_3, %c0_4] : memref<512x128xbf16, #tpu.memory_space<vmem>>, vector<512x128xbf16>
    tpu.vector_store %arg3[%c0_3, %c0_4], %3 {strides = array<i32>} : memref<512x128xbf16, #tpu.memory_space<vmem>>, vector<512x128xbf16>,
    %cst_5 = arith.constant dense<0.000000e+00> : vector<128xf32>
    %5 = vector.multi_reduction <add>, %2, %cst_5 [0] : vector<512x128xf32> to vector<128xf32>
    %6 = vector.shape_cast %5 : vector<128xf32> to vector<1x128xf32>
    %7 = vector.shape_cast %6 : vector<1x128xf32> to vector<1x1x128xf32>
    %c0_6 = arith.constant 0 : index
    %c0_7 = arith.constant 0 : index
    %c0_8 = arith.constant 0 : index
    %8 = vector.load %arg4[%c0_6, %c0_7, %c0_8] : memref<1x1x128xf32, #tpu.memory_space<vmem>>, vector<1x1x128xf32>
    tpu.vector_store %arg4[%c0_6, %c0_7, %c0_8], %7 {strides = array<i32>} : memref<1x1x128xf32, #tpu.memory_space<vmem>>, vector<1x1x128xf32>,
    %9 = arith.mulf %2, %2 : vector<512x128xf32>
    %cst_9 = arith.constant dense<0.000000e+00> : vector<128xf32>
    %10 = vector.multi_reduction <add>, %9, %cst_9 [0] : vector<512x128xf32> to vector<128xf32>
    %11 = vector.shape_cast %10 : vector<128xf32> to vector<1x128xf32>
    %12 = vector.shape_cast %11 : vector<1x128xf32> to vector<1x1x128xf32>
    %c0_10 = arith.constant 0 : index
    %c0_11 = arith.constant 0 : index
    %c0_12 = arith.constant 0 : index
    %13 = vector.load %arg5[%c0_10, %c0_11, %c0_12] : memref<1x1x128xf32, #tpu.memory_space<vmem>>, vector<1x1x128xf32>
    tpu.vector_store %arg5[%c0_10, %c0_11, %c0_12], %12 {strides = array<i32>} : memref<1x1x128xf32, #tpu.memory_space<vmem>>, vector<1x1x128xf32>,
    return
  }
  func.func @transform_0(%arg0: i32) -> (i32, i32) {
    %c0_i32 = arith.constant 0 : i32
    %c0_i32_0 = arith.constant 0 : i32
    return %arg0, %c0_i32 : i32, i32
  }
  func.func @transform_1(%arg0: i32) -> (i32, i32) {
    %c0_i32 = arith.constant 0 : i32
    %c0_i32_0 = arith.constant 0 : i32
    %c0_i32_1 = arith.constant 0 : i32
    return %c0_i32, %c0_i32_0 : i32, i32
  }
  func.func @transform_2(%arg0: i32) -> (i32, i32) {
    %c0_i32 = arith.constant 0 : i32
    %c0_i32_0 = arith.constant 0 : i32
    return %arg0, %c0_i32 : i32, i32
  }
  func.func @transform_3(%arg0: i32) -> (i32, i32, i32) {
    %c0_i32 = arith.constant 0 : i32
    %c0_i32_0 = arith.constant 0 : i32
    %c0_i32_1 = arith.constant 0 : i32
    return %arg0, %c0_i32, %c0_i32_0 : i32, i32, i32
  }
  func.func @transform_4(%arg0: i32) -> (i32, i32, i32) {
    %c0_i32 = arith.constant 0 : i32
    %c0_i32_0 = arith.constant 0 : i32
    %c0_i32_1 = arith.constant 0 : i32
    return %arg0, %c0_i32, %c0_i32_0 : i32, i32, i32
  }
}

module attributes {stable_mosaic.version = 11 : i64} {
  func.func @kernel(%arg0: i32, %arg1: i32, %arg2: memref<256x128xbf16, #tpu.memory_space<vmem>>, %arg3: memref<1x128xf32, #tpu.memory_space<vmem>>, %arg4: memref<1x128xf32, #tpu.memory_space<vmem>>, %arg5: memref<192x1xf32, #tpu.memory_space<vmem>>, %arg6: memref<9x128x128xbf16, #tpu.memory_space<vmem>>, %arg7: memref<192x128xf32, #tpu.memory_space<vmem>>, %arg8: memref<1x1x128xf32, #tpu.memory_space<vmem>>, %arg9: memref<1x1x128xf32, #tpu.memory_space<vmem>>, %arg10: memref<296x128xbf16, #tpu.memory_space<vmem>>) attributes {dimension_semantics = [#tpu.dimension_semantics<parallel>, #tpu.dimension_semantics<parallel>], iteration_bounds = array<i64: 2, 2>, scalar_prefetch = 0 : i64, scratch_operands = 1 : i64, tpu.core_type = #tpu.core_type<tc>, window_params = [{transform_indices = @transform_0, window_bounds = array<i64: 256, 128>}, {pipeline_mode = #tpu.pipeline_mode<synchronous>, transform_indices = @transform_1, window_bounds = array<i64: 1, 128>}, {pipeline_mode = #tpu.pipeline_mode<synchronous>, transform_indices = @transform_2, window_bounds = array<i64: 1, 128>}, {pipeline_mode = #tpu.pipeline_mode<synchronous>, transform_indices = @transform_3, window_bounds = array<i64: 192, 1>}, {pipeline_mode = #tpu.pipeline_mode<synchronous>, transform_indices = @transform_4, window_bounds = array<i64: 9, 128, 128>}, {transform_indices = @transform_5, window_bounds = array<i64: 192, 128>}, {transform_indices = @transform_6, window_bounds = array<i64: 1, 1, 128>}, {transform_indices = @transform_7, window_bounds = array<i64: 1, 1, 128>}]} {
    %c8_i32 = arith.constant 8 : i32
    %0 = arith.muli %arg1, %c8_i32 : i32
    %cst = arith.constant 0.000000e+00 : bf16
    %1 = vector.broadcast %cst : bf16 to vector<296x128xbf16>
    %c0 = arith.constant 0 : index
    %c0_0 = arith.constant 0 : index
    %2 = vector.load %arg10[%c0, %c0_0] : memref<296x128xbf16, #tpu.memory_space<vmem>>, vector<296x128xbf16>
    tpu.vector_store %arg10[%c0, %c0_0], %1 {strides = array<i32>} : memref<296x128xbf16, #tpu.memory_space<vmem>>, vector<296x128xbf16>,
    %c0_1 = arith.constant 0 : index
    %c0_2 = arith.constant 0 : index
    %3 = vector.load %arg3[%c0_1, %c0_2] : memref<1x128xf32, #tpu.memory_space<vmem>>, vector<1x128xf32>
    %c0_3 = arith.constant 0 : index
    %c0_4 = arith.constant 0 : index
    %4 = vector.load %arg4[%c0_3, %c0_4] : memref<1x128xf32, #tpu.memory_space<vmem>>, vector<1x128xf32>
    %c0_i32 = arith.constant 0 : i32
    %5 = arith.addi %0, %c0_i32 : i32
    %c2_i32 = arith.constant 2 : i32
    %6 = arith.subi %5, %c2_i32 : i32
    %c0_i32_5 = arith.constant 0 : i32
    %7 = arith.cmpi sge, %6, %c0_i32_5 : i32
    %c16_i32 = arith.constant 16 : i32
    %8 = arith.cmpi slt, %6, %c16_i32 : i32
    %9 = arith.andi %7, %8 : i1
    %c0_i32_6 = arith.constant 0 : i32
    %c15_i32 = arith.constant 15 : i32
    %10 = arith.maxsi %c0_i32_6, %6 : i32
    %11 = arith.minsi %c15_i32, %10 : i32
    %c16_i32_7 = arith.constant 16 : i32
    %12 = arith.muli %11, %c16_i32_7 : i32
    %13 = arith.index_cast %12 : i32 to index
    %c0_8 = arith.constant 0 : index
    %14 = vector.load %arg2[%13, %c0_8] : memref<256x128xbf16, #tpu.memory_space<vmem>>, vector<16x128xbf16>
    %15 = arith.extf %14 : vector<16x128xbf16> to vector<16x128xf32>
    %16 = vector.broadcast %3 : vector<1x128xf32> to vector<16x128xf32>
    %17 = arith.mulf %15, %16 : vector<16x128xf32>
    %18 = vector.broadcast %4 : vector<1x128xf32> to vector<16x128xf32>
    %19 = arith.addf %17, %18 : vector<16x128xf32>
    %cst_9 = arith.constant 0.000000e+00 : f32
    %20 = vector.broadcast %cst_9 : f32 to vector<16x128xf32>
    %21 = arith.maximumf %19, %20 : vector<16x128xf32>
    %22 = arith.extui %9 : i1 to i32
    %23 = arith.sitofp %22 : i32 to f32
    %24 = vector.broadcast %23 : f32 to vector<16x128xf32>
    %25 = arith.mulf %21, %24 : vector<16x128xf32>
    %26 = arith.truncf %25 : vector<16x128xf32> to vector<16x128xbf16>
    %c2 = arith.constant 2 : index
    %c0_10 = arith.constant 0 : index
    %27 = vector.load %arg10[%c2, %c0_10] : memref<296x128xbf16, #tpu.memory_space<vmem>>, vector<16x128xbf16>
    tpu.vector_store %arg10[%c2, %c0_10], %26 {strides = array<i32>} : memref<296x128xbf16, #tpu.memory_space<vmem>>, vector<16x128xbf16>,
    %c1_i32 = arith.constant 1 : i32
    %28 = arith.addi %0, %c1_i32 : i32
    %c2_i32_11 = arith.constant 2 : i32
    %29 = arith.subi %28, %c2_i32_11 : i32
    %c0_i32_12 = arith.constant 0 : i32
    %30 = arith.cmpi sge, %29, %c0_i32_12 : i32
    %c16_i32_13 = arith.constant 16 : i32
    %31 = arith.cmpi slt, %29, %c16_i32_13 : i32
    %32 = arith.andi %30, %31 : i1
    %c0_i32_14 = arith.constant 0 : i32
    %c15_i32_15 = arith.constant 15 : i32
    %33 = arith.maxsi %c0_i32_14, %29 : i32
    %34 = arith.minsi %c15_i32_15, %33 : i32
    %c16_i32_16 = arith.constant 16 : i32
    %35 = arith.muli %34, %c16_i32_16 : i32
    %36 = arith.index_cast %35 : i32 to index
    %c0_17 = arith.constant 0 : index
    %37 = vector.load %arg2[%36, %c0_17] : memref<256x128xbf16, #tpu.memory_space<vmem>>, vector<16x128xbf16>
    %38 = arith.extf %37 : vector<16x128xbf16> to vector<16x128xf32>
    %39 = vector.broadcast %3 : vector<1x128xf32> to vector<16x128xf32>
    %40 = arith.mulf %38, %39 : vector<16x128xf32>
    %41 = vector.broadcast %4 : vector<1x128xf32> to vector<16x128xf32>
    %42 = arith.addf %40, %41 : vector<16x128xf32>
    %cst_18 = arith.constant 0.000000e+00 : f32
    %43 = vector.broadcast %cst_18 : f32 to vector<16x128xf32>
    %44 = arith.maximumf %42, %43 : vector<16x128xf32>
    %45 = arith.extui %32 : i1 to i32
    %46 = arith.sitofp %45 : i32 to f32
    %47 = vector.broadcast %46 : f32 to vector<16x128xf32>
    %48 = arith.mulf %44, %47 : vector<16x128xf32>
    %49 = arith.truncf %48 : vector<16x128xf32> to vector<16x128xbf16>
    %c26 = arith.constant 26 : index
    %c0_19 = arith.constant 0 : index
    %50 = vector.load %arg10[%c26, %c0_19] : memref<296x128xbf16, #tpu.memory_space<vmem>>, vector<16x128xbf16>
    tpu.vector_store %arg10[%c26, %c0_19], %49 {strides = array<i32>} : memref<296x128xbf16, #tpu.memory_space<vmem>>, vector<16x128xbf16>,
    %c2_i32_20 = arith.constant 2 : i32
    %51 = arith.addi %0, %c2_i32_20 : i32
    %c2_i32_21 = arith.constant 2 : i32
    %52 = arith.subi %51, %c2_i32_21 : i32
    %c0_i32_22 = arith.constant 0 : i32
    %53 = arith.cmpi sge, %52, %c0_i32_22 : i32
    %c16_i32_23 = arith.constant 16 : i32
    %54 = arith.cmpi slt, %52, %c16_i32_23 : i32
    %55 = arith.andi %53, %54 : i1
    %c0_i32_24 = arith.constant 0 : i32
    %c15_i32_25 = arith.constant 15 : i32
    %56 = arith.maxsi %c0_i32_24, %52 : i32
    %57 = arith.minsi %c15_i32_25, %56 : i32
    %c16_i32_26 = arith.constant 16 : i32
    %58 = arith.muli %57, %c16_i32_26 : i32
    %59 = arith.index_cast %58 : i32 to index
    %c0_27 = arith.constant 0 : index
    %60 = vector.load %arg2[%59, %c0_27] : memref<256x128xbf16, #tpu.memory_space<vmem>>, vector<16x128xbf16>
    %61 = arith.extf %60 : vector<16x128xbf16> to vector<16x128xf32>
    %62 = vector.broadcast %3 : vector<1x128xf32> to vector<16x128xf32>
    %63 = arith.mulf %61, %62 : vector<16x128xf32>
    %64 = vector.broadcast %4 : vector<1x128xf32> to vector<16x128xf32>
    %65 = arith.addf %63, %64 : vector<16x128xf32>
    %cst_28 = arith.constant 0.000000e+00 : f32
    %66 = vector.broadcast %cst_28 : f32 to vector<16x128xf32>
    %67 = arith.maximumf %65, %66 : vector<16x128xf32>
    %68 = arith.extui %55 : i1 to i32
    %69 = arith.sitofp %68 : i32 to f32
    %70 = vector.broadcast %69 : f32 to vector<16x128xf32>
    %71 = arith.mulf %67, %70 : vector<16x128xf32>
    %72 = arith.truncf %71 : vector<16x128xf32> to vector<16x128xbf16>
    %c50 = arith.constant 50 : index
    %c0_29 = arith.constant 0 : index
    %73 = vector.load %arg10[%c50, %c0_29] : memref<296x128xbf16, #tpu.memory_space<vmem>>, vector<16x128xbf16>
    tpu.vector_store %arg10[%c50, %c0_29], %72 {strides = array<i32>} : memref<296x128xbf16, #tpu.memory_space<vmem>>, vector<16x128xbf16>,
    %c3_i32 = arith.constant 3 : i32
    %74 = arith.addi %0, %c3_i32 : i32
    %c2_i32_30 = arith.constant 2 : i32
    %75 = arith.subi %74, %c2_i32_30 : i32
    %c0_i32_31 = arith.constant 0 : i32
    %76 = arith.cmpi sge, %75, %c0_i32_31 : i32
    %c16_i32_32 = arith.constant 16 : i32
    %77 = arith.cmpi slt, %75, %c16_i32_32 : i32
    %78 = arith.andi %76, %77 : i1
    %c0_i32_33 = arith.constant 0 : i32
    %c15_i32_34 = arith.constant 15 : i32
    %79 = arith.maxsi %c0_i32_33, %75 : i32
    %80 = arith.minsi %c15_i32_34, %79 : i32
    %c16_i32_35 = arith.constant 16 : i32
    %81 = arith.muli %80, %c16_i32_35 : i32
    %82 = arith.index_cast %81 : i32 to index
    %c0_36 = arith.constant 0 : index
    %83 = vector.load %arg2[%82, %c0_36] : memref<256x128xbf16, #tpu.memory_space<vmem>>, vector<16x128xbf16>
    %84 = arith.extf %83 : vector<16x128xbf16> to vector<16x128xf32>
    %85 = vector.broadcast %3 : vector<1x128xf32> to vector<16x128xf32>
    %86 = arith.mulf %84, %85 : vector<16x128xf32>
    %87 = vector.broadcast %4 : vector<1x128xf32> to vector<16x128xf32>
    %88 = arith.addf %86, %87 : vector<16x128xf32>
    %cst_37 = arith.constant 0.000000e+00 : f32
    %89 = vector.broadcast %cst_37 : f32 to vector<16x128xf32>
    %90 = arith.maximumf %88, %89 : vector<16x128xf32>
    %91 = arith.extui %78 : i1 to i32
    %92 = arith.sitofp %91 : i32 to f32
    %93 = vector.broadcast %92 : f32 to vector<16x128xf32>
    %94 = arith.mulf %90, %93 : vector<16x128xf32>
    %95 = arith.truncf %94 : vector<16x128xf32> to vector<16x128xbf16>
    %c74 = arith.constant 74 : index
    %c0_38 = arith.constant 0 : index
    %96 = vector.load %arg10[%c74, %c0_38] : memref<296x128xbf16, #tpu.memory_space<vmem>>, vector<16x128xbf16>
    tpu.vector_store %arg10[%c74, %c0_38], %95 {strides = array<i32>} : memref<296x128xbf16, #tpu.memory_space<vmem>>, vector<16x128xbf16>,
    %c4_i32 = arith.constant 4 : i32
    %97 = arith.addi %0, %c4_i32 : i32
    %c2_i32_39 = arith.constant 2 : i32
    %98 = arith.subi %97, %c2_i32_39 : i32
    %c0_i32_40 = arith.constant 0 : i32
    %99 = arith.cmpi sge, %98, %c0_i32_40 : i32
    %c16_i32_41 = arith.constant 16 : i32
    %100 = arith.cmpi slt, %98, %c16_i32_41 : i32
    %101 = arith.andi %99, %100 : i1
    %c0_i32_42 = arith.constant 0 : i32
    %c15_i32_43 = arith.constant 15 : i32
    %102 = arith.maxsi %c0_i32_42, %98 : i32
    %103 = arith.minsi %c15_i32_43, %102 : i32
    %c16_i32_44 = arith.constant 16 : i32
    %104 = arith.muli %103, %c16_i32_44 : i32
    %105 = arith.index_cast %104 : i32 to index
    %c0_45 = arith.constant 0 : index
    %106 = vector.load %arg2[%105, %c0_45] : memref<256x128xbf16, #tpu.memory_space<vmem>>, vector<16x128xbf16>
    %107 = arith.extf %106 : vector<16x128xbf16> to vector<16x128xf32>
    %108 = vector.broadcast %3 : vector<1x128xf32> to vector<16x128xf32>
    %109 = arith.mulf %107, %108 : vector<16x128xf32>
    %110 = vector.broadcast %4 : vector<1x128xf32> to vector<16x128xf32>
    %111 = arith.addf %109, %110 : vector<16x128xf32>
    %cst_46 = arith.constant 0.000000e+00 : f32
    %112 = vector.broadcast %cst_46 : f32 to vector<16x128xf32>
    %113 = arith.maximumf %111, %112 : vector<16x128xf32>
    %114 = arith.extui %101 : i1 to i32
    %115 = arith.sitofp %114 : i32 to f32
    %116 = vector.broadcast %115 : f32 to vector<16x128xf32>
    %117 = arith.mulf %113, %116 : vector<16x128xf32>
    %118 = arith.truncf %117 : vector<16x128xf32> to vector<16x128xbf16>
    %c98 = arith.constant 98 : index
    %c0_47 = arith.constant 0 : index
    %119 = vector.load %arg10[%c98, %c0_47] : memref<296x128xbf16, #tpu.memory_space<vmem>>, vector<16x128xbf16>
    tpu.vector_store %arg10[%c98, %c0_47], %118 {strides = array<i32>} : memref<296x128xbf16, #tpu.memory_space<vmem>>, vector<16x128xbf16>,
    %c5_i32 = arith.constant 5 : i32
    %120 = arith.addi %0, %c5_i32 : i32
    %c2_i32_48 = arith.constant 2 : i32
    %121 = arith.subi %120, %c2_i32_48 : i32
    %c0_i32_49 = arith.constant 0 : i32
    %122 = arith.cmpi sge, %121, %c0_i32_49 : i32
    %c16_i32_50 = arith.constant 16 : i32
    %123 = arith.cmpi slt, %121, %c16_i32_50 : i32
    %124 = arith.andi %122, %123 : i1
    %c0_i32_51 = arith.constant 0 : i32
    %c15_i32_52 = arith.constant 15 : i32
    %125 = arith.maxsi %c0_i32_51, %121 : i32
    %126 = arith.minsi %c15_i32_52, %125 : i32
    %c16_i32_53 = arith.constant 16 : i32
    %127 = arith.muli %126, %c16_i32_53 : i32
    %128 = arith.index_cast %127 : i32 to index
    %c0_54 = arith.constant 0 : index
    %129 = vector.load %arg2[%128, %c0_54] : memref<256x128xbf16, #tpu.memory_space<vmem>>, vector<16x128xbf16>
    %130 = arith.extf %129 : vector<16x128xbf16> to vector<16x128xf32>
    %131 = vector.broadcast %3 : vector<1x128xf32> to vector<16x128xf32>
    %132 = arith.mulf %130, %131 : vector<16x128xf32>
    %133 = vector.broadcast %4 : vector<1x128xf32> to vector<16x128xf32>
    %134 = arith.addf %132, %133 : vector<16x128xf32>
    %cst_55 = arith.constant 0.000000e+00 : f32
    %135 = vector.broadcast %cst_55 : f32 to vector<16x128xf32>
    %136 = arith.maximumf %134, %135 : vector<16x128xf32>
    %137 = arith.extui %124 : i1 to i32
    %138 = arith.sitofp %137 : i32 to f32
    %139 = vector.broadcast %138 : f32 to vector<16x128xf32>
    %140 = arith.mulf %136, %139 : vector<16x128xf32>
    %141 = arith.truncf %140 : vector<16x128xf32> to vector<16x128xbf16>
    %c122 = arith.constant 122 : index
    %c0_56 = arith.constant 0 : index
    %142 = vector.load %arg10[%c122, %c0_56] : memref<296x128xbf16, #tpu.memory_space<vmem>>, vector<16x128xbf16>
    tpu.vector_store %arg10[%c122, %c0_56], %141 {strides = array<i32>} : memref<296x128xbf16, #tpu.memory_space<vmem>>, vector<16x128xbf16>,
    %c6_i32 = arith.constant 6 : i32
    %143 = arith.addi %0, %c6_i32 : i32
    %c2_i32_57 = arith.constant 2 : i32
    %144 = arith.subi %143, %c2_i32_57 : i32
    %c0_i32_58 = arith.constant 0 : i32
    %145 = arith.cmpi sge, %144, %c0_i32_58 : i32
    %c16_i32_59 = arith.constant 16 : i32
    %146 = arith.cmpi slt, %144, %c16_i32_59 : i32
    %147 = arith.andi %145, %146 : i1
    %c0_i32_60 = arith.constant 0 : i32
    %c15_i32_61 = arith.constant 15 : i32
    %148 = arith.maxsi %c0_i32_60, %144 : i32
    %149 = arith.minsi %c15_i32_61, %148 : i32
    %c16_i32_62 = arith.constant 16 : i32
    %150 = arith.muli %149, %c16_i32_62 : i32
    %151 = arith.index_cast %150 : i32 to index
    %c0_63 = arith.constant 0 : index
    %152 = vector.load %arg2[%151, %c0_63] : memref<256x128xbf16, #tpu.memory_space<vmem>>, vector<16x128xbf16>
    %153 = arith.extf %152 : vector<16x128xbf16> to vector<16x128xf32>
    %154 = vector.broadcast %3 : vector<1x128xf32> to vector<16x128xf32>
    %155 = arith.mulf %153, %154 : vector<16x128xf32>
    %156 = vector.broadcast %4 : vector<1x128xf32> to vector<16x128xf32>
    %157 = arith.addf %155, %156 : vector<16x128xf32>
    %cst_64 = arith.constant 0.000000e+00 : f32
    %158 = vector.broadcast %cst_64 : f32 to vector<16x128xf32>
    %159 = arith.maximumf %157, %158 : vector<16x128xf32>
    %160 = arith.extui %147 : i1 to i32
    %161 = arith.sitofp %160 : i32 to f32
    %162 = vector.broadcast %161 : f32 to vector<16x128xf32>
    %163 = arith.mulf %159, %162 : vector<16x128xf32>
    %164 = arith.truncf %163 : vector<16x128xf32> to vector<16x128xbf16>
    %c146 = arith.constant 146 : index
    %c0_65 = arith.constant 0 : index
    %165 = vector.load %arg10[%c146, %c0_65] : memref<296x128xbf16, #tpu.memory_space<vmem>>, vector<16x128xbf16>
    tpu.vector_store %arg10[%c146, %c0_65], %164 {strides = array<i32>} : memref<296x128xbf16, #tpu.memory_space<vmem>>, vector<16x128xbf16>,
    %c7_i32 = arith.constant 7 : i32
    %166 = arith.addi %0, %c7_i32 : i32
    %c2_i32_66 = arith.constant 2 : i32
    %167 = arith.subi %166, %c2_i32_66 : i32
    %c0_i32_67 = arith.constant 0 : i32
    %168 = arith.cmpi sge, %167, %c0_i32_67 : i32
    %c16_i32_68 = arith.constant 16 : i32
    %169 = arith.cmpi slt, %167, %c16_i32_68 : i32
    %170 = arith.andi %168, %169 : i1
    %c0_i32_69 = arith.constant 0 : i32
    %c15_i32_70 = arith.constant 15 : i32
    %171 = arith.maxsi %c0_i32_69, %167 : i32
    %172 = arith.minsi %c15_i32_70, %171 : i32
    %c16_i32_71 = arith.constant 16 : i32
    %173 = arith.muli %172, %c16_i32_71 : i32
    %174 = arith.index_cast %173 : i32 to index
    %c0_72 = arith.constant 0 : index
    %175 = vector.load %arg2[%174, %c0_72] : memref<256x128xbf16, #tpu.memory_space<vmem>>, vector<16x128xbf16>
    %176 = arith.extf %175 : vector<16x128xbf16> to vector<16x128xf32>
    %177 = vector.broadcast %3 : vector<1x128xf32> to vector<16x128xf32>
    %178 = arith.mulf %176, %177 : vector<16x128xf32>
    %179 = vector.broadcast %4 : vector<1x128xf32> to vector<16x128xf32>
    %180 = arith.addf %178, %179 : vector<16x128xf32>
    %cst_73 = arith.constant 0.000000e+00 : f32
    %181 = vector.broadcast %cst_73 : f32 to vector<16x128xf32>
    %182 = arith.maximumf %180, %181 : vector<16x128xf32>
    %183 = arith.extui %170 : i1 to i32
    %184 = arith.sitofp %183 : i32 to f32
    %185 = vector.broadcast %184 : f32 to vector<16x128xf32>
    %186 = arith.mulf %182, %185 : vector<16x128xf32>
    %187 = arith.truncf %186 : vector<16x128xf32> to vector<16x128xbf16>
    %c170 = arith.constant 170 : index
    %c0_74 = arith.constant 0 : index
    %188 = vector.load %arg10[%c170, %c0_74] : memref<296x128xbf16, #tpu.memory_space<vmem>>, vector<16x128xbf16>
    tpu.vector_store %arg10[%c170, %c0_74], %187 {strides = array<i32>} : memref<296x128xbf16, #tpu.memory_space<vmem>>, vector<16x128xbf16>,
    %c8_i32_75 = arith.constant 8 : i32
    %189 = arith.addi %0, %c8_i32_75 : i32
    %c2_i32_76 = arith.constant 2 : i32
    %190 = arith.subi %189, %c2_i32_76 : i32
    %c0_i32_77 = arith.constant 0 : i32
    %191 = arith.cmpi sge, %190, %c0_i32_77 : i32
    %c16_i32_78 = arith.constant 16 : i32
    %192 = arith.cmpi slt, %190, %c16_i32_78 : i32
    %193 = arith.andi %191, %192 : i1
    %c0_i32_79 = arith.constant 0 : i32
    %c15_i32_80 = arith.constant 15 : i32
    %194 = arith.maxsi %c0_i32_79, %190 : i32
    %195 = arith.minsi %c15_i32_80, %194 : i32
    %c16_i32_81 = arith.constant 16 : i32
    %196 = arith.muli %195, %c16_i32_81 : i32
    %197 = arith.index_cast %196 : i32 to index
    %c0_82 = arith.constant 0 : index
    %198 = vector.load %arg2[%197, %c0_82] : memref<256x128xbf16, #tpu.memory_space<vmem>>, vector<16x128xbf16>
    %199 = arith.extf %198 : vector<16x128xbf16> to vector<16x128xf32>
    %200 = vector.broadcast %3 : vector<1x128xf32> to vector<16x128xf32>
    %201 = arith.mulf %199, %200 : vector<16x128xf32>
    %202 = vector.broadcast %4 : vector<1x128xf32> to vector<16x128xf32>
    %203 = arith.addf %201, %202 : vector<16x128xf32>
    %cst_83 = arith.constant 0.000000e+00 : f32
    %204 = vector.broadcast %cst_83 : f32 to vector<16x128xf32>
    %205 = arith.maximumf %203, %204 : vector<16x128xf32>
    %206 = arith.extui %193 : i1 to i32
    %207 = arith.sitofp %206 : i32 to f32
    %208 = vector.broadcast %207 : f32 to vector<16x128xf32>
    %209 = arith.mulf %205, %208 : vector<16x128xf32>
    %210 = arith.truncf %209 : vector<16x128xf32> to vector<16x128xbf16>
    %c194 = arith.constant 194 : index
    %c0_84 = arith.constant 0 : index
    %211 = vector.load %arg10[%c194, %c0_84] : memref<296x128xbf16, #tpu.memory_space<vmem>>, vector<16x128xbf16>
    tpu.vector_store %arg10[%c194, %c0_84], %210 {strides = array<i32>} : memref<296x128xbf16, #tpu.memory_space<vmem>>, vector<16x128xbf16>,
    %c9_i32 = arith.constant 9 : i32
    %212 = arith.addi %0, %c9_i32 : i32
    %c2_i32_85 = arith.constant 2 : i32
    %213 = arith.subi %212, %c2_i32_85 : i32
    %c0_i32_86 = arith.constant 0 : i32
    %214 = arith.cmpi sge, %213, %c0_i32_86 : i32
    %c16_i32_87 = arith.constant 16 : i32
    %215 = arith.cmpi slt, %213, %c16_i32_87 : i32
    %216 = arith.andi %214, %215 : i1
    %c0_i32_88 = arith.constant 0 : i32
    %c15_i32_89 = arith.constant 15 : i32
    %217 = arith.maxsi %c0_i32_88, %213 : i32
    %218 = arith.minsi %c15_i32_89, %217 : i32
    %c16_i32_90 = arith.constant 16 : i32
    %219 = arith.muli %218, %c16_i32_90 : i32
    %220 = arith.index_cast %219 : i32 to index
    %c0_91 = arith.constant 0 : index
    %221 = vector.load %arg2[%220, %c0_91] : memref<256x128xbf16, #tpu.memory_space<vmem>>, vector<16x128xbf16>
    %222 = arith.extf %221 : vector<16x128xbf16> to vector<16x128xf32>
    %223 = vector.broadcast %3 : vector<1x128xf32> to vector<16x128xf32>
    %224 = arith.mulf %222, %223 : vector<16x128xf32>
    %225 = vector.broadcast %4 : vector<1x128xf32> to vector<16x128xf32>
    %226 = arith.addf %224, %225 : vector<16x128xf32>
    %cst_92 = arith.constant 0.000000e+00 : f32
    %227 = vector.broadcast %cst_92 : f32 to vector<16x128xf32>
    %228 = arith.maximumf %226, %227 : vector<16x128xf32>
    %229 = arith.extui %216 : i1 to i32
    %230 = arith.sitofp %229 : i32 to f32
    %231 = vector.broadcast %230 : f32 to vector<16x128xf32>
    %232 = arith.mulf %228, %231 : vector<16x128xf32>
    %233 = arith.truncf %232 : vector<16x128xf32> to vector<16x128xbf16>
    %c218 = arith.constant 218 : index
    %c0_93 = arith.constant 0 : index
    %234 = vector.load %arg10[%c218, %c0_93] : memref<296x128xbf16, #tpu.memory_space<vmem>>, vector<16x128xbf16>
    tpu.vector_store %arg10[%c218, %c0_93], %233 {strides = array<i32>} : memref<296x128xbf16, #tpu.memory_space<vmem>>, vector<16x128xbf16>,
    %c10_i32 = arith.constant 10 : i32
    %235 = arith.addi %0, %c10_i32 : i32
    %c2_i32_94 = arith.constant 2 : i32
    %236 = arith.subi %235, %c2_i32_94 : i32
    %c0_i32_95 = arith.constant 0 : i32
    %237 = arith.cmpi sge, %236, %c0_i32_95 : i32
    %c16_i32_96 = arith.constant 16 : i32
    %238 = arith.cmpi slt, %236, %c16_i32_96 : i32
    %239 = arith.andi %237, %238 : i1
    %c0_i32_97 = arith.constant 0 : i32
    %c15_i32_98 = arith.constant 15 : i32
    %240 = arith.maxsi %c0_i32_97, %236 : i32
    %241 = arith.minsi %c15_i32_98, %240 : i32
    %c16_i32_99 = arith.constant 16 : i32
    %242 = arith.muli %241, %c16_i32_99 : i32
    %243 = arith.index_cast %242 : i32 to index
    %c0_100 = arith.constant 0 : index
    %244 = vector.load %arg2[%243, %c0_100] : memref<256x128xbf16, #tpu.memory_space<vmem>>, vector<16x128xbf16>
    %245 = arith.extf %244 : vector<16x128xbf16> to vector<16x128xf32>
    %246 = vector.broadcast %3 : vector<1x128xf32> to vector<16x128xf32>
    %247 = arith.mulf %245, %246 : vector<16x128xf32>
    %248 = vector.broadcast %4 : vector<1x128xf32> to vector<16x128xf32>
    %249 = arith.addf %247, %248 : vector<16x128xf32>
    %cst_101 = arith.constant 0.000000e+00 : f32
    %250 = vector.broadcast %cst_101 : f32 to vector<16x128xf32>
    %251 = arith.maximumf %249, %250 : vector<16x128xf32>
    %252 = arith.extui %239 : i1 to i32
    %253 = arith.sitofp %252 : i32 to f32
    %254 = vector.broadcast %253 : f32 to vector<16x128xf32>
    %255 = arith.mulf %251, %254 : vector<16x128xf32>
    %256 = arith.truncf %255 : vector<16x128xf32> to vector<16x128xbf16>
    %c242 = arith.constant 242 : index
    %c0_102 = arith.constant 0 : index
    %257 = vector.load %arg10[%c242, %c0_102] : memref<296x128xbf16, #tpu.memory_space<vmem>>, vector<16x128xbf16>
    tpu.vector_store %arg10[%c242, %c0_102], %256 {strides = array<i32>} : memref<296x128xbf16, #tpu.memory_space<vmem>>, vector<16x128xbf16>,
    %c11_i32 = arith.constant 11 : i32
    %258 = arith.addi %0, %c11_i32 : i32
    %c2_i32_103 = arith.constant 2 : i32
    %259 = arith.subi %258, %c2_i32_103 : i32
    %c0_i32_104 = arith.constant 0 : i32
    %260 = arith.cmpi sge, %259, %c0_i32_104 : i32
    %c16_i32_105 = arith.constant 16 : i32
    %261 = arith.cmpi slt, %259, %c16_i32_105 : i32
    %262 = arith.andi %260, %261 : i1
    %c0_i32_106 = arith.constant 0 : i32
    %c15_i32_107 = arith.constant 15 : i32
    %263 = arith.maxsi %c0_i32_106, %259 : i32
    %264 = arith.minsi %c15_i32_107, %263 : i32
    %c16_i32_108 = arith.constant 16 : i32
    %265 = arith.muli %264, %c16_i32_108 : i32
    %266 = arith.index_cast %265 : i32 to index
    %c0_109 = arith.constant 0 : index
    %267 = vector.load %arg2[%266, %c0_109] : memref<256x128xbf16, #tpu.memory_space<vmem>>, vector<16x128xbf16>
    %268 = arith.extf %267 : vector<16x128xbf16> to vector<16x128xf32>
    %269 = vector.broadcast %3 : vector<1x128xf32> to vector<16x128xf32>
    %270 = arith.mulf %268, %269 : vector<16x128xf32>
    %271 = vector.broadcast %4 : vector<1x128xf32> to vector<16x128xf32>
    %272 = arith.addf %270, %271 : vector<16x128xf32>
    %cst_110 = arith.constant 0.000000e+00 : f32
    %273 = vector.broadcast %cst_110 : f32 to vector<16x128xf32>
    %274 = arith.maximumf %272, %273 : vector<16x128xf32>
    %275 = arith.extui %262 : i1 to i32
    %276 = arith.sitofp %275 : i32 to f32
    %277 = vector.broadcast %276 : f32 to vector<16x128xf32>
    %278 = arith.mulf %274, %277 : vector<16x128xf32>
    %279 = arith.truncf %278 : vector<16x128xf32> to vector<16x128xbf16>
    %c266 = arith.constant 266 : index
    %c0_111 = arith.constant 0 : index
    %280 = vector.load %arg10[%c266, %c0_111] : memref<296x128xbf16, #tpu.memory_space<vmem>>, vector<16x128xbf16>
    tpu.vector_store %arg10[%c266, %c0_111], %279 {strides = array<i32>} : memref<296x128xbf16, #tpu.memory_space<vmem>>, vector<16x128xbf16>,
    %c0_112 = arith.constant 0 : index
    %c0_113 = arith.constant 0 : index
    %281 = vector.load %arg10[%c0_112, %c0_113] : memref<296x128xbf16, #tpu.memory_space<vmem>>, vector<192x128xbf16>
    %c0_114 = arith.constant 0 : index
    %c0_115 = arith.constant 0 : index
    %c0_116 = arith.constant 0 : index
    %282 = vector.load %arg6[%c0_114, %c0_115, %c0_116] : memref<9x128x128xbf16, #tpu.memory_space<vmem>>, vector<1x128x128xbf16>
    %283 = vector.shape_cast %282 : vector<1x128x128xbf16> to vector<128x128xbf16>
    %cst_117 = arith.constant dense<0.000000e+00> : vector<192x128xf32>
    %284 = tpu.matmul %281, %283, %cst_117 {dimension_numbers = #tpu.dot_dimension_numbers<[1], [0], [0], [1], [0, 0, 1, 1], [], []>} : vector<192x128xbf16>, vector<128x128xbf16>, vector<192x128xf32> -> vector<192x128xf32>
    %c2_118 = arith.constant 2 : index
    %c0_119 = arith.constant 0 : index
    %285 = vector.load %arg10[%c2_118, %c0_119] : memref<296x128xbf16, #tpu.memory_space<vmem>>, vector<192x128xbf16>
    %c1 = arith.constant 1 : index
    %c0_120 = arith.constant 0 : index
    %c0_121 = arith.constant 0 : index
    %286 = vector.load %arg6[%c1, %c0_120, %c0_121] : memref<9x128x128xbf16, #tpu.memory_space<vmem>>, vector<1x128x128xbf16>
    %287 = vector.shape_cast %286 : vector<1x128x128xbf16> to vector<128x128xbf16>
    %cst_122 = arith.constant dense<0.000000e+00> : vector<192x128xf32>
    %288 = tpu.matmul %285, %287, %cst_122 {dimension_numbers = #tpu.dot_dimension_numbers<[1], [0], [0], [1], [0, 0, 1, 1], [], []>} : vector<192x128xbf16>, vector<128x128xbf16>, vector<192x128xf32> -> vector<192x128xf32>
    %289 = arith.addf %284, %288 : vector<192x128xf32>
    %c4 = arith.constant 4 : index
    %c0_123 = arith.constant 0 : index
    %290 = vector.load %arg10[%c4, %c0_123] : memref<296x128xbf16, #tpu.memory_space<vmem>>, vector<192x128xbf16>
    %c2_124 = arith.constant 2 : index
    %c0_125 = arith.constant 0 : index
    %c0_126 = arith.constant 0 : index
    %291 = vector.load %arg6[%c2_124, %c0_125, %c0_126] : memref<9x128x128xbf16, #tpu.memory_space<vmem>>, vector<1x128x128xbf16>
    %292 = vector.shape_cast %291 : vector<1x128x128xbf16> to vector<128x128xbf16>
    %cst_127 = arith.constant dense<0.000000e+00> : vector<192x128xf32>
    %293 = tpu.matmul %290, %292, %cst_127 {dimension_numbers = #tpu.dot_dimension_numbers<[1], [0], [0], [1], [0, 0, 1, 1], [], []>} : vector<192x128xbf16>, vector<128x128xbf16>, vector<192x128xf32> -> vector<192x128xf32>
    %294 = arith.addf %289, %293 : vector<192x128xf32>
    %c48 = arith.constant 48 : index
    %c0_128 = arith.constant 0 : index
    %295 = vector.load %arg10[%c48, %c0_128] : memref<296x128xbf16, #tpu.memory_space<vmem>>, vector<192x128xbf16>
    %c3 = arith.constant 3 : index
    %c0_129 = arith.constant 0 : index
    %c0_130 = arith.constant 0 : index
    %296 = vector.load %arg6[%c3, %c0_129, %c0_130] : memref<9x128x128xbf16, #tpu.memory_space<vmem>>, vector<1x128x128xbf16>
    %297 = vector.shape_cast %296 : vector<1x128x128xbf16> to vector<128x128xbf16>
    %cst_131 = arith.constant dense<0.000000e+00> : vector<192x128xf32>
    %298 = tpu.matmul %295, %297, %cst_131 {dimension_numbers = #tpu.dot_dimension_numbers<[1], [0], [0], [1], [0, 0, 1, 1], [], []>} : vector<192x128xbf16>, vector<128x128xbf16>, vector<192x128xf32> -> vector<192x128xf32>
    %299 = arith.addf %294, %298 : vector<192x128xf32>
    %c50_132 = arith.constant 50 : index
    %c0_133 = arith.constant 0 : index
    %300 = vector.load %arg10[%c50_132, %c0_133] : memref<296x128xbf16, #tpu.memory_space<vmem>>, vector<192x128xbf16>
    %c4_134 = arith.constant 4 : index
    %c0_135 = arith.constant 0 : index
    %c0_136 = arith.constant 0 : index
    %301 = vector.load %arg6[%c4_134, %c0_135, %c0_136] : memref<9x128x128xbf16, #tpu.memory_space<vmem>>, vector<1x128x128xbf16>
    %302 = vector.shape_cast %301 : vector<1x128x128xbf16> to vector<128x128xbf16>
    %cst_137 = arith.constant dense<0.000000e+00> : vector<192x128xf32>
    %303 = tpu.matmul %300, %302, %cst_137 {dimension_numbers = #tpu.dot_dimension_numbers<[1], [0], [0], [1], [0, 0, 1, 1], [], []>} : vector<192x128xbf16>, vector<128x128xbf16>, vector<192x128xf32> -> vector<192x128xf32>
    %304 = arith.addf %299, %303 : vector<192x128xf32>
    %c52 = arith.constant 52 : index
    %c0_138 = arith.constant 0 : index
    %305 = vector.load %arg10[%c52, %c0_138] : memref<296x128xbf16, #tpu.memory_space<vmem>>, vector<192x128xbf16>
    %c5 = arith.constant 5 : index
    %c0_139 = arith.constant 0 : index
    %c0_140 = arith.constant 0 : index
    %306 = vector.load %arg6[%c5, %c0_139, %c0_140] : memref<9x128x128xbf16, #tpu.memory_space<vmem>>, vector<1x128x128xbf16>
    %307 = vector.shape_cast %306 : vector<1x128x128xbf16> to vector<128x128xbf16>
    %cst_141 = arith.constant dense<0.000000e+00> : vector<192x128xf32>
    %308 = tpu.matmul %305, %307, %cst_141 {dimension_numbers = #tpu.dot_dimension_numbers<[1], [0], [0], [1], [0, 0, 1, 1], [], []>} : vector<192x128xbf16>, vector<128x128xbf16>, vector<192x128xf32> -> vector<192x128xf32>
    %309 = arith.addf %304, %308 : vector<192x128xf32>
    %c96 = arith.constant 96 : index
    %c0_142 = arith.constant 0 : index
    %310 = vector.load %arg10[%c96, %c0_142] : memref<296x128xbf16, #tpu.memory_space<vmem>>, vector<192x128xbf16>
    %c6 = arith.constant 6 : index
    %c0_143 = arith.constant 0 : index
    %c0_144 = arith.constant 0 : index
    %311 = vector.load %arg6[%c6, %c0_143, %c0_144] : memref<9x128x128xbf16, #tpu.memory_space<vmem>>, vector<1x128x128xbf16>
    %312 = vector.shape_cast %311 : vector<1x128x128xbf16> to vector<128x128xbf16>
    %cst_145 = arith.constant dense<0.000000e+00> : vector<192x128xf32>
    %313 = tpu.matmul %310, %312, %cst_145 {dimension_numbers = #tpu.dot_dimension_numbers<[1], [0], [0], [1], [0, 0, 1, 1], [], []>} : vector<192x128xbf16>, vector<128x128xbf16>, vector<192x128xf32> -> vector<192x128xf32>
    %314 = arith.addf %309, %313 : vector<192x128xf32>
    %c98_146 = arith.constant 98 : index
    %c0_147 = arith.constant 0 : index
    %315 = vector.load %arg10[%c98_146, %c0_147] : memref<296x128xbf16, #tpu.memory_space<vmem>>, vector<192x128xbf16>
    %c7 = arith.constant 7 : index
    %c0_148 = arith.constant 0 : index
    %c0_149 = arith.constant 0 : index
    %316 = vector.load %arg6[%c7, %c0_148, %c0_149] : memref<9x128x128xbf16, #tpu.memory_space<vmem>>, vector<1x128x128xbf16>
    %317 = vector.shape_cast %316 : vector<1x128x128xbf16> to vector<128x128xbf16>
    %cst_150 = arith.constant dense<0.000000e+00> : vector<192x128xf32>
    %318 = tpu.matmul %315, %317, %cst_150 {dimension_numbers = #tpu.dot_dimension_numbers<[1], [0], [0], [1], [0, 0, 1, 1], [], []>} : vector<192x128xbf16>, vector<128x128xbf16>, vector<192x128xf32> -> vector<192x128xf32>
    %319 = arith.addf %314, %318 : vector<192x128xf32>
    %c100 = arith.constant 100 : index
    %c0_151 = arith.constant 0 : index
    %320 = vector.load %arg10[%c100, %c0_151] : memref<296x128xbf16, #tpu.memory_space<vmem>>, vector<192x128xbf16>
    %c8 = arith.constant 8 : index
    %c0_152 = arith.constant 0 : index
    %c0_153 = arith.constant 0 : index
    %321 = vector.load %arg6[%c8, %c0_152, %c0_153] : memref<9x128x128xbf16, #tpu.memory_space<vmem>>, vector<1x128x128xbf16>
    %322 = vector.shape_cast %321 : vector<1x128x128xbf16> to vector<128x128xbf16>
    %cst_154 = arith.constant dense<0.000000e+00> : vector<192x128xf32>
    %323 = tpu.matmul %320, %322, %cst_154 {dimension_numbers = #tpu.dot_dimension_numbers<[1], [0], [0], [1], [0, 0, 1, 1], [], []>} : vector<192x128xbf16>, vector<128x128xbf16>, vector<192x128xf32> -> vector<192x128xf32>
    %324 = arith.addf %319, %323 : vector<192x128xf32>
    %c0_155 = arith.constant 0 : index
    %c0_156 = arith.constant 0 : index
    %325 = vector.load %arg7[%c0_155, %c0_156] : memref<192x128xf32, #tpu.memory_space<vmem>>, vector<192x128xf32>
    tpu.vector_store %arg7[%c0_155, %c0_156], %324 {strides = array<i32>} : memref<192x128xf32, #tpu.memory_space<vmem>>, vector<192x128xf32>,
    %c0_157 = arith.constant 0 : index
    %c0_158 = arith.constant 0 : index
    %326 = vector.load %arg5[%c0_157, %c0_158] : memref<192x1xf32, #tpu.memory_space<vmem>>, vector<192x1xf32>
    %327 = vector.broadcast %326 : vector<192x1xf32> to vector<192x128xf32>
    %328 = arith.mulf %324, %327 : vector<192x128xf32>
    %cst_159 = arith.constant dense<0.000000e+00> : vector<128xf32>
    %329 = vector.multi_reduction <add>, %328, %cst_159 [0] : vector<192x128xf32> to vector<128xf32>
    %330 = vector.shape_cast %329 : vector<128xf32> to vector<1x128xf32>
    %331 = vector.shape_cast %330 : vector<1x128xf32> to vector<1x1x128xf32>
    %c0_160 = arith.constant 0 : index
    %c0_161 = arith.constant 0 : index
    %c0_162 = arith.constant 0 : index
    %332 = vector.load %arg8[%c0_160, %c0_161, %c0_162] : memref<1x1x128xf32, #tpu.memory_space<vmem>>, vector<1x1x128xf32>
    tpu.vector_store %arg8[%c0_160, %c0_161, %c0_162], %331 {strides = array<i32>} : memref<1x1x128xf32, #tpu.memory_space<vmem>>, vector<1x1x128xf32>,
    %333 = arith.mulf %324, %328 : vector<192x128xf32>
    %cst_163 = arith.constant dense<0.000000e+00> : vector<128xf32>
    %334 = vector.multi_reduction <add>, %333, %cst_163 [0] : vector<192x128xf32> to vector<128xf32>
    %335 = vector.shape_cast %334 : vector<128xf32> to vector<1x128xf32>
    %336 = vector.shape_cast %335 : vector<1x128xf32> to vector<1x1x128xf32>
    %c0_164 = arith.constant 0 : index
    %c0_165 = arith.constant 0 : index
    %c0_166 = arith.constant 0 : index
    %337 = vector.load %arg9[%c0_164, %c0_165, %c0_166] : memref<1x1x128xf32, #tpu.memory_space<vmem>>, vector<1x1x128xf32>
    tpu.vector_store %arg9[%c0_164, %c0_165, %c0_166], %336 {strides = array<i32>} : memref<1x1x128xf32, #tpu.memory_space<vmem>>, vector<1x1x128xf32>,
    return
  }
  func.func @transform_0(%arg0: i32, %arg1: i32) -> (i32, i32) {
    %c0_i32 = arith.constant 0 : i32
    %c0_i32_0 = arith.constant 0 : i32
    return %arg0, %c0_i32 : i32, i32
  }
  func.func @transform_1(%arg0: i32, %arg1: i32) -> (i32, i32) {
    %c0_i32 = arith.constant 0 : i32
    %c0_i32_0 = arith.constant 0 : i32
    %c0_i32_1 = arith.constant 0 : i32
    return %c0_i32, %c0_i32_0 : i32, i32
  }
  func.func @transform_2(%arg0: i32, %arg1: i32) -> (i32, i32) {
    %c0_i32 = arith.constant 0 : i32
    %c0_i32_0 = arith.constant 0 : i32
    %c0_i32_1 = arith.constant 0 : i32
    return %c0_i32, %c0_i32_0 : i32, i32
  }
  func.func @transform_3(%arg0: i32, %arg1: i32) -> (i32, i32) {
    %c0_i32 = arith.constant 0 : i32
    %c0_i32_0 = arith.constant 0 : i32
    %c0_i32_1 = arith.constant 0 : i32
    return %c0_i32, %c0_i32_0 : i32, i32
  }
  func.func @transform_4(%arg0: i32, %arg1: i32) -> (i32, i32, i32) {
    %c0_i32 = arith.constant 0 : i32
    %c0_i32_0 = arith.constant 0 : i32
    %c0_i32_1 = arith.constant 0 : i32
    %c0_i32_2 = arith.constant 0 : i32
    return %c0_i32, %c0_i32_0, %c0_i32_1 : i32, i32, i32
  }
  func.func @transform_5(%arg0: i32, %arg1: i32) -> (i32, i32) {
    %c2_i32 = arith.constant 2 : i32
    %0 = arith.muli %arg0, %c2_i32 : i32
    %1 = arith.addi %0, %arg1 : i32
    %c0_i32 = arith.constant 0 : i32
    %c0_i32_0 = arith.constant 0 : i32
    return %1, %c0_i32 : i32, i32
  }
  func.func @transform_6(%arg0: i32, %arg1: i32) -> (i32, i32, i32) {
    %c2_i32 = arith.constant 2 : i32
    %0 = arith.muli %arg0, %c2_i32 : i32
    %1 = arith.addi %0, %arg1 : i32
    %c0_i32 = arith.constant 0 : i32
    %c0_i32_0 = arith.constant 0 : i32
    %c0_i32_1 = arith.constant 0 : i32
    return %1, %c0_i32, %c0_i32_0 : i32, i32, i32
  }
  func.func @transform_7(%arg0: i32, %arg1: i32) -> (i32, i32, i32) {
    %c2_i32 = arith.constant 2 : i32
    %0 = arith.muli %arg0, %c2_i32 : i32
    %1 = arith.addi %0, %arg1 : i32
    %c0_i32 = arith.constant 0 : i32
    %c0_i32_0 = arith.constant 0 : i32
    %c0_i32_1 = arith.constant 0 : i32
    return %1, %c0_i32, %c0_i32_0 : i32, i32, i32
  }
}

module attributes {stable_mosaic.version = 11 : i64} {
  func.func @bn_relu_kernel(%arg0: i32, %arg1: memref<192x128xf32, #tpu.memory_space<vmem>>, %arg2: memref<1x128xf32, #tpu.memory_space<vmem>>, %arg3: memref<1x128xf32, #tpu.memory_space<vmem>>, %arg4: memref<192x128xf32, #tpu.memory_space<vmem>>) attributes {dimension_semantics = [#tpu.dimension_semantics<parallel>], iteration_bounds = array<i64: 4>, scalar_prefetch = 0 : i64, scratch_operands = 0 : i64, tpu.core_type = #tpu.core_type<tc>, window_params = [{transform_indices = @transform_0, window_bounds = array<i64: 192, 128>}, {pipeline_mode = #tpu.pipeline_mode<synchronous>, transform_indices = @transform_1, window_bounds = array<i64: 1, 128>}, {pipeline_mode = #tpu.pipeline_mode<synchronous>, transform_indices = @transform_2, window_bounds = array<i64: 1, 128>}, {transform_indices = @transform_3, window_bounds = array<i64: 192, 128>}]} {
    %c0 = arith.constant 0 : index
    %c0_0 = arith.constant 0 : index
    %0 = vector.load %arg1[%c0, %c0_0] : memref<192x128xf32, #tpu.memory_space<vmem>>, vector<192x128xf32>
    %c0_1 = arith.constant 0 : index
    %c0_2 = arith.constant 0 : index
    %1 = vector.load %arg2[%c0_1, %c0_2] : memref<1x128xf32, #tpu.memory_space<vmem>>, vector<1x128xf32>
    %2 = vector.broadcast %1 : vector<1x128xf32> to vector<192x128xf32>
    %3 = arith.mulf %0, %2 : vector<192x128xf32>
    %c0_3 = arith.constant 0 : index
    %c0_4 = arith.constant 0 : index
    %4 = vector.load %arg3[%c0_3, %c0_4] : memref<1x128xf32, #tpu.memory_space<vmem>>, vector<1x128xf32>
    %5 = vector.broadcast %4 : vector<1x128xf32> to vector<192x128xf32>
    %6 = arith.addf %3, %5 : vector<192x128xf32>
    %cst = arith.constant 0.000000e+00 : f32
    %7 = vector.broadcast %cst : f32 to vector<192x128xf32>
    %8 = arith.maximumf %6, %7 : vector<192x128xf32>
    %c0_5 = arith.constant 0 : index
    %c0_6 = arith.constant 0 : index
    %9 = vector.load %arg4[%c0_5, %c0_6] : memref<192x128xf32, #tpu.memory_space<vmem>>, vector<192x128xf32>
    tpu.vector_store %arg4[%c0_5, %c0_6], %8 {strides = array<i32>} : memref<192x128xf32, #tpu.memory_space<vmem>>, vector<192x128xf32>,
    return
  }
  func.func @transform_0(%arg0: i32) -> (i32, i32) {
    %c0_i32 = arith.constant 0 : i32
    %c0_i32_0 = arith.constant 0 : i32
    return %arg0, %c0_i32 : i32, i32
  }
  func.func @transform_1(%arg0: i32) -> (i32, i32) {
    %c0_i32 = arith.constant 0 : i32
    %c0_i32_0 = arith.constant 0 : i32
    %c0_i32_1 = arith.constant 0 : i32
    return %c0_i32, %c0_i32_0 : i32, i32
  }
  func.func @transform_2(%arg0: i32) -> (i32, i32) {
    %c0_i32 = arith.constant 0 : i32
    %c0_i32_0 = arith.constant 0 : i32
    %c0_i32_1 = arith.constant 0 : i32
    return %c0_i32, %c0_i32_0 : i32, i32
  }
  func.func @transform_3(%arg0: i32) -> (i32, i32) {
    %c0_i32 = arith.constant 0 : i32
    %c0_i32_0 = arith.constant 0 : i32
    return %arg0, %c0_i32 : i32, i32
  }
}

</mosaic_0001>

<llo_original>
// kernel: model_forward.5
$region0: #{model_forward.5}
  #allocation0 [shape = 'u32[]', space=smem, size = 0x4, offset = 0x4, fixed_abs, tag = 'smem constant byte address 0x4 - core index']
  #allocation1 [shape = 'u32[144,128]{1,0:T(1,128)}', space=vmem, size = 0x12000, scoped, tag = 'internal scratch']
  %s0 = inlined_call_operand.vmem [shape: f32[768,128], index: 0, kind: input, shape index: {}]
  %s1 = inlined_call_operand.vmem [shape: f32[1,128], index: 1, kind: input, shape index: {}]
  %s2 = inlined_call_operand.vmem [shape: f32[1,128], index: 2, kind: input, shape index: {}]
  %s3 = inlined_call_operand.vmem [shape: f32[768,128], index: 3, kind: output, shape index: {}]
  %s4 = sld [smem:[#allocation0]]
  $region45: #{model_forward.5} parent=0
    _
  %s6 = ssub.s32 1, %s4
  %s7 = scalar_select 0, %s6, %s4
  loop: start=0, step=1, limit=6
  $region2: #{model_forward.5} parent=0 // loop_pre_header
    _
  $region3: #{model_forward.5} parent=0 // loop_header
    %s9 = sphi 0, %s13
    %p10 = scmp.ge.s32.totalorder %s9, 6
    %s19 = sphi 0, %s21
    %s22 = sphi 0, %s19
    %s23 = sphi 0, %s22
    %s39 = sphi 0, %s23
    %s43 = sphi 0, %s43
    %s45 = sphi 0, %s43
    %s46 = sphi 0, %s45
    %s60 = sphi 0, %s46
    %s64 = sphi 0, %s64
    %s66 = sphi 0, %s64
    %s67 = sphi 0, %s66
    %s81 = sphi 0, %s67
    %s87 = sphi 0, %s89
    %s90 = sphi 0, %s87
    %s91 = sphi 0, %s90
    %s107 = sphi 0, %s91
  $region4: #{model_forward.5} parent=0 // loop_header_branch
    %12 = sbr.rel (%p10) target = $region8
  $region5: #{model_forward.5} parent=0 // loop_body
    %s14 = ssub.s32 %s9, 1
    %s15 = ssub.s32 %s9, 2
    %s16 = sadd.s32 %s9, 1
    %s17 = ssub.s32 %s9, %s16
    %p18 = scmp.eq.s32.totalorder %s17, 0
    %s20 = sadd.s32 %s19, 1
    %s21 = scalar_select %p18, %s19, %s20
    %p24 = pneg %p18
    %p25 = scmp.eq.s32.totalorder %s9, 3
    %p26 = por %p24, %p25
    %p27 = scmp.ne.s32.totalorder %s19, %s22
    %p28 = scmp.eq.s32.totalorder %s9, 0
    %p29 = por %p27, %p28
    %p30 = scmp.ne.s32.totalorder %s19, %s22
    %p31 = scmp.eq.s32.totalorder %s14, 3
    %p32 = por %p30, %p31
    %p33 = scmp.ne.s32.totalorder %s22, %s23
    %p34 = scmp.eq.s32.totalorder %s14, 0
    %p35 = por %p33, %p34
    %p36 = scmp.ne.s32.totalorder %s22, %s23
    %p37 = scmp.eq.s32.totalorder %s15, 3
    %p38 = por %p36, %p37
    %p40 = scmp.ne.s32.totalorder %s23, %s39
    %p41 = scmp.eq.s32.totalorder %s15, 0
    %p42 = por %p40, %p41
    %s44 = sadd.s32 %s43, 1
    %p47 = scmp.eq.s32.totalorder %s9, 3
    %p48 = scmp.ne.s32.totalorder %s43, %s45
    %p49 = scmp.eq.s32.totalorder %s9, 0
    %p50 = por %p48, %p49
    %p51 = scmp.ne.s32.totalorder %s43, %s45
    %p52 = scmp.eq.s32.totalorder %s14, 3
    %p53 = por %p51, %p52
    %p54 = scmp.ne.s32.totalorder %s45, %s46
    %p55 = scmp.eq.s32.totalorder %s14, 0
    %p56 = por %p54, %p55
    %p57 = scmp.ne.s32.totalorder %s45, %s46
    %p58 = scmp.eq.s32.totalorder %s15, 3
    %p59 = por %p57, %p58
    %p61 = scmp.ne.s32.totalorder %s46, %s60
    %p62 = scmp.eq.s32.totalorder %s15, 0
    %p63 = por %p61, %p62
    %s65 = sadd.s32 %s64, 1
    %p68 = scmp.eq.s32.totalorder %s9, 3
    %p69 = scmp.ne.s32.totalorder %s64, %s66
    %p70 = scmp.eq.s32.totalorder %s9, 0
    %p71 = por %p69, %p70
    %p72 = scmp.ne.s32.totalorder %s64, %s66
    %p73 = scmp.eq.s32.totalorder %s14, 3
    %p74 = por %p72, %p73
    %p75 = scmp.ne.s32.totalorder %s66, %s67
    %p76 = scmp.eq.s32.totalorder %s14, 0
    %p77 = por %p75, %p76
    %p78 = scmp.ne.s32.totalorder %s66, %s67
    %p79 = scmp.eq.s32.totalorder %s15, 3
    %p80 = por %p78, %p79
    %p82 = scmp.ne.s32.totalorder %s67, %s81
    %p83 = scmp.eq.s32.totalorder %s15, 0
    %p84 = por %p82, %p83
    %s85 = ssub.s32 %s9, %s16
    %p86 = scmp.eq.s32.totalorder %s85, 0
    %s88 = sadd.s32 %s87, 1
    %s89 = scalar_select %p86, %s87, %s88
    %p92 = pneg %p86
    %p93 = scmp.eq.s32.totalorder %s9, 3
    %p94 = por %p92, %p93
    %p95 = scmp.ne.s32.totalorder %s87, %s90
    %p96 = scmp.eq.s32.totalorder %s9, 0
    %p97 = por %p95, %p96
    %p98 = scmp.ne.s32.totalorder %s87, %s90
    %p99 = scmp.eq.s32.totalorder %s14, 3
    %p100 = por %p98, %p99
    %p101 = scmp.ne.s32.totalorder %s90, %s91
    %p102 = scmp.eq.s32.totalorder %s14, 0
    %p103 = por %p101, %p102
    %p104 = scmp.ne.s32.totalorder %s90, %s91
    %p105 = scmp.eq.s32.totalorder %s15, 3
    %p106 = por %p104, %p105
    %p108 = scmp.ne.s32.totalorder %s91, %s107
    %p109 = scmp.eq.s32.totalorder %s15, 0
    %p110 = por %p108, %p109
    %p111 = scmp.le.s32.totalorder 1, %s9
    %p112 = scmp.lt.s32.totalorder %s9, 5
    %p113 = pnand %p111, %p112
    %p114 = pneg %p113
    // Predicated region
    $region9: #{model_forward.5} parent=5 // pred_check
      _
    $region10: #{model_forward.5} parent=5 // pred_check_branch
      %116 = sbr.rel (%p113) target = $region12
    $region11: #{model_forward.5} parent=5 // pred_region
      %s117 = ssub.s32 %s9, 1
      // Predicated region
      $region13: #{model_forward.5} parent=11 // pred_check
        %p118 = pneg %p56
      $region14: #{model_forward.5} parent=11 // pred_check_branch
        %120 = sbr.rel (%p118) target = $region16
      $region15: #{model_forward.5} parent=11 // pred_region
        _
      $region16: #{model_forward.5} parent=11 // pred_fallthru
        _
      // Predicated region
      $region17: #{model_forward.5} parent=11 // pred_check
        %p121 = pneg %p77
      $region18: #{model_forward.5} parent=11 // pred_check_branch
        %123 = sbr.rel (%p121) target = $region20
      $region19: #{model_forward.5} parent=11 // pred_region
        _
      $region20: #{model_forward.5} parent=11 // pred_fallthru
        _
    $region12: #{model_forward.5} parent=5 // pred_fallthru
      _
    %p124 = scmp.lt.s32.totalorder %s9, 4
    // Predicated region
    $region21: #{model_forward.5} parent=5 // pred_check
      %p125 = pneg %p124
    $region22: #{model_forward.5} parent=5 // pred_check_branch
      %127 = sbr.rel (%p125) target = $region24
    $region23: #{model_forward.5} parent=5 // pred_region
      // Predicated region
      $region25: #{model_forward.5} parent=23 // pred_check
        %p128 = pneg %p29
      $region26: #{model_forward.5} parent=23 // pred_check_branch
        %130 = sbr.rel (%p128) target = $region28
      $region27: #{model_forward.5} parent=23 // pred_region
        %s131 = smul.u32 24, %s9
        %p132 = scmp.lt.s32.totalorder %s131, 95
        %s133 = scalar_select %p132, %s131, 95
        %s134 = smul.addr %s133, 8
        %s135 = scalar_lea.vmem %s0, %s134
        %s136 = smul.u32 24, %s9
      $region28: #{model_forward.5} parent=23 // pred_fallthru
        _
    $region24: #{model_forward.5} parent=5 // pred_fallthru
      _
    %p137 = scmp.le.s32.totalorder 1, %s9
    %p138 = scmp.lt.s32.totalorder %s9, 5
    %p139 = pnand %p137, %p138
    %p140 = pneg %p139
    // Predicated region
    $region29: #{model_forward.5} parent=5 // pred_check
      _
    $region30: #{model_forward.5} parent=5 // pred_check_branch
      %142 = sbr.rel (%p139) target = $region32
    $region31: #{model_forward.5} parent=5 // pred_region
      %s143 = ssub.s32 %s9, 1
      %s144 = smul.u32 24, %s14
      %p145 = scmp.lt.s32.totalorder %s144, 95
      %s146 = scalar_select %p145, %s144, 95
      %s147 = smul.addr %s146, 8
      %s148 = scalar_lea.vmem %s0, %s147
      %p149 = pneg %p35
      %p150 = pneg %p32
      %p151 = pneg %p56
      %p152 = pneg %p53
      %p153 = pneg %p77
      %p154 = pneg %p74
      %p155 = pneg %p103
      %p156 = pneg %p100
      %s157 = smul.u32 24, %s14
      %p158 = scmp.lt.s32.totalorder %s157, 95
      %s159 = scalar_select %p158, %s157, 95
      %s160 = smul.addr %s159, 8
      %s161 = scalar_lea.vmem %s3, %s160
      %s162 = smul.u32 24, %s14
      %p163 = scmp.lt.s32.totalorder %s162, 95
      %s164 = scalar_select %p163, %s162, 95
      %s165 = smul.addr %s164, 8
      %s166 = scalar_lea.vmem %s0, %s165
      %s167 = smul.u32 24, %s14
      %s168 = smul.u32 24, %s14
      %p169 = scmp.lt.s32.totalorder %s168, 95
      %s170 = scalar_select %p169, %s168, 95
      %s171 = smul.addr %s170, 8
      %s172 = scalar_lea.vmem %s3, %s171
      %s173 = smul.u32 24, %s14
      %v174 = vld [vmem:[%s166] sm:$0xff]
      %v175 = vld [vmem:[%s166 + $0x8] sm:$0xff]
      %v176 = vld [vmem:[%s166 + $0x10] sm:$0xff]
      %v177 = vld [vmem:[%s166 + $0x18] sm:$0xff]
      %v178 = vld [vmem:[%s166 + $0x20] sm:$0xff]
      %v179 = vld [vmem:[%s166 + $0x28] sm:$0xff]
      %v180 = vld [vmem:[%s166 + $0x30] sm:$0xff]
      %v181 = vld [vmem:[%s166 + $0x38] sm:$0xff]
      %v182 = vld [vmem:[%s166 + $0x40] sm:$0xff]
      %v183 = vld [vmem:[%s166 + $0x48] sm:$0xff]
      %v184 = vld [vmem:[%s166 + $0x50] sm:$0xff]
      %v185 = vld [vmem:[%s166 + $0x58] sm:$0xff]
      %v186 = vld [vmem:[%s166 + $0x60] sm:$0xff]
      %v187 = vld [vmem:[%s166 + $0x68] sm:$0xff]
      %v188 = vld [vmem:[%s166 + $0x70] sm:$0xff]
      %v189 = vld [vmem:[%s166 + $0x78] sm:$0xff]
      %v190 = vld [vmem:[%s166 + $0x80] sm:$0xff]
      %v191 = vld [vmem:[%s166 + $0x88] sm:$0xff]
      %v192 = vld [vmem:[%s166 + $0x90] sm:$0xff]
      %v193 = vld [vmem:[%s166 + $0x98] sm:$0xff]
      %v194 = vld [vmem:[%s166 + $0xa0] sm:$0xff]
      %v195 = vld [vmem:[%s166 + $0xa8] sm:$0xff]
      %v196 = vld [vmem:[%s166 + $0xb0] sm:$0xff]
      %v197 = vld [vmem:[%s166 + $0xb8] sm:$0xff]
      %v198 = vld [vmem:[%s1] sm:$0x1]
      %v200 = vlaneseq
      %v201 = vshrl.u32 %v200, 7
      %v202 = vsub.s32 0, %v201
      %v203 = vrot.slane %v198, %v202
      %v205 = vmul.f32 %v174, %v203
      %v206 = vmul.f32 %v175, %v203
      %v207 = vmul.f32 %v176, %v203
      %v208 = vmul.f32 %v177, %v203
      %v209 = vmul.f32 %v178, %v203
      %v210 = vmul.f32 %v179, %v203
      %v211 = vmul.f32 %v180, %v203
      %v212 = vmul.f32 %v181, %v203
      %v213 = vmul.f32 %v182, %v203
      %v214 = vmul.f32 %v183, %v203
      %v215 = vmul.f32 %v184, %v203
      %v216 = vmul.f32 %v185, %v203
      %v217 = vmul.f32 %v186, %v203
      %v218 = vmul.f32 %v187, %v203
      %v219 = vmul.f32 %v188, %v203
      %v220 = vmul.f32 %v189, %v203
      %v221 = vmul.f32 %v190, %v203
      %v222 = vmul.f32 %v191, %v203
      %v223 = vmul.f32 %v192, %v203
      %v224 = vmul.f32 %v193, %v203
      %v225 = vmul.f32 %v194, %v203
      %v226 = vmul.f32 %v195, %v203
      %v227 = vmul.f32 %v196, %v203
      %v228 = vmul.f32 %v197, %v203
      %v229 = vld [vmem:[%s2] sm:$0x1]
      %v231 = vlaneseq
      %v232 = vshrl.u32 %v231, 7
      %v233 = vsub.s32 0, %v232
      %v234 = vrot.slane %v229, %v233
      %v236 = vadd.f32 %v205, %v234
      %v237 = vadd.f32 %v206, %v234
      %v238 = vadd.f32 %v207, %v234
      %v239 = vadd.f32 %v208, %v234
      %v240 = vadd.f32 %v209, %v234
      %v241 = vadd.f32 %v210, %v234
      %v242 = vadd.f32 %v211, %v234
      %v243 = vadd.f32 %v212, %v234
      %v244 = vadd.f32 %v213, %v234
      %v245 = vadd.f32 %v214, %v234
      %v246 = vadd.f32 %v215, %v234
      %v247 = vadd.f32 %v216, %v234
      %v248 = vadd.f32 %v217, %v234
      %v249 = vadd.f32 %v218, %v234
      %v250 = vadd.f32 %v219, %v234
      %v251 = vadd.f32 %v220, %v234
      %v252 = vadd.f32 %v221, %v234
      %v253 = vadd.f32 %v222, %v234
      %v254 = vadd.f32 %v223, %v234
      %v255 = vadd.f32 %v224, %v234
      %v256 = vadd.f32 %v225, %v234
      %v257 = vadd.f32 %v226, %v234
      %v258 = vadd.f32 %v227, %v234
      %v259 = vadd.f32 %v228, %v234
      %v260 = vmax.f32 %v236, 0.0
      %v261 = vmax.f32 %v237, 0.0
      %v262 = vmax.f32 %v238, 0.0
      %v263 = vmax.f32 %v239, 0.0
      %v264 = vmax.f32 %v240, 0.0
      %v265 = vmax.f32 %v241, 0.0
      %v266 = vmax.f32 %v242, 0.0
      %v267 = vmax.f32 %v243, 0.0
      %v268 = vmax.f32 %v244, 0.0
      %v269 = vmax.f32 %v245, 0.0
      %v270 = vmax.f32 %v246, 0.0
      %v271 = vmax.f32 %v247, 0.0
      %v272 = vmax.f32 %v248, 0.0
      %v273 = vmax.f32 %v249, 0.0
      %v274 = vmax.f32 %v250, 0.0
      %v275 = vmax.f32 %v251, 0.0
      %v276 = vmax.f32 %v252, 0.0
      %v277 = vmax.f32 %v253, 0.0
      %v278 = vmax.f32 %v254, 0.0
      %v279 = vmax.f32 %v255, 0.0
      %v280 = vmax.f32 %v256, 0.0
      %v281 = vmax.f32 %v257, 0.0
      %v282 = vmax.f32 %v258, 0.0
      %v283 = vmax.f32 %v259, 0.0
      %284 = vst [vmem:[%s172] sm:$0xff] %v260
      %285 = vst [vmem:[%s172 + $0x8] sm:$0xff] %v261
      %286 = vst [vmem:[%s172 + $0x10] sm:$0xff] %v262
      %287 = vst [vmem:[%s172 + $0x18] sm:$0xff] %v263
      %288 = vst [vmem:[%s172 + $0x20] sm:$0xff] %v264
      %289 = vst [vmem:[%s172 + $0x28] sm:$0xff] %v265
      %290 = vst [vmem:[%s172 + $0x30] sm:$0xff] %v266
      %291 = vst [vmem:[%s172 + $0x38] sm:$0xff] %v267
      %292 = vst [vmem:[%s172 + $0x40] sm:$0xff] %v268
      %293 = vst [vmem:[%s172 + $0x48] sm:$0xff] %v269
      %294 = vst [vmem:[%s172 + $0x50] sm:$0xff] %v270
      %295 = vst [vmem:[%s172 + $0x58] sm:$0xff] %v271
      %296 = vst [vmem:[%s172 + $0x60] sm:$0xff] %v272
      %297 = vst [vmem:[%s172 + $0x68] sm:$0xff] %v273
      %298 = vst [vmem:[%s172 + $0x70] sm:$0xff] %v274
      %299 = vst [vmem:[%s172 + $0x78] sm:$0xff] %v275
      %300 = vst [vmem:[%s172 + $0x80] sm:$0xff] %v276
      %301 = vst [vmem:[%s172 + $0x88] sm:$0xff] %v277
      %302 = vst [vmem:[%s172 + $0x90] sm:$0xff] %v278
      %303 = vst [vmem:[%s172 + $0x98] sm:$0xff] %v279
      %304 = vst [vmem:[%s172 + $0xa0] sm:$0xff] %v280
      %305 = vst [vmem:[%s172 + $0xa8] sm:$0xff] %v281
      %306 = vst [vmem:[%s172 + $0xb0] sm:$0xff] %v282
      %307 = vst [vmem:[%s172 + $0xb8] sm:$0xff] %v283
      %s308 = smul.u32 24, %s14
      %p309 = scmp.lt.s32.totalorder %s308, 95
      %s310 = scalar_select %p309, %s308, 95
      %s311 = smul.addr %s310, 8
      %s312 = scalar_lea.vmem %s3, %s311
      // Predicated region
      $region33: #{model_forward.5} parent=31 // pred_check
        %p313 = pneg %p100
      $region34: #{model_forward.5} parent=31 // pred_check_branch
        %315 = sbr.rel (%p313) target = $region36
      $region35: #{model_forward.5} parent=31 // pred_region
        %s316 = smul.u32 24, %s14
      $region36: #{model_forward.5} parent=31 // pred_fallthru
        _
    $region32: #{model_forward.5} parent=5 // pred_fallthru
      _
    %p317 = scmp.le.s32.totalorder 2, %s9
    // Predicated region
    $region37: #{model_forward.5} parent=5 // pred_check
      %p318 = pneg %p317
    $region38: #{model_forward.5} parent=5 // pred_check_branch
      %320 = sbr.rel (%p318) target = $region40
    $region39: #{model_forward.5} parent=5 // pred_region
      %s321 = ssub.s32 %s9, 2
      // Predicated region
      $region41: #{model_forward.5} parent=39 // pred_check
        %p322 = pneg %p106
      $region42: #{model_forward.5} parent=39 // pred_check_branch
        %324 = sbr.rel (%p322) target = $region44
      $region43: #{model_forward.5} parent=39 // pred_region
        %s325 = smul.u32 24, %s15
        %p326 = scmp.lt.s32.totalorder %s325, 95
        %s327 = scalar_select %p326, %s325, 95
        %s328 = smul.addr %s327, 8
        %s329 = scalar_lea.vmem %s3, %s328
      $region44: #{model_forward.5} parent=39 // pred_fallthru
        _
    $region40: #{model_forward.5} parent=5 // pred_fallthru
      _
  $region6: #{model_forward.5} parent=0 // loop_footer
    %s13 = sadd.s32 1, %s9
  $region7: #{model_forward.5} parent=0 // loop_footer_branch
    %8 = sbr.rel target = $region3
  $region8: #{model_forward.5} parent=0 // loop_exit
    _

// kernel: model_forward.3
$region0: #{model_forward.3}
  #allocation0 [shape = 'u32[]', space=smem, size = 0x4, offset = 0x4, fixed_abs, tag = 'smem constant byte address 0x4 - core index']
  #allocation1 [shape = 'u32[144,128]{1,0:T(1,128)}', space=vmem, size = 0x12000, scoped, tag = 'internal scratch']
  %s0 = inlined_call_operand.vmem [shape: bf16[512,256], index: 0, kind: input, shape index: {}]
  %s1 = inlined_call_operand.vmem [shape: bf16[256,128], index: 1, kind: input, shape index: {}]
  %s2 = inlined_call_operand.vmem [shape: bf16[512,128], index: 2, kind: output, shape index: {0}]
  %s3 = inlined_call_operand.vmem [shape: f32[1,1,128], index: 3, kind: output, shape index: {1}]
  %s4 = inlined_call_operand.vmem [shape: f32[1,1,128], index: 4, kind: output, shape index: {2}]
  %5 = xla_tuple %s2, %s3, %s4
  %s6 = sld [smem:[#allocation0]]
  $region34: #{model_forward.3} parent=0
    _
  %s8 = ssub.s32 1, %s6
  %s9 = scalar_select 0, %s8, %s6
  // Predicated region
  $region2: #{model_forward.3} parent=0 // pred_check
    _
  $region3: #{model_forward.3} parent=0 // pred_check_branch
    %11 = sbr.rel (0) target = $region5
  $region4: #{model_forward.3} parent=0 // pred_region
    _
  $region5: #{model_forward.3} parent=0 // pred_fallthru
    _
  // Predicated region
  $region6: #{model_forward.3} parent=0 // pred_check
    _
  $region7: #{model_forward.3} parent=0 // pred_check_branch
    %13 = sbr.rel (0) target = $region9
  $region8: #{model_forward.3} parent=0 // pred_region
    _
  $region9: #{model_forward.3} parent=0 // pred_fallthru
    _
  %v15 = vld [vmem:[%s0] sm:$0xff]
  %v16 = vld [vmem:[%s0 + $0x8] sm:$0xff]
  %v17 = vld [vmem:[%s0 + $0x10] sm:$0xff]
  %v18 = vld [vmem:[%s0 + $0x18] sm:$0xff]
  %v19 = vld [vmem:[%s0 + $0x20] sm:$0xff]
  %v20 = vld [vmem:[%s0 + $0x28] sm:$0xff]
  %v21 = vld [vmem:[%s0 + $0x30] sm:$0xff]
  %v22 = vld [vmem:[%s0 + $0x38] sm:$0xff]
  %v23 = vld [vmem:[%s0 + $0x40] sm:$0xff]
  %v24 = vld [vmem:[%s0 + $0x48] sm:$0xff]
  %v25 = vld [vmem:[%s0 + $0x50] sm:$0xff]
  %v26 = vld [vmem:[%s0 + $0x58] sm:$0xff]
  %v27 = vld [vmem:[%s0 + $0x60] sm:$0xff]
  %v28 = vld [vmem:[%s0 + $0x68] sm:$0xff]
  %v29 = vld [vmem:[%s0 + $0x70] sm:$0xff]
  %v30 = vld [vmem:[%s0 + $0x78] sm:$0xff]
  %v31 = vld [vmem:[%s0 + $0x80] sm:$0xff]
  %v32 = vld [vmem:[%s0 + $0x88] sm:$0xff]
  %v33 = vld [vmem:[%s0 + $0x90] sm:$0xff]
  %v34 = vld [vmem:[%s0 + $0x98] sm:$0xff]
  %v35 = vld [vmem:[%s0 + $0xa0] sm:$0xff]
  %v36 = vld [vmem:[%s0 + $0xa8] sm:$0xff]
  %v37 = vld [vmem:[%s0 + $0xb0] sm:$0xff]
  %v38 = vld [vmem:[%s0 + $0xb8] sm:$0xff]
  %v39 = vld [vmem:[%s0 + $0xc0] sm:$0xff]
  %v40 = vld [vmem:[%s0 + $0xc8] sm:$0xff]
  %v41 = vld [vmem:[%s0 + $0xd0] sm:$0xff]
  %v42 = vld [vmem:[%s0 + $0xd8] sm:$0xff]
  %v43 = vld [vmem:[%s0 + $0xe0] sm:$0xff]
  %v44 = vld [vmem:[%s0 + $0xe8] sm:$0xff]
  %v45 = vld [vmem:[%s0 + $0xf0] sm:$0xff]
  %v46 = vld [vmem:[%s0 + $0xf8] sm:$0xff]
  %v47 = vld [vmem:[%s0 + $0x100] sm:$0xff]
  %v48 = vld [vmem:[%s0 + $0x108] sm:$0xff]
  %v49 = vld [vmem:[%s0 + $0x110] sm:$0xff]
  %v50 = vld [vmem:[%s0 + $0x118] sm:$0xff]
  %v51 = vld [vmem:[%s0 + $0x120] sm:$0xff]
  %v52 = vld [vmem:[%s0 + $0x128] sm:$0xff]
  %v53 = vld [vmem:[%s0 + $0x130] sm:$0xff]
  %v54 = vld [vmem:[%s0 + $0x138] sm:$0xff]
  %v55 = vld [vmem:[%s0 + $0x140] sm:$0xff]
  %v56 = vld [vmem:[%s0 + $0x148] sm:$0xff]
  %v57 = vld [vmem:[%s0 + $0x150] sm:$0xff]
  %v58 = vld [vmem:[%s0 + $0x158] sm:$0xff]
  %v59 = vld [vmem:[%s0 + $0x160] sm:$0xff]
  %v60 = vld [vmem:[%s0 + $0x168] sm:$0xff]
  %v61 = vld [vmem:[%s0 + $0x170] sm:$0xff]
  %v62 = vld [vmem:[%s0 + $0x178] sm:$0xff]
  %v63 = vld [vmem:[%s0 + $0x180] sm:$0xff]
  %v64 = vld [vmem:[%s0 + $0x188] sm:$0xff]
  %v65 = vld [vmem:[%s0 + $0x190] sm:$0xff]
  %v66 = vld [vmem:[%s0 + $0x198] sm:$0xff]
  %v67 = vld [vmem:[%s0 + $0x1a0] sm:$0xff]
  %v68 = vld [vmem:[%s0 + $0x1a8] sm:$0xff]
  %v69 = vld [vmem:[%s0 + $0x1b0] sm:$0xff]
  %v70 = vld [vmem:[%s0 + $0x1b8] sm:$0xff]
  %v71 = vld [vmem:[%s0 + $0x1c0] sm:$0xff]
  %v72 = vld [vmem:[%s0 + $0x1c8] sm:$0xff]
  %v73 = vld [vmem:[%s0 + $0x1d0] sm:$0xff]
  %v74 = vld [vmem:[%s0 + $0x1d8] sm:$0xff]
  %v75 = vld [vmem:[%s0 + $0x1e0] sm:$0xff]
  %v76 = vld [vmem:[%s0 + $0x1e8] sm:$0xff]
  %v77 = vld [vmem:[%s0 + $0x1f0] sm:$0xff]
  %v78 = vld [vmem:[%s0 + $0x1f8] sm:$0xff]
  %v79 = vld [vmem:[%s1] sm:$0xf]
  %v80 = vld [vmem:[%s1 + $0x4] sm:$0xf]
  %v81 = vld [vmem:[%s1 + $0x8] sm:$0xf]
  %v82 = vld [vmem:[%s1 + $0xc] sm:$0xf]
  %v83 = vld [vmem:[%s1 + $0x10] sm:$0xf]
  %v84 = vld [vmem:[%s1 + $0x14] sm:$0xf]
  %v85 = vld [vmem:[%s1 + $0x18] sm:$0xf]
  %v86 = vld [vmem:[%s1 + $0x1c] sm:$0xf]
  %v87 = vld [vmem:[%s1 + $0x20] sm:$0xf]
  %v88 = vld [vmem:[%s1 + $0x24] sm:$0xf]
  %v89 = vld [vmem:[%s1 + $0x28] sm:$0xf]
  %v90 = vld [vmem:[%s1 + $0x2c] sm:$0xf]
  %v91 = vld [vmem:[%s1 + $0x30] sm:$0xf]
  %v92 = vld [vmem:[%s1 + $0x34] sm:$0xf]
  %v93 = vld [vmem:[%s1 + $0x38] sm:$0xf]
  %v94 = vld [vmem:[%s1 + $0x3c] sm:$0xf]
  %v95 = vld [vmem:[%s1 + $0x40] sm:$0xf]
  %v96 = vld [vmem:[%s1 + $0x44] sm:$0xf]
  %v97 = vld [vmem:[%s1 + $0x48] sm:$0xf]
  %v98 = vld [vmem:[%s1 + $0x4c] sm:$0xf]
  %v99 = vld [vmem:[%s1 + $0x50] sm:$0xf]
  %v100 = vld [vmem:[%s1 + $0x54] sm:$0xf]
  %v101 = vld [vmem:[%s1 + $0x58] sm:$0xf]
  %v102 = vld [vmem:[%s1 + $0x5c] sm:$0xf]
  %v103 = vld [vmem:[%s1 + $0x60] sm:$0xf]
  %v104 = vld [vmem:[%s1 + $0x64] sm:$0xf]
  %v105 = vld [vmem:[%s1 + $0x68] sm:$0xf]
  %v106 = vld [vmem:[%s1 + $0x6c] sm:$0xf]
  %v107 = vld [vmem:[%s1 + $0x70] sm:$0xf]
  %v108 = vld [vmem:[%s1 + $0x74] sm:$0xf]
  %v109 = vld [vmem:[%s1 + $0x78] sm:$0xf]
  %v110 = vld [vmem:[%s1 + $0x7c] sm:$0xf]
  %v175 = vunpack.c.l.b16 %v15
  %v176 = vunpack.c.h.b16 %v15
  %v177 = vunpack.c.l.b16 %v16
  %v178 = vunpack.c.h.b16 %v16
  %v179 = vunpack.c.l.b16 %v17
  %v180 = vunpack.c.h.b16 %v17
  %v181 = vunpack.c.l.b16 %v18
  %v182 = vunpack.c.h.b16 %v18
  %v183 = vunpack.c.l.b16 %v19
  %v184 = vunpack.c.h.b16 %v19
  %v185 = vunpack.c.l.b16 %v20
  %v186 = vunpack.c.h.b16 %v20
  %v187 = vunpack.c.l.b16 %v21
  %v188 = vunpack.c.h.b16 %v21
  %v189 = vunpack.c.l.b16 %v22
  %v190 = vunpack.c.h.b16 %v22
  %v191 = vunpack.c.l.b16 %v23
  %v192 = vunpack.c.h.b16 %v23
  %v193 = vunpack.c.l.b16 %v24
  %v194 = vunpack.c.h.b16 %v24
  %v195 = vunpack.c.l.b16 %v25
  %v196 = vunpack.c.h.b16 %v25
  %v197 = vunpack.c.l.b16 %v26
  %v198 = vunpack.c.h.b16 %v26
  %v199 = vunpack.c.l.b16 %v27
  %v200 = vunpack.c.h.b16 %v27
  %v201 = vunpack.c.l.b16 %v28
  %v202 = vunpack.c.h.b16 %v28
  %v203 = vunpack.c.l.b16 %v29
  %v204 = vunpack.c.h.b16 %v29
  %v205 = vunpack.c.l.b16 %v30
  %v206 = vunpack.c.h.b16 %v30
  %v207 = vunpack.c.l.b16 %v31
  %v208 = vunpack.c.h.b16 %v31
  %v209 = vunpack.c.l.b16 %v32
  %v210 = vunpack.c.h.b16 %v32
  %v211 = vunpack.c.l.b16 %v33
  %v212 = vunpack.c.h.b16 %v33
  %v213 = vunpack.c.l.b16 %v34
  %v214 = vunpack.c.h.b16 %v34
  %v215 = vunpack.c.l.b16 %v35
  %v216 = vunpack.c.h.b16 %v35
  %v217 = vunpack.c.l.b16 %v36
  %v218 = vunpack.c.h.b16 %v36
  %v219 = vunpack.c.l.b16 %v37
  %v220 = vunpack.c.h.b16 %v37
  %v221 = vunpack.c.l.b16 %v38
  %v222 = vunpack.c.h.b16 %v38
  %v223 = vunpack.c.l.b16 %v39
  %v224 = vunpack.c.h.b16 %v39
  %v225 = vunpack.c.l.b16 %v40
  %v226 = vunpack.c.h.b16 %v40
  %v227 = vunpack.c.l.b16 %v41
  %v228 = vunpack.c.h.b16 %v41
  %v229 = vunpack.c.l.b16 %v42
  %v230 = vunpack.c.h.b16 %v42
  %v231 = vunpack.c.l.b16 %v43
  %v232 = vunpack.c.h.b16 %v43
  %v233 = vunpack.c.l.b16 %v44
  %v234 = vunpack.c.h.b16 %v44
  %v235 = vunpack.c.l.b16 %v45
  %v236 = vunpack.c.h.b16 %v45
  %v237 = vunpack.c.l.b16 %v46
  %v238 = vunpack.c.h.b16 %v46
  %v239 = vunpack.c.l.b16 %v47
  %v240 = vunpack.c.h.b16 %v47
  %v241 = vunpack.c.l.b16 %v48
  %v242 = vunpack.c.h.b16 %v48
  %v243 = vunpack.c.l.b16 %v49
  %v244 = vunpack.c.h.b16 %v49
  %v245 = vunpack.c.l.b16 %v50
  %v246 = vunpack.c.h.b16 %v50
  %v247 = vunpack.c.l.b16 %v51
  %v248 = vunpack.c.h.b16 %v51
  %v249 = vunpack.c.l.b16 %v52
  %v250 = vunpack.c.h.b16 %v52
  %v251 = vunpack.c.l.b16 %v53
  %v252 = vunpack.c.h.b16 %v53
  %v253 = vunpack.c.l.b16 %v54
  %v254 = vunpack.c.h.b16 %v54
  %v255 = vunpack.c.l.b16 %v55
  %v256 = vunpack.c.h.b16 %v55
  %v257 = vunpack.c.l.b16 %v56
  %v258 = vunpack.c.h.b16 %v56
  %v259 = vunpack.c.l.b16 %v57
  %v260 = vunpack.c.h.b16 %v57
  %v261 = vunpack.c.l.b16 %v58
  %v262 = vunpack.c.h.b16 %v58
  %v263 = vunpack.c.l.b16 %v59
  %v264 = vunpack.c.h.b16 %v59
  %v265 = vunpack.c.l.b16 %v60
  %v266 = vunpack.c.h.b16 %v60
  %v267 = vunpack.c.l.b16 %v61
  %v268 = vunpack.c.h.b16 %v61
  %v269 = vunpack.c.l.b16 %v62
  %v270 = vunpack.c.h.b16 %v62
  %v271 = vunpack.c.l.b16 %v63
  %v272 = vunpack.c.h.b16 %v63
  %v273 = vunpack.c.l.b16 %v64
  %v274 = vunpack.c.h.b16 %v64
  %v275 = vunpack.c.l.b16 %v65
  %v276 = vunpack.c.h.b16 %v65
  %v277 = vunpack.c.l.b16 %v66
  %v278 = vunpack.c.h.b16 %v66
  %v279 = vunpack.c.l.b16 %v67
  %v280 = vunpack.c.h.b16 %v67
  %v281 = vunpack.c.l.b16 %v68
  %v282 = vunpack.c.h.b16 %v68
  %v283 = vunpack.c.l.b16 %v69
  %v284 = vunpack.c.h.b16 %v69
  %v285 = vunpack.c.l.b16 %v70
  %v286 = vunpack.c.h.b16 %v70
  %v287 = vunpack.c.l.b16 %v71
  %v288 = vunpack.c.h.b16 %v71
  %v289 = vunpack.c.l.b16 %v72
  %v290 = vunpack.c.h.b16 %v72
  %v291 = vunpack.c.l.b16 %v73
  %v292 = vunpack.c.h.b16 %v73
  %v293 = vunpack.c.l.b16 %v74
  %v294 = vunpack.c.h.b16 %v74
  %v295 = vunpack.c.l.b16 %v75
  %v296 = vunpack.c.h.b16 %v75
  %v297 = vunpack.c.l.b16 %v76
  %v298 = vunpack.c.h.b16 %v76
  %v299 = vunpack.c.l.b16 %v77
  %v300 = vunpack.c.h.b16 %v77
  %v301 = vunpack.c.l.b16 %v78
  %v302 = vunpack.c.h.b16 %v78
  %v303 = vpack.c.b16 %v177, %v175
  %v304 = vpack.c.b16 %v178, %v176
  %v305 = vpack.c.b16 %v181, %v179
  %v306 = vpack.c.b16 %v182, %v180
  %v307 = vpack.c.b16 %v185, %v183
  %v308 = vpack.c.b16 %v186, %v184
  %v309 = vpack.c.b16 %v189, %v187
  %v310 = vpack.c.b16 %v190, %v188
  %v311 = vpack.c.b16 %v193, %v191
  %v312 = vpack.c.b16 %v194, %v192
  %v313 = vpack.c.b16 %v197, %v195
  %v314 = vpack.c.b16 %v198, %v196
  %v315 = vpack.c.b16 %v201, %v199
  %v316 = vpack.c.b16 %v202, %v200
  %v317 = vpack.c.b16 %v205, %v203
  %v318 = vpack.c.b16 %v206, %v204
  %v319 = vpack.c.b16 %v209, %v207
  %v320 = vpack.c.b16 %v210, %v208
  %v321 = vpack.c.b16 %v213, %v211
  %v322 = vpack.c.b16 %v214, %v212
  %v323 = vpack.c.b16 %v217, %v215
  %v324 = vpack.c.b16 %v218, %v216
  %v325 = vpack.c.b16 %v221, %v219
  %v326 = vpack.c.b16 %v222, %v220
  %v327 = vpack.c.b16 %v225, %v223
  %v328 = vpack.c.b16 %v226, %v224
  %v329 = vpack.c.b16 %v229, %v227
  %v330 = vpack.c.b16 %v230, %v228
  %v331 = vpack.c.b16 %v233, %v231
  %v332 = vpack.c.b16 %v234, %v232
  %v333 = vpack.c.b16 %v237, %v235
  %v334 = vpack.c.b16 %v238, %v236
  %v335 = vpack.c.b16 %v241, %v239
  %v336 = vpack.c.b16 %v242, %v240
  %v337 = vpack.c.b16 %v245, %v243
  %v338 = vpack.c.b16 %v246, %v244
  %v339 = vpack.c.b16 %v249, %v247
  %v340 = vpack.c.b16 %v250, %v248
  %v341 = vpack.c.b16 %v253, %v251
  %v342 = vpack.c.b16 %v254, %v252
  %v343 = vpack.c.b16 %v257, %v255
  %v344 = vpack.c.b16 %v258, %v256
  %v345 = vpack.c.b16 %v261, %v259
  %v346 = vpack.c.b16 %v262, %v260
  %v347 = vpack.c.b16 %v265, %v263
  %v348 = vpack.c.b16 %v266, %v264
  %v349 = vpack.c.b16 %v269, %v267
  %v350 = vpack.c.b16 %v270, %v268
  %v351 = vpack.c.b16 %v273, %v271
  %v352 = vpack.c.b16 %v274, %v272
  %v353 = vpack.c.b16 %v277, %v275
  %v354 = vpack.c.b16 %v278, %v276
  %v355 = vpack.c.b16 %v281, %v279
  %v356 = vpack.c.b16 %v282, %v280
  %v357 = vpack.c.b16 %v285, %v283
  %v358 = vpack.c.b16 %v286, %v284
  %v359 = vpack.c.b16 %v289, %v287
  %v360 = vpack.c.b16 %v290, %v288
  %v361 = vpack.c.b16 %v293, %v291
  %v362 = vpack.c.b16 %v294, %v292
  %v363 = vpack.c.b16 %v297, %v295
  %v364 = vpack.c.b16 %v298, %v296
  %v365 = vpack.c.b16 %v301, %v299
  %v366 = vpack.c.b16 %v302, %v300
  %v463 = vunpack.c.l.b16 %v79
  %v464 = vunpack.c.l.b16 %v80
  %v465 = vunpack.c.l.b16 %v81
  %v466 = vunpack.c.l.b16 %v82
  %v467 = vunpack.c.l.b16 %v83
  %v468 = vunpack.c.l.b16 %v84
  %v469 = vunpack.c.l.b16 %v85
  %v470 = vunpack.c.l.b16 %v86
  %v471 = vunpack.c.l.b16 %v87
  %v472 = vunpack.c.l.b16 %v88
  %v473 = vunpack.c.l.b16 %v89
  %v474 = vunpack.c.l.b16 %v90
  %v475 = vunpack.c.l.b16 %v91
  %v476 = vunpack.c.l.b16 %v92
  %v477 = vunpack.c.l.b16 %v93
  %v478 = vunpack.c.l.b16 %v94
  %v479 = vunpack.c.l.b16 %v95
  %v480 = vunpack.c.l.b16 %v96
  %v481 = vunpack.c.l.b16 %v97
  %v482 = vunpack.c.l.b16 %v98
  %v483 = vunpack.c.l.b16 %v99
  %v484 = vunpack.c.l.b16 %v100
  %v485 = vunpack.c.l.b16 %v101
  %v486 = vunpack.c.l.b16 %v102
  %v487 = vunpack.c.l.b16 %v103
  %v488 = vunpack.c.l.b16 %v104
  %v489 = vunpack.c.l.b16 %v105
  %v490 = vunpack.c.l.b16 %v106
  %v491 = vunpack.c.l.b16 %v107
  %v492 = vunpack.c.l.b16 %v108
  %v493 = vunpack.c.l.b16 %v109
  %v494 = vunpack.c.l.b16 %v110
  %v495 = vpack.c.b16 %v464, %v463
  %v496 = vpack.c.b16 %v466, %v465
  %v497 = vpack.c.b16 %v468, %v467
  %v498 = vpack.c.b16 %v470, %v469
  %v499 = vpack.c.b16 %v472, %v471
  %v500 = vpack.c.b16 %v474, %v473
  %v501 = vpack.c.b16 %v476, %v475
  %v502 = vpack.c.b16 %v478, %v477
  %v503 = vpack.c.b16 %v480, %v479
  %v504 = vpack.c.b16 %v482, %v481
  %v505 = vpack.c.b16 %v484, %v483
  %v506 = vpack.c.b16 %v486, %v485
  %v507 = vpack.c.b16 %v488, %v487
  %v508 = vpack.c.b16 %v490, %v489
  %v509 = vpack.c.b16 %v492, %v491
  %v510 = vpack.c.b16 %v494, %v493
  %527 = vmatprep.subr.bf16.mxu0 0
  %528 = vmatpush1.bf16.msra.mxu0 %v495
  %529 = vmatprep.subr.bf16.mxu0 0
  %530 = vmatpush1.bf16.msra.mxu0 %v496
  %531 = vmatprep.subr.bf16.mxu0 0
  %532 = vmatpush1.bf16.msra.mxu0 %v497
  %533 = vmatprep.subr.bf16.mxu0 0
  %534 = vmatpush1.bf16.msra.mxu0 %v498
  %535 = vmatprep.subr.bf16.mxu0 0
  %536 = vmatpush1.bf16.msra.mxu0 %v499
  %537 = vmatprep.subr.bf16.mxu0 0
  %538 = vmatpush1.bf16.msra.mxu0 %v500
  %539 = vmatprep.subr.bf16.mxu0 0
  %540 = vmatpush1.bf16.msra.mxu0 %v501
  %541 = vmatprep.subr.bf16.mxu0 0
  %542 = vmatpush1.bf16.msra.mxu0 %v502
  %543 = vmatprep.subr.bf16.mxu0 0
  %544 = vmatpush1.bf16.msra.mxu0 %v503
  %545 = vmatprep.subr.bf16.mxu0 0
  %546 = vmatpush1.bf16.msra.mxu0 %v504
  %547 = vmatprep.subr.bf16.mxu0 0
  %548 = vmatpush1.bf16.msra.mxu0 %v505
  %549 = vmatprep.subr.bf16.mxu0 0
  %550 = vmatpush1.bf16.msra.mxu0 %v506
  %551 = vmatprep.subr.bf16.mxu0 0
  %552 = vmatpush1.bf16.msra.mxu0 %v507
  %553 = vmatprep.subr.bf16.mxu0 0
  %554 = vmatpush1.bf16.msra.mxu0 %v508
  %555 = vmatprep.subr.bf16.mxu0 0
  %556 = vmatpush1.bf16.msra.mxu0 %v509
  %557 = vmatprep.subr.bf16.mxu0 0
  %558 = vmatpush1.bf16.msra.mxu0 %v510
  %559 = vmatprep.mubr.bf16.mxu0 %v304
  %560 = vmatmul.mubr.bf16.gmra.mrb[0].mxu0 %v303
  %v561 = vpop.f32.mrb[0].mxu0
  %v562 = vadd.f32 0.0, %v561
  %v563 = vpop.f32.mrb[0].mxu0
  %v564 = vpop.f32.mrb[0].mxu0
  %v565 = vadd.f32 0.0, %v564
  %v566 = vpop.f32.mrb[0].mxu0
  %567 = vmatprep.mubr.bf16.mxu0 %v306
  %568 = vmatmul.mubr.bf16.gmra.mrb[0].mxu0 %v305
  %v569 = vpop.f32.mrb[0].mxu0
  %v570 = vadd.f32 0.0, %v569
  %v571 = vpop.f32.mrb[0].mxu0
  %v572 = vpop.f32.mrb[0].mxu0
  %v573 = vadd.f32 0.0, %v572
  %v574 = vpop.f32.mrb[0].mxu0
  %575 = vmatprep.mubr.bf16.mxu0 %v308
  %576 = vmatmul.mubr.bf16.gmra.mrb[0].mxu0 %v307
  %v577 = vpop.f32.mrb[0].mxu0
  %v578 = vadd.f32 0.0, %v577
  %v579 = vpop.f32.mrb[0].mxu0
  %v580 = vpop.f32.mrb[0].mxu0
  %v581 = vadd.f32 0.0, %v580
  %v582 = vpop.f32.mrb[0].mxu0
  %583 = vmatprep.mubr.bf16.mxu0 %v310
  %584 = vmatmul.mubr.bf16.gmra.mrb[0].mxu0 %v309
  %v585 = vpop.f32.mrb[0].mxu0
  %v586 = vadd.f32 0.0, %v585
  %v587 = vpop.f32.mrb[0].mxu0
  %v588 = vpop.f32.mrb[0].mxu0
  %v589 = vadd.f32 0.0, %v588
  %v590 = vpop.f32.mrb[0].mxu0
  %591 = vmatprep.mubr.bf16.mxu0 %v312
  %592 = vmatmul.mubr.bf16.gmra.mrb[0].mxu0 %v311
  %v593 = vpop.f32.mrb[0].mxu0
  %v594 = vadd.f32 0.0, %v593
  %v595 = vpop.f32.mrb[0].mxu0
  %v596 = vpop.f32.mrb[0].mxu0
  %v597 = vadd.f32 0.0, %v596
  %v598 = vpop.f32.mrb[0].mxu0
  %599 = vmatprep.mubr.bf16.mxu0 %v314
  %600 = vmatmul.mubr.bf16.gmra.mrb[0].mxu0 %v313
  %v601 = vpop.f32.mrb[0].mxu0
  %v602 = vadd.f32 0.0, %v601
  %v603 = vpop.f32.mrb[0].mxu0
  %v604 = vpop.f32.mrb[0].mxu0
  %v605 = vadd.f32 0.0, %v604
  %v606 = vpop.f32.mrb[0].mxu0
  %607 = vmatprep.mubr.bf16.mxu0 %v316
  %608 = vmatmul.mubr.bf16.gmra.mrb[0].mxu0 %v315
  %v609 = vpop.f32.mrb[0].mxu0
  %v610 = vadd.f32 0.0, %v609
  %v611 = vpop.f32.mrb[0].mxu0
  %v612 = vpop.f32.mrb[0].mxu0
  %v613 = vadd.f32 0.0, %v612
  %v614 = vpop.f32.mrb[0].mxu0
  %615 = vmatprep.mubr.bf16.mxu0 %v318
  %616 = vmatmul.mubr.bf16.gmra.mrb[0].mxu0 %v317
  %v617 = vpop.f32.mrb[0].mxu0
  %v618 = vadd.f32 0.0, %v617
  %v619 = vpop.f32.mrb[0].mxu0
  %v620 = vpop.f32.mrb[0].mxu0
  %v621 = vadd.f32 0.0, %v620
  %v622 = vpop.f32.mrb[0].mxu0
  %623 = vmatprep.mubr.bf16.mxu0 %v320
  %624 = vmatmul.mubr.bf16.gmra.mrb[0].mxu0 %v319
  %v625 = vpop.f32.mrb[0].mxu0
  %v626 = vadd.f32 0.0, %v625
  %v627 = vpop.f32.mrb[0].mxu0
  %v628 = vpop.f32.mrb[0].mxu0
  %v629 = vadd.f32 0.0, %v628
  %v630 = vpop.f32.mrb[0].mxu0
  %631 = vmatprep.mubr.bf16.mxu0 %v322
  %632 = vmatmul.mubr.bf16.gmra.mrb[0].mxu0 %v321
  %v633 = vpop.f32.mrb[0].mxu0
  %v634 = vadd.f32 0.0, %v633
  %v635 = vpop.f32.mrb[0].mxu0
  %v636 = vpop.f32.mrb[0].mxu0
  %v637 = vadd.f32 0.0, %v636
  %v638 = vpop.f32.mrb[0].mxu0
  %639 = vmatprep.mubr.bf16.mxu0 %v324
  %640 = vmatmul.mubr.bf16.gmra.mrb[0].mxu0 %v323
  %v641 = vpop.f32.mrb[0].mxu0
  %v642 = vadd.f32 0.0, %v641
  %v643 = vpop.f32.mrb[0].mxu0
  %v644 = vpop.f32.mrb[0].mxu0
  %v645 = vadd.f32 0.0, %v644
  %v646 = vpop.f32.mrb[0].mxu0
  %647 = vmatprep.mubr.bf16.mxu0 %v326
  %648 = vmatmul.mubr.bf16.gmra.mrb[0].mxu0 %v325
  %v649 = vpop.f32.mrb[0].mxu0
  %v650 = vadd.f32 0.0, %v649
  %v651 = vpop.f32.mrb[0].mxu0
  %v652 = vpop.f32.mrb[0].mxu0
  %v653 = vadd.f32 0.0, %v652
  %v654 = vpop.f32.mrb[0].mxu0
  %655 = vmatprep.mubr.bf16.mxu0 %v328
  %656 = vmatmul.mubr.bf16.gmra.mrb[0].mxu0 %v327
  %v657 = vpop.f32.mrb[0].mxu0
  %v658 = vadd.f32 0.0, %v657
  %v659 = vpop.f32.mrb[0].mxu0
  %v660 = vpop.f32.mrb[0].mxu0
  %v661 = vadd.f32 0.0, %v660
  %v662 = vpop.f32.mrb[0].mxu0
  %663 = vmatprep.mubr.bf16.mxu0 %v330
  %664 = vmatmul.mubr.bf16.gmra.mrb[0].mxu0 %v329
  %v665 = vpop.f32.mrb[0].mxu0
  %v666 = vadd.f32 0.0, %v665
  %v667 = vpop.f32.mrb[0].mxu0
  %v668 = vpop.f32.mrb[0].mxu0
  %v669 = vadd.f32 0.0, %v668
  %v670 = vpop.f32.mrb[0].mxu0
  %671 = vmatprep.mubr.bf16.mxu0 %v332
  %672 = vmatmul.mubr.bf16.gmra.mrb[0].mxu0 %v331
  %v673 = vpop.f32.mrb[0].mxu0
  %v674 = vadd.f32 0.0, %v673
  %v675 = vpop.f32.mrb[0].mxu0
  %v676 = vpop.f32.mrb[0].mxu0
  %v677 = vadd.f32 0.0, %v676
  %v678 = vpop.f32.mrb[0].mxu0
  %679 = vmatprep.mubr.bf16.mxu0 %v334
  %680 = vmatmul.mubr.bf16.gmra.mrb[0].mxu0 %v333
  %v681 = vpop.f32.mrb[0].mxu0
  %v682 = vadd.f32 0.0, %v681
  %v683 = vpop.f32.mrb[0].mxu0
  %v684 = vpop.f32.mrb[0].mxu0
  %v685 = vadd.f32 0.0, %v684
  %v686 = vpop.f32.mrb[0].mxu0
  %687 = vmatprep.mubr.bf16.mxu0 %v336
  %688 = vmatmul.mubr.bf16.gmra.mrb[0].mxu0 %v335
  %v689 = vpop.f32.mrb[0].mxu0
  %v690 = vadd.f32 0.0, %v689
  %v691 = vpop.f32.mrb[0].mxu0
  %v692 = vpop.f32.mrb[0].mxu0
  %v693 = vadd.f32 0.0, %v692
  %v694 = vpop.f32.mrb[0].mxu0
  %695 = vmatprep.mubr.bf16.mxu0 %v338
  %696 = vmatmul.mubr.bf16.gmra.mrb[0].mxu0 %v337
  %v697 = vpop.f32.mrb[0].mxu0
  %v698 = vadd.f32 0.0, %v697
  %v699 = vpop.f32.mrb[0].mxu0
  %v700 = vpop.f32.mrb[0].mxu0
  %v701 = vadd.f32 0.0, %v700
  %v702 = vpop.f32.mrb[0].mxu0
  %703 = vmatprep.mubr.bf16.mxu0 %v340
  %704 = vmatmul.mubr.bf16.gmra.mrb[0].mxu0 %v339
  %v705 = vpop.f32.mrb[0].mxu0
  %v706 = vadd.f32 0.0, %v705
  %v707 = vpop.f32.mrb[0].mxu0
  %v708 = vpop.f32.mrb[0].mxu0
  %v709 = vadd.f32 0.0, %v708
  %v710 = vpop.f32.mrb[0].mxu0
  %711 = vmatprep.mubr.bf16.mxu0 %v342
  %712 = vmatmul.mubr.bf16.gmra.mrb[0].mxu0 %v341
  %v713 = vpop.f32.mrb[0].mxu0
  %v714 = vadd.f32 0.0, %v713
  %v715 = vpop.f32.mrb[0].mxu0
  %v716 = vpop.f32.mrb[0].mxu0
  %v717 = vadd.f32 0.0, %v716
  %v718 = vpop.f32.mrb[0].mxu0
  %719 = vmatprep.mubr.bf16.mxu0 %v344
  %720 = vmatmul.mubr.bf16.gmra.mrb[0].mxu0 %v343
  %v721 = vpop.f32.mrb[0].mxu0
  %v722 = vadd.f32 0.0, %v721
  %v723 = vpop.f32.mrb[0].mxu0
  %v724 = vpop.f32.mrb[0].mxu0
  %v725 = vadd.f32 0.0, %v724
  %v726 = vpop.f32.mrb[0].mxu0
  %727 = vmatprep.mubr.bf16.mxu0 %v346
  %728 = vmatmul.mubr.bf16.gmra.mrb[0].mxu0 %v345
  %v729 = vpop.f32.mrb[0].mxu0
  %v730 = vadd.f32 0.0, %v729
  %v731 = vpop.f32.mrb[0].mxu0
  %v732 = vpop.f32.mrb[0].mxu0
  %v733 = vadd.f32 0.0, %v732
  %v734 = vpop.f32.mrb[0].mxu0
  %735 = vmatprep.mubr.bf16.mxu0 %v348
  %736 = vmatmul.mubr.bf16.gmra.mrb[0].mxu0 %v347
  %v737 = vpop.f32.mrb[0].mxu0
  %v738 = vadd.f32 0.0, %v737
  %v739 = vpop.f32.mrb[0].mxu0
  %v740 = vpop.f32.mrb[0].mxu0
  %v741 = vadd.f32 0.0, %v740
  %v742 = vpop.f32.mrb[0].mxu0
  %743 = vmatprep.mubr.bf16.mxu0 %v350
  %744 = vmatmul.mubr.bf16.gmra.mrb[0].mxu0 %v349
  %v745 = vpop.f32.mrb[0].mxu0
  %v746 = vadd.f32 0.0, %v745
  %v747 = vpop.f32.mrb[0].mxu0
  %v748 = vpop.f32.mrb[0].mxu0
  %v749 = vadd.f32 0.0, %v748
  %v750 = vpop.f32.mrb[0].mxu0
  %751 = vmatprep.mubr.bf16.mxu0 %v352
  %752 = vmatmul.mubr.bf16.gmra.mrb[0].mxu0 %v351
  %v753 = vpop.f32.mrb[0].mxu0
  %v754 = vadd.f32 0.0, %v753
  %v755 = vpop.f32.mrb[0].mxu0
  %v756 = vpop.f32.mrb[0].mxu0
  %v757 = vadd.f32 0.0, %v756
  %v758 = vpop.f32.mrb[0].mxu0
  %759 = vmatprep.mubr.bf16.mxu0 %v354
  %760 = vmatmul.mubr.bf16.gmra.mrb[0].mxu0 %v353
  %v761 = vpop.f32.mrb[0].mxu0
  %v762 = vadd.f32 0.0, %v761
  %v763 = vpop.f32.mrb[0].mxu0
  %v764 = vpop.f32.mrb[0].mxu0
  %v765 = vadd.f32 0.0, %v764
  %v766 = vpop.f32.mrb[0].mxu0
  %767 = vmatprep.mubr.bf16.mxu0 %v356
  %768 = vmatmul.mubr.bf16.gmra.mrb[0].mxu0 %v355
  %v769 = vpop.f32.mrb[0].mxu0
  %v770 = vadd.f32 0.0, %v769
  %v771 = vpop.f32.mrb[0].mxu0
  %v772 = vpop.f32.mrb[0].mxu0
  %v773 = vadd.f32 0.0, %v772
  %v774 = vpop.f32.mrb[0].mxu0
  %775 = vmatprep.mubr.bf16.mxu0 %v358
  %776 = vmatmul.mubr.bf16.gmra.mrb[0].mxu0 %v357
  %v777 = vpop.f32.mrb[0].mxu0
  %v778 = vadd.f32 0.0, %v777
  %v779 = vpop.f32.mrb[0].mxu0
  %v780 = vpop.f32.mrb[0].mxu0
  %v781 = vadd.f32 0.0, %v780
  %v782 = vpop.f32.mrb[0].mxu0
  %783 = vmatprep.mubr.bf16.mxu0 %v360
  %784 = vmatmul.mubr.bf16.gmra.mrb[0].mxu0 %v359
  %v785 = vpop.f32.mrb[0].mxu0
  %v786 = vadd.f32 0.0, %v785
  %v787 = vpop.f32.mrb[0].mxu0
  %v788 = vpop.f32.mrb[0].mxu0
  %v789 = vadd.f32 0.0, %v788
  %v790 = vpop.f32.mrb[0].mxu0
  %791 = vmatprep.mubr.bf16.mxu0 %v362
  %792 = vmatmul.mubr.bf16.gmra.mrb[0].mxu0 %v361
  %v793 = vpop.f32.mrb[0].mxu0
  %v794 = vadd.f32 0.0, %v793
  %v795 = vpop.f32.mrb[0].mxu0
  %v796 = vpop.f32.mrb[0].mxu0
  %v797 = vadd.f32 0.0, %v796
  %v798 = vpop.f32.mrb[0].mxu0
  %799 = vmatprep.mubr.bf16.mxu0 %v364
  %800 = vmatmul.mubr.bf16.gmra.mrb[0].mxu0 %v363
  %v801 = vpop.f32.mrb[0].mxu0
  %v802 = vadd.f32 0.0, %v801
  %v803 = vpop.f32.mrb[0].mxu0
  %v804 = vpop.f32.mrb[0].mxu0
  %v805 = vadd.f32 0.0, %v804
  %v806 = vpop.f32.mrb[0].mxu0
  %807 = vmatprep.mubr.bf16.mxu0 %v366
  %808 = vmatmul.mubr.bf16.gmra.mrb[0].mxu0 %v365
  %v809 = vpop.f32.mrb[0].mxu0
  %v810 = vadd.f32 0.0, %v809
  %v811 = vpop.f32.mrb[0].mxu0
  %v812 = vpop.f32.mrb[0].mxu0
  %v813 = vadd.f32 0.0, %v812
  %v814 = vpop.f32.mrb[0].mxu0
  %815 = vdwg.mxu0
  %v816 = vpack.c.bf16 %v565, %v562
  %v817 = vpack.c.bf16 %v573, %v570
  %v818 = vpack.c.bf16 %v581, %v578
  %v819 = vpack.c.bf16 %v589, %v586
  %v820 = vpack.c.bf16 %v597, %v594
  %v821 = vpack.c.bf16 %v605, %v602
  %v822 = vpack.c.bf16 %v613, %v610
  %v823 = vpack.c.bf16 %v621, %v618
  %v824 = vpack.c.bf16 %v629, %v626
  %v825 = vpack.c.bf16 %v637, %v634
  %v826 = vpack.c.bf16 %v645, %v642
  %v827 = vpack.c.bf16 %v653, %v650
  %v828 = vpack.c.bf16 %v661, %v658
  %v829 = vpack.c.bf16 %v669, %v666
  %v830 = vpack.c.bf16 %v677, %v674
  %v831 = vpack.c.bf16 %v685, %v682
  %v832 = vpack.c.bf16 %v693, %v690
  %v833 = vpack.c.bf16 %v701, %v698
  %v834 = vpack.c.bf16 %v709, %v706
  %v835 = vpack.c.bf16 %v717, %v714
  %v836 = vpack.c.bf16 %v725, %v722
  %v837 = vpack.c.bf16 %v733, %v730
  %v838 = vpack.c.bf16 %v741, %v738
  %v839 = vpack.c.bf16 %v749, %v746
  %v840 = vpack.c.bf16 %v757, %v754
  %v841 = vpack.c.bf16 %v765, %v762
  %v842 = vpack.c.bf16 %v773, %v770
  %v843 = vpack.c.bf16 %v781, %v778
  %v844 = vpack.c.bf16 %v789, %v786
  %v845 = vpack.c.bf16 %v797, %v794
  %v846 = vpack.c.bf16 %v805, %v802
  %v847 = vpack.c.bf16 %v813, %v810
  %v880 = vunpack.c.l.b16 %v816
  %v881 = vunpack.c.h.b16 %v816
  %v882 = vunpack.c.l.b16 %v817
  %v883 = vunpack.c.h.b16 %v817
  %v884 = vunpack.c.l.b16 %v818
  %v885 = vunpack.c.h.b16 %v818
  %v886 = vunpack.c.l.b16 %v819
  %v887 = vunpack.c.h.b16 %v819
  %v888 = vunpack.c.l.b16 %v820
  %v889 = vunpack.c.h.b16 %v820
  %v890 = vunpack.c.l.b16 %v821
  %v891 = vunpack.c.h.b16 %v821
  %v892 = vunpack.c.l.b16 %v822
  %v893 = vunpack.c.h.b16 %v822
  %v894 = vunpack.c.l.b16 %v823
  %v895 = vunpack.c.h.b16 %v823
  %v896 = vunpack.c.l.b16 %v824
  %v897 = vunpack.c.h.b16 %v824
  %v898 = vunpack.c.l.b16 %v825
  %v899 = vunpack.c.h.b16 %v825
  %v900 = vunpack.c.l.b16 %v826
  %v901 = vunpack.c.h.b16 %v826
  %v902 = vunpack.c.l.b16 %v827
  %v903 = vunpack.c.h.b16 %v827
  %v904 = vunpack.c.l.b16 %v828
  %v905 = vunpack.c.h.b16 %v828
  %v906 = vunpack.c.l.b16 %v829
  %v907 = vunpack.c.h.b16 %v829
  %v908 = vunpack.c.l.b16 %v830
  %v909 = vunpack.c.h.b16 %v830
  %v910 = vunpack.c.l.b16 %v831
  %v911 = vunpack.c.h.b16 %v831
  %v912 = vunpack.c.l.b16 %v832
  %v913 = vunpack.c.h.b16 %v832
  %v914 = vunpack.c.l.b16 %v833
  %v915 = vunpack.c.h.b16 %v833
  %v916 = vunpack.c.l.b16 %v834
  %v917 = vunpack.c.h.b16 %v834
  %v918 = vunpack.c.l.b16 %v835
  %v919 = vunpack.c.h.b16 %v835
  %v920 = vunpack.c.l.b16 %v836
  %v921 = vunpack.c.h.b16 %v836
  %v922 = vunpack.c.l.b16 %v837
  %v923 = vunpack.c.h.b16 %v837
  %v924 = vunpack.c.l.b16 %v838
  %v925 = vunpack.c.h.b16 %v838
  %v926 = vunpack.c.l.b16 %v839
  %v927 = vunpack.c.h.b16 %v839
  %v928 = vunpack.c.l.b16 %v840
  %v929 = vunpack.c.h.b16 %v840
  %v930 = vunpack.c.l.b16 %v841
  %v931 = vunpack.c.h.b16 %v841
  %v932 = vunpack.c.l.b16 %v842
  %v933 = vunpack.c.h.b16 %v842
  %v934 = vunpack.c.l.b16 %v843
  %v935 = vunpack.c.h.b16 %v843
  %v936 = vunpack.c.l.b16 %v844
  %v937 = vunpack.c.h.b16 %v844
  %v938 = vunpack.c.l.b16 %v845
  %v939 = vunpack.c.h.b16 %v845
  %v940 = vunpack.c.l.b16 %v846
  %v941 = vunpack.c.h.b16 %v846
  %v942 = vunpack.c.l.b16 %v847
  %v943 = vunpack.c.h.b16 %v847
  %v944 = vpack.c.b16 %v880, %v880
  %v945 = vpack.c.b16 %v881, %v881
  %v946 = vpack.c.b16 %v882, %v882
  %v947 = vpack.c.b16 %v883, %v883
  %v948 = vpack.c.b16 %v884, %v884
  %v949 = vpack.c.b16 %v885, %v885
  %v950 = vpack.c.b16 %v886, %v886
  %v951 = vpack.c.b16 %v887, %v887
  %v952 = vpack.c.b16 %v888, %v888
  %v953 = vpack.c.b16 %v889, %v889
  %v954 = vpack.c.b16 %v890, %v890
  %v955 = vpack.c.b16 %v891, %v891
  %v956 = vpack.c.b16 %v892, %v892
  %v957 = vpack.c.b16 %v893, %v893
  %v958 = vpack.c.b16 %v894, %v894
  %v959 = vpack.c.b16 %v895, %v895
  %v960 = vpack.c.b16 %v896, %v896
  %v961 = vpack.c.b16 %v897, %v897
  %v962 = vpack.c.b16 %v898, %v898
  %v963 = vpack.c.b16 %v899, %v899
  %v964 = vpack.c.b16 %v900, %v900
  %v965 = vpack.c.b16 %v901, %v901
  %v966 = vpack.c.b16 %v902, %v902
  %v967 = vpack.c.b16 %v903, %v903
  %v968 = vpack.c.b16 %v904, %v904
  %v969 = vpack.c.b16 %v905, %v905
  %v970 = vpack.c.b16 %v906, %v906
  %v971 = vpack.c.b16 %v907, %v907
  %v972 = vpack.c.b16 %v908, %v908
  %v973 = vpack.c.b16 %v909, %v909
  %v974 = vpack.c.b16 %v910, %v910
  %v975 = vpack.c.b16 %v911, %v911
  %v976 = vpack.c.b16 %v912, %v912
  %v977 = vpack.c.b16 %v913, %v913
  %v978 = vpack.c.b16 %v914, %v914
  %v979 = vpack.c.b16 %v915, %v915
  %v980 = vpack.c.b16 %v916, %v916
  %v981 = vpack.c.b16 %v917, %v917
  %v982 = vpack.c.b16 %v918, %v918
  %v983 = vpack.c.b16 %v919, %v919
  %v984 = vpack.c.b16 %v920, %v920
  %v985 = vpack.c.b16 %v921, %v921
  %v986 = vpack.c.b16 %v922, %v922
  %v987 = vpack.c.b16 %v923, %v923
  %v988 = vpack.c.b16 %v924, %v924
  %v989 = vpack.c.b16 %v925, %v925
  %v990 = vpack.c.b16 %v926, %v926
  %v991 = vpack.c.b16 %v927, %v927
  %v992 = vpack.c.b16 %v928, %v928
  %v993 = vpack.c.b16 %v929, %v929
  %v994 = vpack.c.b16 %v930, %v930
  %v995 = vpack.c.b16 %v931, %v931
  %v996 = vpack.c.b16 %v932, %v932
  %v997 = vpack.c.b16 %v933, %v933
  %v998 = vpack.c.b16 %v934, %v934
  %v999 = vpack.c.b16 %v935, %v935
  %v1000 = vpack.c.b16 %v936, %v936
  %v1001 = vpack.c.b16 %v937, %v937
  %v1002 = vpack.c.b16 %v938, %v938
  %v1003 = vpack.c.b16 %v939, %v939
  %v1004 = vpack.c.b16 %v940, %v940
  %v1005 = vpack.c.b16 %v941, %v941
  %v1006 = vpack.c.b16 %v942, %v942
  %v1007 = vpack.c.b16 %v943, %v943
  %1072 = vst [vmem:[%s2] sm:$0xf] %v944
  %1073 = vst [vmem:[%s2 + $0x4] sm:$0xf] %v945
  %1074 = vst [vmem:[%s2 + $0x8] sm:$0xf] %v946
  %1075 = vst [vmem:[%s2 + $0xc] sm:$0xf] %v947
  %1076 = vst [vmem:[%s2 + $0x10] sm:$0xf] %v948
  %1077 = vst [vmem:[%s2 + $0x14] sm:$0xf] %v949
  %1078 = vst [vmem:[%s2 + $0x18] sm:$0xf] %v950
  %1079 = vst [vmem:[%s2 + $0x1c] sm:$0xf] %v951
  %1080 = vst [vmem:[%s2 + $0x20] sm:$0xf] %v952
  %1081 = vst [vmem:[%s2 + $0x24] sm:$0xf] %v953
  %1082 = vst [vmem:[%s2 + $0x28] sm:$0xf] %v954
  %1083 = vst [vmem:[%s2 + $0x2c] sm:$0xf] %v955
  %1084 = vst [vmem:[%s2 + $0x30] sm:$0xf] %v956
  %1085 = vst [vmem:[%s2 + $0x34] sm:$0xf] %v957
  %1086 = vst [vmem:[%s2 + $0x38] sm:$0xf] %v958
  %1087 = vst [vmem:[%s2 + $0x3c] sm:$0xf] %v959
  %1088 = vst [vmem:[%s2 + $0x40] sm:$0xf] %v960
  %1089 = vst [vmem:[%s2 + $0x44] sm:$0xf] %v961
  %1090 = vst [vmem:[%s2 + $0x48] sm:$0xf] %v962
  %1091 = vst [vmem:[%s2 + $0x4c] sm:$0xf] %v963
  %1092 = vst [vmem:[%s2 + $0x50] sm:$0xf] %v964
  %1093 = vst [vmem:[%s2 + $0x54] sm:$0xf] %v965
  %1094 = vst [vmem:[%s2 + $0x58] sm:$0xf] %v966
  %1095 = vst [vmem:[%s2 + $0x5c] sm:$0xf] %v967
  %1096 = vst [vmem:[%s2 + $0x60] sm:$0xf] %v968
  %1097 = vst [vmem:[%s2 + $0x64] sm:$0xf] %v969
  %1098 = vst [vmem:[%s2 + $0x68] sm:$0xf] %v970
  %1099 = vst [vmem:[%s2 + $0x6c] sm:$0xf] %v971
  %1100 = vst [vmem:[%s2 + $0x70] sm:$0xf] %v972
  %1101 = vst [vmem:[%s2 + $0x74] sm:$0xf] %v973
  %1102 = vst [vmem:[%s2 + $0x78] sm:$0xf] %v974
  %1103 = vst [vmem:[%s2 + $0x7c] sm:$0xf] %v975
  %1104 = vst [vmem:[%s2 + $0x80] sm:$0xf] %v976
  %1105 = vst [vmem:[%s2 + $0x84] sm:$0xf] %v977
  %1106 = vst [vmem:[%s2 + $0x88] sm:$0xf] %v978
  %1107 = vst [vmem:[%s2 + $0x8c] sm:$0xf] %v979
  %1108 = vst [vmem:[%s2 + $0x90] sm:$0xf] %v980
  %1109 = vst [vmem:[%s2 + $0x94] sm:$0xf] %v981
  %1110 = vst [vmem:[%s2 + $0x98] sm:$0xf] %v982
  %1111 = vst [vmem:[%s2 + $0x9c] sm:$0xf] %v983
  %1112 = vst [vmem:[%s2 + $0xa0] sm:$0xf] %v984
  %1113 = vst [vmem:[%s2 + $0xa4] sm:$0xf] %v985
  %1114 = vst [vmem:[%s2 + $0xa8] sm:$0xf] %v986
  %1115 = vst [vmem:[%s2 + $0xac] sm:$0xf] %v987
  %1116 = vst [vmem:[%s2 + $0xb0] sm:$0xf] %v988
  %1117 = vst [vmem:[%s2 + $0xb4] sm:$0xf] %v989
  %1118 = vst [vmem:[%s2 + $0xb8] sm:$0xf] %v990
  %1119 = vst [vmem:[%s2 + $0xbc] sm:$0xf] %v991
  %1120 = vst [vmem:[%s2 + $0xc0] sm:$0xf] %v992
  %1121 = vst [vmem:[%s2 + $0xc4] sm:$0xf] %v993
  %1122 = vst [vmem:[%s2 + $0xc8] sm:$0xf] %v994
  %1123 = vst [vmem:[%s2 + $0xcc] sm:$0xf] %v995
  %1124 = vst [vmem:[%s2 + $0xd0] sm:$0xf] %v996
  %1125 = vst [vmem:[%s2 + $0xd4] sm:$0xf] %v997
  %1126 = vst [vmem:[%s2 + $0xd8] sm:$0xf] %v998
  %1127 = vst [vmem:[%s2 + $0xdc] sm:$0xf] %v999
  %1128 = vst [vmem:[%s2 + $0xe0] sm:$0xf] %v1000
  %1129 = vst [vmem:[%s2 + $0xe4] sm:$0xf] %v1001
  %1130 = vst [vmem:[%s2 + $0xe8] sm:$0xf] %v1002
  %1131 = vst [vmem:[%s2 + $0xec] sm:$0xf] %v1003
  %1132 = vst [vmem:[%s2 + $0xf0] sm:$0xf] %v1004
  %1133 = vst [vmem:[%s2 + $0xf4] sm:$0xf] %v1005
  %1134 = vst [vmem:[%s2 + $0xf8] sm:$0xf] %v1006
  %1135 = vst [vmem:[%s2 + $0xfc] sm:$0xf] %v1007
  %v1136 = vadd.f32 %v562, %v565
  %v1137 = vadd.f32 %v1136, %v570
  %v1138 = vadd.f32 %v1137, %v573
  %v1139 = vadd.f32 %v1138, %v578
  %v1140 = vadd.f32 %v1139, %v581
  %v1141 = vadd.f32 %v1140, %v586
  %v1142 = vadd.f32 %v1141, %v589
  %v1143 = vadd.f32 %v1142, %v594
  %v1144 = vadd.f32 %v1143, %v597
  %v1145 = vadd.f32 %v1144, %v602
  %v1146 = vadd.f32 %v1145, %v605
  %v1147 = vadd.f32 %v1146, %v610
  %v1148 = vadd.f32 %v1147, %v613
  %v1149 = vadd.f32 %v1148, %v618
  %v1150 = vadd.f32 %v1149, %v621
  %v1151 = vadd.f32 %v1150, %v626
  %v1152 = vadd.f32 %v1151, %v629
  %v1153 = vadd.f32 %v1152, %v634
  %v1154 = vadd.f32 %v1153, %v637
  %v1155 = vadd.f32 %v1154, %v642
  %v1156 = vadd.f32 %v1155, %v645
  %v1157 = vadd.f32 %v1156, %v650
  %v1158 = vadd.f32 %v1157, %v653
  %v1159 = vadd.f32 %v1158, %v658
  %v1160 = vadd.f32 %v1159, %v661
  %v1161 = vadd.f32 %v1160, %v666
  %v1162 = vadd.f32 %v1161, %v669
  %v1163 = vadd.f32 %v1162, %v674
  %v1164 = vadd.f32 %v1163, %v677
  %v1165 = vadd.f32 %v1164, %v682
  %v1166 = vadd.f32 %v1165, %v685
  %v1167 = vadd.f32 %v1166, %v690
  %v1168 = vadd.f32 %v1167, %v693
  %v1169 = vadd.f32 %v1168, %v698
  %v1170 = vadd.f32 %v1169, %v701
  %v1171 = vadd.f32 %v1170, %v706
  %v1172 = vadd.f32 %v1171, %v709
  %v1173 = vadd.f32 %v1172, %v714
  %v1174 = vadd.f32 %v1173, %v717
  %v1175 = vadd.f32 %v1174, %v722
  %v1176 = vadd.f32 %v1175, %v725
  %v1177 = vadd.f32 %v1176, %v730
  %v1178 = vadd.f32 %v1177, %v733
  %v1179 = vadd.f32 %v1178, %v738
  %v1180 = vadd.f32 %v1179, %v741
  %v1181 = vadd.f32 %v1180, %v746
  %v1182 = vadd.f32 %v1181, %v749
  %v1183 = vadd.f32 %v1182, %v754
  %v1184 = vadd.f32 %v1183, %v757
  %v1185 = vadd.f32 %v1184, %v762
  %v1186 = vadd.f32 %v1185, %v765
  %v1187 = vadd.f32 %v1186, %v770
  %v1188 = vadd.f32 %v1187, %v773
  %v1189 = vadd.f32 %v1188, %v778
  %v1190 = vadd.f32 %v1189, %v781
  %v1191 = vadd.f32 %v1190, %v786
  %v1192 = vadd.f32 %v1191, %v789
  %v1193 = vadd.f32 %v1192, %v794
  %v1194 = vadd.f32 %v1193, %v797
  %v1195 = vadd.f32 %v1194, %v802
  %v1196 = vadd.f32 %v1195, %v805
  %v1197 = vadd.f32 %v1196, %v810
  %v1198 = vadd.f32 %v1197, %v813
  %v1199 = vrot.slane %v1198, 4
  %v1200 = vadd.f32 %v1198, %v1199
  %v1201 = vrot.slane %v1200, 2
  %v1202 = vadd.f32 %v1200, %v1201
  %v1203 = vrot.slane %v1202, 1
  %v1204 = vadd.f32 %v1202, %v1203
  %1205 = vst [vmem:[%s3] sm:$0x1] %v1204
  %v1206 = vmul.f32 %v562, %v562
  %v1207 = vmul.f32 %v565, %v565
  %v1208 = vmul.f32 %v570, %v570
  %v1209 = vmul.f32 %v573, %v573
  %v1210 = vmul.f32 %v578, %v578
  %v1211 = vmul.f32 %v581, %v581
  %v1212 = vmul.f32 %v586, %v586
  %v1213 = vmul.f32 %v589, %v589
  %v1214 = vmul.f32 %v594, %v594
  %v1215 = vmul.f32 %v597, %v597
  %v1216 = vmul.f32 %v602, %v602
  %v1217 = vmul.f32 %v605, %v605
  %v1218 = vmul.f32 %v610, %v610
  %v1219 = vmul.f32 %v613, %v613
  %v1220 = vmul.f32 %v618, %v618
  %v1221 = vmul.f32 %v621, %v621
  %v1222 = vmul.f32 %v626, %v626
  %v1223 = vmul.f32 %v629, %v629
  %v1224 = vmul.f32 %v634, %v634
  %v1225 = vmul.f32 %v637, %v637
  %v1226 = vmul.f32 %v642, %v642
  %v1227 = vmul.f32 %v645, %v645
  %v1228 = vmul.f32 %v650, %v650
  %v1229 = vmul.f32 %v653, %v653
  %v1230 = vmul.f32 %v658, %v658
  %v1231 = vmul.f32 %v661, %v661
  %v1232 = vmul.f32 %v666, %v666
  %v1233 = vmul.f32 %v669, %v669
  %v1234 = vmul.f32 %v674, %v674
  %v1235 = vmul.f32 %v677, %v677
  %v1236 = vmul.f32 %v682, %v682
  %v1237 = vmul.f32 %v685, %v685
  %v1238 = vmul.f32 %v690, %v690
  %v1239 = vmul.f32 %v693, %v693
  %v1240 = vmul.f32 %v698, %v698
  %v1241 = vmul.f32 %v701, %v701
  %v1242 = vmul.f32 %v706, %v706
  %v1243 = vmul.f32 %v709, %v709
  %v1244 = vmul.f32 %v714, %v714
  %v1245 = vmul.f32 %v717, %v717
  %v1246 = vmul.f32 %v722, %v722
  %v1247 = vmul.f32 %v725, %v725
  %v1248 = vmul.f32 %v730, %v730
  %v1249 = vmul.f32 %v733, %v733
  %v1250 = vmul.f32 %v738, %v738
  %v1251 = vmul.f32 %v741, %v741
  %v1252 = vmul.f32 %v746, %v746
  %v1253 = vmul.f32 %v749, %v749
  %v1254 = vmul.f32 %v754, %v754
  %v1255 = vmul.f32 %v757, %v757
  %v1256 = vmul.f32 %v762, %v762
  %v1257 = vmul.f32 %v765, %v765
  %v1258 = vmul.f32 %v770, %v770
  %v1259 = vmul.f32 %v773, %v773
  %v1260 = vmul.f32 %v778, %v778
  %v1261 = vmul.f32 %v781, %v781
  %v1262 = vmul.f32 %v786, %v786
  %v1263 = vmul.f32 %v789, %v789
  %v1264 = vmul.f32 %v794, %v794
  %v1265 = vmul.f32 %v797, %v797
  %v1266 = vmul.f32 %v802, %v802
  %v1267 = vmul.f32 %v805, %v805
  %v1268 = vmul.f32 %v810, %v810
  %v1269 = vmul.f32 %v813, %v813
  %v1270 = vadd.f32 %v1206, %v1207
  %v1271 = vadd.f32 %v1270, %v1208
  %v1272 = vadd.f32 %v1271, %v1209
  %v1273 = vadd.f32 %v1272, %v1210
  %v1274 = vadd.f32 %v1273, %v1211
  %v1275 = vadd.f32 %v1274, %v1212
  %v1276 = vadd.f32 %v1275, %v1213
  %v1277 = vadd.f32 %v1276, %v1214
  %v1278 = vadd.f32 %v1277, %v1215
  %v1279 = vadd.f32 %v1278, %v1216
  %v1280 = vadd.f32 %v1279, %v1217
  %v1281 = vadd.f32 %v1280, %v1218
  %v1282 = vadd.f32 %v1281, %v1219
  %v1283 = vadd.f32 %v1282, %v1220
  %v1284 = vadd.f32 %v1283, %v1221
  %v1285 = vadd.f32 %v1284, %v1222
  %v1286 = vadd.f32 %v1285, %v1223
  %v1287 = vadd.f32 %v1286, %v1224
  %v1288 = vadd.f32 %v1287, %v1225
  %v1289 = vadd.f32 %v1288, %v1226
  %v1290 = vadd.f32 %v1289, %v1227
  %v1291 = vadd.f32 %v1290, %v1228
  %v1292 = vadd.f32 %v1291, %v1229
  %v1293 = vadd.f32 %v1292, %v1230
  %v1294 = vadd.f32 %v1293, %v1231
  %v1295 = vadd.f32 %v1294, %v1232
  %v1296 = vadd.f32 %v1295, %v1233
  %v1297 = vadd.f32 %v1296, %v1234
  %v1298 = vadd.f32 %v1297, %v1235
  %v1299 = vadd.f32 %v1298, %v1236
  %v1300 = vadd.f32 %v1299, %v1237
  %v1301 = vadd.f32 %v1300, %v1238
  %v1302 = vadd.f32 %v1301, %v1239
  %v1303 = vadd.f32 %v1302, %v1240
  %v1304 = vadd.f32 %v1303, %v1241
  %v1305 = vadd.f32 %v1304, %v1242
  %v1306 = vadd.f32 %v1305, %v1243
  %v1307 = vadd.f32 %v1306, %v1244
  %v1308 = vadd.f32 %v1307, %v1245
  %v1309 = vadd.f32 %v1308, %v1246
  %v1310 = vadd.f32 %v1309, %v1247
  %v1311 = vadd.f32 %v1310, %v1248
  %v1312 = vadd.f32 %v1311, %v1249
  %v1313 = vadd.f32 %v1312, %v1250
  %v1314 = vadd.f32 %v1313, %v1251
  %v1315 = vadd.f32 %v1314, %v1252
  %v1316 = vadd.f32 %v1315, %v1253
  %v1317 = vadd.f32 %v1316, %v1254
  %v1318 = vadd.f32 %v1317, %v1255
  %v1319 = vadd.f32 %v1318, %v1256
  %v1320 = vadd.f32 %v1319, %v1257
  %v1321 = vadd.f32 %v1320, %v1258
  %v1322 = vadd.f32 %v1321, %v1259
  %v1323 = vadd.f32 %v1322, %v1260
  %v1324 = vadd.f32 %v1323, %v1261
  %v1325 = vadd.f32 %v1324, %v1262
  %v1326 = vadd.f32 %v1325, %v1263
  %v1327 = vadd.f32 %v1326, %v1264
  %v1328 = vadd.f32 %v1327, %v1265
  %v1329 = vadd.f32 %v1328, %v1266
  %v1330 = vadd.f32 %v1329, %v1267
  %v1331 = vadd.f32 %v1330, %v1268
  %v1332 = vadd.f32 %v1331, %v1269
  %v1333 = vrot.slane %v1332, 4
  %v1334 = vadd.f32 %v1332, %v1333
  %v1335 = vrot.slane %v1334, 2
  %v1336 = vadd.f32 %v1334, %v1335
  %v1337 = vrot.slane %v1336, 1
  %v1338 = vadd.f32 %v1336, %v1337
  %1339 = vst [vmem:[%s4] sm:$0x1] %v1338
  // Predicated region
  $region10: #{model_forward.3} parent=0 // pred_check
    _
  $region11: #{model_forward.3} parent=0 // pred_check_branch
    %1341 = sbr.rel (0) target = $region13
  $region12: #{model_forward.3} parent=0 // pred_region
    _
  $region13: #{model_forward.3} parent=0 // pred_fallthru
    _
  // Predicated region
  $region14: #{model_forward.3} parent=0 // pred_check
    _
  $region15: #{model_forward.3} parent=0 // pred_check_branch
    %1343 = sbr.rel (0) target = $region17
  $region16: #{model_forward.3} parent=0 // pred_region
    _
  $region17: #{model_forward.3} parent=0 // pred_fallthru
    _
  // Predicated region
  $region18: #{model_forward.3} parent=0 // pred_check
    _
  $region19: #{model_forward.3} parent=0 // pred_check_branch
    %1345 = sbr.rel (0) target = $region21
  $region20: #{model_forward.3} parent=0 // pred_region
    _
  $region21: #{model_forward.3} parent=0 // pred_fallthru
    _
  // Predicated region
  $region22: #{model_forward.3} parent=0 // pred_check
    _
  $region23: #{model_forward.3} parent=0 // pred_check_branch
    %1347 = sbr.rel (0) target = $region25
  $region24: #{model_forward.3} parent=0 // pred_region
    _
  $region25: #{model_forward.3} parent=0 // pred_fallthru
    _
  // Predicated region
  $region26: #{model_forward.3} parent=0 // pred_check
    _
  $region27: #{model_forward.3} parent=0 // pred_check_branch
    %1349 = sbr.rel (0) target = $region29
  $region28: #{model_forward.3} parent=0 // pred_region
    _
  $region29: #{model_forward.3} parent=0 // pred_fallthru
    _
  // Predicated region
  $region30: #{model_forward.3} parent=0 // pred_check
    _
  $region31: #{model_forward.3} parent=0 // pred_check_branch
    %1351 = sbr.rel (0) target = $region33
  $region32: #{model_forward.3} parent=0 // pred_region
    _
  $region33: #{model_forward.3} parent=0 // pred_fallthru
    _

// kernel: model_forward.4
$region0: #{model_forward.4}
  #allocation0 [shape = 'u32[]', space=smem, size = 0x4, offset = 0x4, fixed_abs, tag = 'smem constant byte address 0x4 - core index']
  #allocation1 [shape = 'u32[144,128]{1,0:T(1,128)}', space=vmem, size = 0x12000, scoped, tag = 'internal scratch']
  #allocation2 [shape = 'bf16[296,128]{1,0:T(8,128)(2,1)}', space=vmem, size = 0x12800, scoped, tag = 'scratch operand']
  %s0 = inlined_call_operand.vmem [shape: bf16[512,128], index: 0, kind: input, shape index: {}]
  %s1 = inlined_call_operand.vmem [shape: f32[1,128], index: 1, kind: input, shape index: {}]
  %s2 = inlined_call_operand.vmem [shape: f32[1,128], index: 2, kind: input, shape index: {}]
  %s3 = inlined_call_operand.vmem [shape: f32[192,1], index: 3, kind: input, shape index: {}]
  %s4 = inlined_call_operand.vmem [shape: bf16[9,128,128], index: 4, kind: input, shape index: {}]
  %s5 = inlined_call_operand.vmem [shape: f32[768,128], index: 5, kind: output, shape index: {0}]
  %s6 = inlined_call_operand.vmem [shape: f32[4,1,128], index: 6, kind: output, shape index: {1}]
  %s7 = inlined_call_operand.vmem [shape: f32[4,1,128], index: 7, kind: output, shape index: {2}]
  %8 = xla_tuple %s5, %s6, %s7
  %s9 = sld [smem:[#allocation0]]
  $region69: #{model_forward.4} parent=0
    _
  %s11 = ssub.s32 1, %s9
  %s12 = scalar_select 0, %s11, %s9
  loop: start=0, step=1, limit=6
  $region2: #{model_forward.4} parent=0 // loop_pre_header
    _
  $region3: #{model_forward.4} parent=0 // loop_header
    %s14 = sphi 0, %s18
    %p15 = scmp.ge.s32.totalorder %s14, 6
    %s21 = sphi 0, %s33
    %s22 = sphi 0, %s29
    %s23 = sphi 0, %s21
    %s24 = sphi 0, %s22
    %s25 = sphi 0, %s23
    %s26 = sphi 0, %s24
    %s36 = sphi 0, %s38
    %s39 = sphi 0, %s36
    %s40 = sphi 0, %s39
    %s56 = sphi 0, %s40
    %s60 = sphi 0, %s60
    %s62 = sphi 0, %s60
    %s63 = sphi 0, %s62
    %s77 = sphi 0, %s63
    %s81 = sphi 0, %s81
    %s83 = sphi 0, %s81
    %s84 = sphi 0, %s83
    %s98 = sphi 0, %s84
    %s102 = sphi 0, %s102
    %s104 = sphi 0, %s102
    %s105 = sphi 0, %s104
    %s119 = sphi 0, %s105
    %s123 = sphi 0, %s123
    %s125 = sphi 0, %s123
    %s126 = sphi 0, %s125
    %s140 = sphi 0, %s126
    %s150 = sphi 0, %s152
    %s153 = sphi 0, %s150
    %s154 = sphi 0, %s153
    %s170 = sphi 0, %s154
    %s180 = sphi 0, %s182
    %s183 = sphi 0, %s180
    %s184 = sphi 0, %s183
    %s200 = sphi 0, %s184
    %s210 = sphi 0, %s212
    %s213 = sphi 0, %s210
    %s214 = sphi 0, %s213
    %s230 = sphi 0, %s214
  $region4: #{model_forward.4} parent=0 // loop_header_branch
    %17 = sbr.rel (%p15) target = $region8
  $region5: #{model_forward.4} parent=0 // loop_body
    %s19 = ssub.s32 %s14, 1
    %s20 = ssub.s32 %s14, 2
    %s27 = sadd.s32 1, %s22
    %p28 = scmp.ge.s32.totalorder %s27, 2
    %s29 = scalar_select %p28, 0, %s27
    %s30 = sadd.s32 1, %s21
    %s31 = scalar_select %p28, %s30, %s21
    %p32 = scmp.ge.s32.totalorder %s31, 2
    %s33 = scalar_select %p32, 0, %s31
    %s34 = ssub.s32 %s21, %s33
    %p35 = scmp.eq.s32.totalorder %s34, 0
    %s37 = sadd.s32 %s36, 1
    %s38 = scalar_select %p35, %s36, %s37
    %p41 = pneg %p35
    %p42 = scmp.eq.s32.totalorder %s14, 3
    %p43 = por %p41, %p42
    %p44 = scmp.ne.s32.totalorder %s36, %s39
    %p45 = scmp.eq.s32.totalorder %s14, 0
    %p46 = por %p44, %p45
    %p47 = scmp.ne.s32.totalorder %s36, %s39
    %p48 = scmp.eq.s32.totalorder %s19, 3
    %p49 = por %p47, %p48
    %p50 = scmp.ne.s32.totalorder %s39, %s40
    %p51 = scmp.eq.s32.totalorder %s19, 0
    %p52 = por %p50, %p51
    %p53 = scmp.ne.s32.totalorder %s39, %s40
    %p54 = scmp.eq.s32.totalorder %s20, 3
    %p55 = por %p53, %p54
    %p57 = scmp.ne.s32.totalorder %s40, %s56
    %p58 = scmp.eq.s32.totalorder %s20, 0
    %p59 = por %p57, %p58
    %s61 = sadd.s32 %s60, 1
    %p64 = scmp.eq.s32.totalorder %s14, 3
    %p65 = scmp.ne.s32.totalorder %s60, %s62
    %p66 = scmp.eq.s32.totalorder %s14, 0
    %p67 = por %p65, %p66
    %p68 = scmp.ne.s32.totalorder %s60, %s62
    %p69 = scmp.eq.s32.totalorder %s19, 3
    %p70 = por %p68, %p69
    %p71 = scmp.ne.s32.totalorder %s62, %s63
    %p72 = scmp.eq.s32.totalorder %s19, 0
    %p73 = por %p71, %p72
    %p74 = scmp.ne.s32.totalorder %s62, %s63
    %p75 = scmp.eq.s32.totalorder %s20, 3
    %p76 = por %p74, %p75
    %p78 = scmp.ne.s32.totalorder %s63, %s77
    %p79 = scmp.eq.s32.totalorder %s20, 0
    %p80 = por %p78, %p79
    %s82 = sadd.s32 %s81, 1
    %p85 = scmp.eq.s32.totalorder %s14, 3
    %p86 = scmp.ne.s32.totalorder %s81, %s83
    %p87 = scmp.eq.s32.totalorder %s14, 0
    %p88 = por %p86, %p87
    %p89 = scmp.ne.s32.totalorder %s81, %s83
    %p90 = scmp.eq.s32.totalorder %s19, 3
    %p91 = por %p89, %p90
    %p92 = scmp.ne.s32.totalorder %s83, %s84
    %p93 = scmp.eq.s32.totalorder %s19, 0
    %p94 = por %p92, %p93
    %p95 = scmp.ne.s32.totalorder %s83, %s84
    %p96 = scmp.eq.s32.totalorder %s20, 3
    %p97 = por %p95, %p96
    %p99 = scmp.ne.s32.totalorder %s84, %s98
    %p100 = scmp.eq.s32.totalorder %s20, 0
    %p101 = por %p99, %p100
    %s103 = sadd.s32 %s102, 1
    %p106 = scmp.eq.s32.totalorder %s14, 3
    %p107 = scmp.ne.s32.totalorder %s102, %s104
    %p108 = scmp.eq.s32.totalorder %s14, 0
    %p109 = por %p107, %p108
    %p110 = scmp.ne.s32.totalorder %s102, %s104
    %p111 = scmp.eq.s32.totalorder %s19, 3
    %p112 = por %p110, %p111
    %p113 = scmp.ne.s32.totalorder %s104, %s105
    %p114 = scmp.eq.s32.totalorder %s19, 0
    %p115 = por %p113, %p114
    %p116 = scmp.ne.s32.totalorder %s104, %s105
    %p117 = scmp.eq.s32.totalorder %s20, 3
    %p118 = por %p116, %p117
    %p120 = scmp.ne.s32.totalorder %s105, %s119
    %p121 = scmp.eq.s32.totalorder %s20, 0
    %p122 = por %p120, %p121
    %s124 = sadd.s32 %s123, 1
    %p127 = scmp.eq.s32.totalorder %s14, 3
    %p128 = scmp.ne.s32.totalorder %s123, %s125
    %p129 = scmp.eq.s32.totalorder %s14, 0
    %p130 = por %p128, %p129
    %p131 = scmp.ne.s32.totalorder %s123, %s125
    %p132 = scmp.eq.s32.totalorder %s19, 3
    %p133 = por %p131, %p132
    %p134 = scmp.ne.s32.totalorder %s125, %s126
    %p135 = scmp.eq.s32.totalorder %s19, 0
    %p136 = por %p134, %p135
    %p137 = scmp.ne.s32.totalorder %s125, %s126
    %p138 = scmp.eq.s32.totalorder %s20, 3
    %p139 = por %p137, %p138
    %p141 = scmp.ne.s32.totalorder %s126, %s140
    %p142 = scmp.eq.s32.totalorder %s20, 0
    %p143 = por %p141, %p142
    %s144 = smul.u32 %s21, 2
    %s145 = sadd.s32 %s144, %s22
    %s146 = smul.u32 %s33, 2
    %s147 = sadd.s32 %s146, %s29
    %s148 = ssub.s32 %s145, %s147
    %p149 = scmp.eq.s32.totalorder %s148, 0
    %s151 = sadd.s32 %s150, 1
    %s152 = scalar_select %p149, %s150, %s151
    %p155 = pneg %p149
    %p156 = scmp.eq.s32.totalorder %s14, 3
    %p157 = por %p155, %p156
    %p158 = scmp.ne.s32.totalorder %s150, %s153
    %p159 = scmp.eq.s32.totalorder %s14, 0
    %p160 = por %p158, %p159
    %p161 = scmp.ne.s32.totalorder %s150, %s153
    %p162 = scmp.eq.s32.totalorder %s19, 3
    %p163 = por %p161, %p162
    %p164 = scmp.ne.s32.totalorder %s153, %s154
    %p165 = scmp.eq.s32.totalorder %s19, 0
    %p166 = por %p164, %p165
    %p167 = scmp.ne.s32.totalorder %s153, %s154
    %p168 = scmp.eq.s32.totalorder %s20, 3
    %p169 = por %p167, %p168
    %p171 = scmp.ne.s32.totalorder %s154, %s170
    %p172 = scmp.eq.s32.totalorder %s20, 0
    %p173 = por %p171, %p172
    %s174 = smul.u32 %s21, 2
    %s175 = sadd.s32 %s174, %s22
    %s176 = smul.u32 %s33, 2
    %s177 = sadd.s32 %s176, %s29
    %s178 = ssub.s32 %s175, %s177
    %p179 = scmp.eq.s32.totalorder %s178, 0
    %s181 = sadd.s32 %s180, 1
    %s182 = scalar_select %p179, %s180, %s181
    %p185 = pneg %p179
    %p186 = scmp.eq.s32.totalorder %s14, 3
    %p187 = por %p185, %p186
    %p188 = scmp.ne.s32.totalorder %s180, %s183
    %p189 = scmp.eq.s32.totalorder %s14, 0
    %p190 = por %p188, %p189
    %p191 = scmp.ne.s32.totalorder %s180, %s183
    %p192 = scmp.eq.s32.totalorder %s19, 3
    %p193 = por %p191, %p192
    %p194 = scmp.ne.s32.totalorder %s183, %s184
    %p195 = scmp.eq.s32.totalorder %s19, 0
    %p196 = por %p194, %p195
    %p197 = scmp.ne.s32.totalorder %s183, %s184
    %p198 = scmp.eq.s32.totalorder %s20, 3
    %p199 = por %p197, %p198
    %p201 = scmp.ne.s32.totalorder %s184, %s200
    %p202 = scmp.eq.s32.totalorder %s20, 0
    %p203 = por %p201, %p202
    %s204 = smul.u32 %s21, 2
    %s205 = sadd.s32 %s204, %s22
    %s206 = smul.u32 %s33, 2
    %s207 = sadd.s32 %s206, %s29
    %s208 = ssub.s32 %s205, %s207
    %p209 = scmp.eq.s32.totalorder %s208, 0
    %s211 = sadd.s32 %s210, 1
    %s212 = scalar_select %p209, %s210, %s211
    %p215 = pneg %p209
    %p216 = scmp.eq.s32.totalorder %s14, 3
    %p217 = por %p215, %p216
    %p218 = scmp.ne.s32.totalorder %s210, %s213
    %p219 = scmp.eq.s32.totalorder %s14, 0
    %p220 = por %p218, %p219
    %p221 = scmp.ne.s32.totalorder %s210, %s213
    %p222 = scmp.eq.s32.totalorder %s19, 3
    %p223 = por %p221, %p222
    %p224 = scmp.ne.s32.totalorder %s213, %s214
    %p225 = scmp.eq.s32.totalorder %s19, 0
    %p226 = por %p224, %p225
    %p227 = scmp.ne.s32.totalorder %s213, %s214
    %p228 = scmp.eq.s32.totalorder %s20, 3
    %p229 = por %p227, %p228
    %p231 = scmp.ne.s32.totalorder %s214, %s230
    %p232 = scmp.eq.s32.totalorder %s20, 0
    %p233 = por %p231, %p232
    %p234 = scmp.le.s32.totalorder 1, %s14
    %p235 = scmp.lt.s32.totalorder %s14, 5
    %p236 = pnand %p234, %p235
    %p237 = pneg %p236
    // Predicated region
    $region9: #{model_forward.4} parent=5 // pred_check
      _
    $region10: #{model_forward.4} parent=5 // pred_check_branch
      %239 = sbr.rel (%p236) target = $region12
    $region11: #{model_forward.4} parent=5 // pred_region
      %s240 = ssub.s32 %s14, 1
      // Predicated region
      $region13: #{model_forward.4} parent=11 // pred_check
        %p241 = pneg %p73
      $region14: #{model_forward.4} parent=11 // pred_check_branch
        %243 = sbr.rel (%p241) target = $region16
      $region15: #{model_forward.4} parent=11 // pred_region
        _
      $region16: #{model_forward.4} parent=11 // pred_fallthru
        _
      // Predicated region
      $region17: #{model_forward.4} parent=11 // pred_check
        %p244 = pneg %p94
      $region18: #{model_forward.4} parent=11 // pred_check_branch
        %246 = sbr.rel (%p244) target = $region20
      $region19: #{model_forward.4} parent=11 // pred_region
        _
      $region20: #{model_forward.4} parent=11 // pred_fallthru
        _
      // Predicated region
      $region21: #{model_forward.4} parent=11 // pred_check
        %p247 = pneg %p115
      $region22: #{model_forward.4} parent=11 // pred_check_branch
        %249 = sbr.rel (%p247) target = $region24
      $region23: #{model_forward.4} parent=11 // pred_region
        _
      $region24: #{model_forward.4} parent=11 // pred_fallthru
        _
      // Predicated region
      $region25: #{model_forward.4} parent=11 // pred_check
        %p250 = pneg %p136
      $region26: #{model_forward.4} parent=11 // pred_check_branch
        %252 = sbr.rel (%p250) target = $region28
      $region27: #{model_forward.4} parent=11 // pred_region
        _
      $region28: #{model_forward.4} parent=11 // pred_fallthru
        _
    $region12: #{model_forward.4} parent=5 // pred_fallthru
      _
    %p253 = scmp.lt.s32.totalorder %s14, 4
    // Predicated region
    $region29: #{model_forward.4} parent=5 // pred_check
      %p254 = pneg %p253
    $region30: #{model_forward.4} parent=5 // pred_check_branch
      %256 = sbr.rel (%p254) target = $region32
    $region31: #{model_forward.4} parent=5 // pred_region
      // Predicated region
      $region33: #{model_forward.4} parent=31 // pred_check
        %p257 = pneg %p46
      $region34: #{model_forward.4} parent=31 // pred_check_branch
        %259 = sbr.rel (%p257) target = $region36
      $region35: #{model_forward.4} parent=31 // pred_region
        %s260 = smul.u32 32, %s21
        %p261 = scmp.lt.s32.totalorder %s260, 63
        %s262 = scalar_select %p261, %s260, 63
        %s263 = smul.addr %s262, 4
        %s264 = scalar_lea.vmem %s0, %s263
        %s265 = smul.u32 32, %s21
      $region36: #{model_forward.4} parent=31 // pred_fallthru
        _
    $region32: #{model_forward.4} parent=5 // pred_fallthru
      _
    %p266 = scmp.le.s32.totalorder 1, %s14
    %p267 = scmp.lt.s32.totalorder %s14, 5
    %p268 = pnand %p266, %p267
    %p269 = pneg %p268
    // Predicated region
    $region37: #{model_forward.4} parent=5 // pred_check
      _
    $region38: #{model_forward.4} parent=5 // pred_check_branch
      %271 = sbr.rel (%p268) target = $region40
    $region39: #{model_forward.4} parent=5 // pred_region
      %s272 = ssub.s32 %s14, 1
      %s273 = smul.u32 32, %s23
      %p274 = scmp.lt.s32.totalorder %s273, 63
      %s275 = scalar_select %p274, %s273, 63
      %s276 = smul.addr %s275, 4
      %s277 = scalar_lea.vmem %s0, %s276
      %p278 = pneg %p52
      %p279 = pneg %p49
      %p280 = pneg %p73
      %p281 = pneg %p70
      %p282 = pneg %p94
      %p283 = pneg %p91
      %p284 = pneg %p115
      %p285 = pneg %p112
      %p286 = pneg %p136
      %p287 = pneg %p133
      %p288 = pneg %p166
      %p289 = pneg %p163
      %s290 = smul.u32 %s23, 2
      %s291 = sadd.s32 %s290, %s24
      %s292 = smul.u32 24, %s291
      %p293 = scmp.lt.s32.totalorder %s292, 95
      %s294 = scalar_select %p293, %s292, 95
      %s295 = smul.addr %s294, 8
      %s296 = scalar_lea.vmem %s5, %s295
      %p297 = pneg %p196
      %p298 = pneg %p193
      %s299 = smul.u32 %s23, 2
      %s300 = sadd.s32 %s299, %s24
      %p301 = scmp.lt.s32.totalorder %s300, 3
      %s302 = scalar_select %p301, %s300, 3
      %s303 = scalar_lea.vmem %s6, %s302
      %p304 = pneg %p226
      %p305 = pneg %p223
      %s306 = smul.u32 %s23, 2
      %s307 = sadd.s32 %s306, %s24
      %p308 = scmp.lt.s32.totalorder %s307, 3
      %s309 = scalar_select %p308, %s307, 3
      %s310 = scalar_lea.vmem %s7, %s309
      %s311 = smul.u32 32, %s23
      %p312 = scmp.lt.s32.totalorder %s311, 63
      %s313 = scalar_select %p312, %s311, 63
      %s314 = smul.addr %s313, 4
      %s315 = scalar_lea.vmem %s0, %s314
      %s316 = smul.u32 32, %s23
      %s317 = smul.u32 %s23, 2
      %s318 = sadd.s32 %s317, %s24
      %s319 = smul.u32 24, %s318
      %p320 = scmp.lt.s32.totalorder %s319, 95
      %s321 = scalar_select %p320, %s319, 95
      %s322 = smul.addr %s321, 8
      %s323 = scalar_lea.vmem %s5, %s322
      %s324 = smul.u32 %s23, 2
      %s325 = sadd.s32 %s324, %s24
      %s326 = smul.u32 24, %s325
      %s327 = smul.u32 %s23, 2
      %s328 = sadd.s32 %s327, %s24
      %p329 = scmp.lt.s32.totalorder %s328, 3
      %s330 = scalar_select %p329, %s328, 3
      %s331 = scalar_lea.vmem %s6, %s330
      %s332 = smul.u32 %s23, 2
      %s333 = sadd.s32 %s332, %s24
      %s334 = smul.u32 %s23, 2
      %s335 = sadd.s32 %s334, %s24
      %p336 = scmp.lt.s32.totalorder %s335, 3
      %s337 = scalar_select %p336, %s335, 3
      %s338 = scalar_lea.vmem %s7, %s337
      %s339 = smul.u32 %s23, 2
      %s340 = sadd.s32 %s339, %s24
      %s342 = smul.u32 %s24, 8
      %343 = vst [vmem:[#allocation2] sm:$0xf] 0
      %344 = vst [vmem:[#allocation2 + $0x4] sm:$0xf] 0
      %345 = vst [vmem:[#allocation2 + $0x8] sm:$0xf] 0
      %346 = vst [vmem:[#allocation2 + $0xc] sm:$0xf] 0
      %347 = vst [vmem:[#allocation2 + $0x10] sm:$0xf] 0
      %348 = vst [vmem:[#allocation2 + $0x14] sm:$0xf] 0
      %349 = vst [vmem:[#allocation2 + $0x18] sm:$0xf] 0
      %350 = vst [vmem:[#allocation2 + $0x1c] sm:$0xf] 0
      %351 = vst [vmem:[#allocation2 + $0x20] sm:$0xf] 0
      %352 = vst [vmem:[#allocation2 + $0x24] sm:$0xf] 0
      %353 = vst [vmem:[#allocation2 + $0x28] sm:$0xf] 0
      %354 = vst [vmem:[#allocation2 + $0x2c] sm:$0xf] 0
      %355 = vst [vmem:[#allocation2 + $0x30] sm:$0xf] 0
      %356 = vst [vmem:[#allocation2 + $0x34] sm:$0xf] 0
      %357 = vst [vmem:[#allocation2 + $0x38] sm:$0xf] 0
      %358 = vst [vmem:[#allocation2 + $0x3c] sm:$0xf] 0
      %359 = vst [vmem:[#allocation2 + $0x40] sm:$0xf] 0
      %360 = vst [vmem:[#allocation2 + $0x44] sm:$0xf] 0
      %361 = vst [vmem:[#allocation2 + $0x48] sm:$0xf] 0
      %362 = vst [vmem:[#allocation2 + $0x4c] sm:$0xf] 0
      %363 = vst [vmem:[#allocation2 + $0x50] sm:$0xf] 0
      %364 = vst [vmem:[#allocation2 + $0x54] sm:$0xf] 0
      %365 = vst [vmem:[#allocation2 + $0x58] sm:$0xf] 0
      %366 = vst [vmem:[#allocation2 + $0x5c] sm:$0xf] 0
      %367 = vst [vmem:[#allocation2 + $0x60] sm:$0xf] 0
      %368 = vst [vmem:[#allocation2 + $0x64] sm:$0xf] 0
      %369 = vst [vmem:[#allocation2 + $0x68] sm:$0xf] 0
      %370 = vst [vmem:[#allocation2 + $0x6c] sm:$0xf] 0
      %371 = vst [vmem:[#allocation2 + $0x70] sm:$0xf] 0
      %372 = vst [vmem:[#allocation2 + $0x74] sm:$0xf] 0
      %373 = vst [vmem:[#allocation2 + $0x78] sm:$0xf] 0
      %374 = vst [vmem:[#allocation2 + $0x7c] sm:$0xf] 0
      %375 = vst [vmem:[#allocation2 + $0x80] sm:$0xf] 0
      %376 = vst [vmem:[#allocation2 + $0x84] sm:$0xf] 0
      %377 = vst [vmem:[#allocation2 + $0x88] sm:$0xf] 0
      %378 = vst [vmem:[#allocation2 + $0x8c] sm:$0xf] 0
      %379 = vst [vmem:[#allocation2 + $0x90] sm:$0xf] 0
      %v380 = vld [vmem:[%s1] sm:$0x1]
      %v381 = vld [vmem:[%s2] sm:$0x1]
      %s382 = sadd.s32 %s342, 4294967294
      %p383 = scmp.ge.s32.totalorder %s382, 0
      %p384 = scmp.lt.s32.totalorder %s382, 16
      %p385 = pnand %p383, %p384
      %p386 = pneg %p385
      %p387 = scmp.gt.s32.totalorder %s382, 0
      %s388 = scalar_select %p387, %s382, 0
      %p389 = scmp.lt.s32.totalorder %s388, 15
      %s390 = scalar_select %p389, %s388, 15
      %s391 = smul.u32 %s390, 16
      %s392 = sshra.s32 %s391, 3
      %s393 = sand.u32 %s391, 7
      %s394 = smul.addr %s392, 4
      %s395 = scalar_lea.vmem %s315, %s394
      %v396 = vld [vmem:[%s395] sm:$0xf]
      %v397 = vld [vmem:[%s395 + $0x4] sm:$0xf]
      %v398 = vunpack.c.l.bf16 %v396
      %v399 = vunpack.c.l.bf16 %v397
      %v401 = vlaneseq
      %v402 = vshrl.u32 %v401, 7
      %v403 = vsub.s32 0, %v402
      %v404 = vrot.slane %v380, %v403
      %v406 = vmul.f32 %v398, %v404
      %v407 = vmul.f32 %v399, %v404
      %v409 = vlaneseq
      %v410 = vshrl.u32 %v409, 7
      %v411 = vsub.s32 0, %v410
      %v412 = vrot.slane %v381, %v411
      %v414 = vadd.f32 %v406, %v412
      %v415 = vadd.f32 %v407, %v412
      %v416 = vmax.f32 %v414, 0.0
      %v417 = vmax.f32 %v415, 0.0
      %s418 = scalar_select %p386, 1, 0
      %s419 = scvt.s32.f32 %s418
      %v420 = vstv %s419
      %v421 = vmul.f32 %v416, %v420
      %v422 = vmul.f32 %v417, %v420
      %v423 = vpack.c.bf16 %v422, %v421
      %v425 = vunpack.c.l.b16 %v423
      %v426 = vunpack.c.h.b16 %v423
      %v427 = vpack.c.b16 %v425, %v425
      %v428 = vpack.c.b16 %v426, %v426
      %vm429 = vcmask 1040384
      %vm430 = vcmask 1044484
      %vm431 = vmor %vm429, %vm430
      %v432 = vrot.slane %v427, 7
      %v433 = vrot.slane %v432, 4
      %v434 = vrot.slane %v428, 7
      %v435 = vsel %vm431, %v433, %v434
      %v436 = vrot.slane %v434, 4
      %440 = vst [vmem:[#allocation2] sm:$0xe] %v432
      %441 = vst [vmem:[#allocation2 + $0x4] sm:$0xf] %v435
      %442 = vst [vmem:[#allocation2 + $0x8] sm:$0x1] %v436
      %s443 = sadd.s32 %s342, 4294967295
      %p444 = scmp.ge.s32.totalorder %s443, 0
      %p445 = scmp.lt.s32.totalorder %s443, 16
      %p446 = pnand %p444, %p445
      %p447 = pneg %p446
      %p448 = scmp.gt.s32.totalorder %s443, 0
      %s449 = scalar_select %p448, %s443, 0
      %p450 = scmp.lt.s32.totalorder %s449, 15
      %s451 = scalar_select %p450, %s449, 15
      %s452 = smul.u32 %s451, 16
      %s453 = sshra.s32 %s452, 3
      %s454 = sand.u32 %s452, 7
      %s455 = smul.addr %s453, 4
      %s456 = scalar_lea.vmem %s315, %s455
      %v457 = vld [vmem:[%s456] sm:$0xf]
      %v458 = vld [vmem:[%s456 + $0x4] sm:$0xf]
      %v459 = vunpack.c.l.bf16 %v457
      %v460 = vunpack.c.l.bf16 %v458
      %v461 = vmul.f32 %v459, %v404
      %v462 = vmul.f32 %v460, %v404
      %v463 = vadd.f32 %v461, %v412
      %v464 = vadd.f32 %v462, %v412
      %v465 = vmax.f32 %v463, 0.0
      %v466 = vmax.f32 %v464, 0.0
      %s467 = scalar_select %p447, 1, 0
      %s468 = scvt.s32.f32 %s467
      %v469 = vstv %s468
      %v470 = vmul.f32 %v465, %v469
      %v471 = vmul.f32 %v466, %v469
      %v472 = vpack.c.bf16 %v471, %v470
      %v474 = vunpack.c.l.b16 %v472
      %v475 = vunpack.c.h.b16 %v472
      %v476 = vpack.c.b16 %v474, %v474
      %v477 = vpack.c.b16 %v475, %v475
      %v478 = vrot.slane %v476, 7
      %v479 = vrot.slane %v478, 4
      %v480 = vrot.slane %v477, 7
      %v481 = vsel %vm431, %v479, %v480
      %v482 = vrot.slane %v480, 4
      %486 = vst [vmem:[#allocation2 + $0xc] sm:$0xe] %v478
      %487 = vst [vmem:[#allocation2 + $0x10] sm:$0xf] %v481
      %488 = vst [vmem:[#allocation2 + $0x14] sm:$0x1] %v482
      %p489 = scmp.ge.s32.totalorder %s342, 0
      %p490 = scmp.lt.s32.totalorder %s342, 16
      %p491 = pnand %p489, %p490
      %p492 = pneg %p491
      %p493 = scmp.gt.s32.totalorder %s342, 0
      %s494 = scalar_select %p493, %s342, 0
      %p495 = scmp.lt.s32.totalorder %s494, 15
      %s496 = scalar_select %p495, %s494, 15
      %s497 = smul.u32 %s496, 16
      %s498 = sshra.s32 %s497, 3
      %s499 = sand.u32 %s497, 7
      %s500 = smul.addr %s498, 4
      %s501 = scalar_lea.vmem %s315, %s500
      %v502 = vld [vmem:[%s501] sm:$0xf]
      %v503 = vld [vmem:[%s501 + $0x4] sm:$0xf]
      %v504 = vunpack.c.l.bf16 %v502
      %v505 = vunpack.c.l.bf16 %v503
      %v506 = vmul.f32 %v504, %v404
      %v507 = vmul.f32 %v505, %v404
      %v508 = vadd.f32 %v506, %v412
      %v509 = vadd.f32 %v507, %v412
      %v510 = vmax.f32 %v508, 0.0
      %v511 = vmax.f32 %v509, 0.0
      %s512 = scalar_select %p492, 1, 0
      %s513 = scvt.s32.f32 %s512
      %v514 = vstv %s513
      %v515 = vmul.f32 %v510, %v514
      %v516 = vmul.f32 %v511, %v514
      %v517 = vpack.c.bf16 %v516, %v515
      %v519 = vunpack.c.l.b16 %v517
      %v520 = vunpack.c.h.b16 %v517
      %v521 = vpack.c.b16 %v519, %v519
      %v522 = vpack.c.b16 %v520, %v520
      %v523 = vrot.slane %v521, 7
      %v524 = vrot.slane %v523, 4
      %v525 = vrot.slane %v522, 7
      %v526 = vsel %vm431, %v524, %v525
      %v527 = vrot.slane %v525, 4
      %531 = vst [vmem:[#allocation2 + $0x18] sm:$0xe] %v523
      %532 = vst [vmem:[#allocation2 + $0x1c] sm:$0xf] %v526
      %533 = vst [vmem:[#allocation2 + $0x20] sm:$0x1] %v527
      %s534 = sadd.s32 %s342, 1
      %p535 = scmp.ge.s32.totalorder %s534, 0
      %p536 = scmp.lt.s32.totalorder %s534, 16
      %p537 = pnand %p535, %p536
      %p538 = pneg %p537
      %p539 = scmp.gt.s32.totalorder %s534, 0
      %s540 = scalar_select %p539, %s534, 0
      %p541 = scmp.lt.s32.totalorder %s540, 15
      %s542 = scalar_select %p541, %s540, 15
      %s543 = smul.u32 %s542, 16
      %s544 = sshra.s32 %s543, 3
      %s545 = sand.u32 %s543, 7
      %s546 = smul.addr %s544, 4
      %s547 = scalar_lea.vmem %s315, %s546
      %v548 = vld [vmem:[%s547] sm:$0xf]
      %v549 = vld [vmem:[%s547 + $0x4] sm:$0xf]
      %v550 = vunpack.c.l.bf16 %v548
      %v551 = vunpack.c.l.bf16 %v549
      %v552 = vmul.f32 %v550, %v404
      %v553 = vmul.f32 %v551, %v404
      %v554 = vadd.f32 %v552, %v412
      %v555 = vadd.f32 %v553, %v412
      %v556 = vmax.f32 %v554, 0.0
      %v557 = vmax.f32 %v555, 0.0
      %s558 = scalar_select %p538, 1, 0
      %s559 = scvt.s32.f32 %s558
      %v560 = vstv %s559
      %v561 = vmul.f32 %v556, %v560
      %v562 = vmul.f32 %v557, %v560
      %v563 = vpack.c.bf16 %v562, %v561
      %v565 = vunpack.c.l.b16 %v563
      %v566 = vunpack.c.h.b16 %v563
      %v567 = vpack.c.b16 %v565, %v565
      %v568 = vpack.c.b16 %v566, %v566
      %v569 = vrot.slane %v567, 7
      %v570 = vrot.slane %v569, 4
      %v571 = vrot.slane %v568, 7
      %v572 = vsel %vm431, %v570, %v571
      %v573 = vrot.slane %v571, 4
      %577 = vst [vmem:[#allocation2 + $0x24] sm:$0xe] %v569
      %578 = vst [vmem:[#allocation2 + $0x28] sm:$0xf] %v572
      %579 = vst [vmem:[#allocation2 + $0x2c] sm:$0x1] %v573
      %s580 = sadd.s32 %s342, 2
      %p581 = scmp.ge.s32.totalorder %s580, 0
      %p582 = scmp.lt.s32.totalorder %s580, 16
      %p583 = pnand %p581, %p582
      %p584 = pneg %p583
      %p585 = scmp.gt.s32.totalorder %s580, 0
      %s586 = scalar_select %p585, %s580, 0
      %p587 = scmp.lt.s32.totalorder %s586, 15
      %s588 = scalar_select %p587, %s586, 15
      %s589 = smul.u32 %s588, 16
      %s590 = sshra.s32 %s589, 3
      %s591 = sand.u32 %s589, 7
      %s592 = smul.addr %s590, 4
      %s593 = scalar_lea.vmem %s315, %s592
      %v594 = vld [vmem:[%s593] sm:$0xf]
      %v595 = vld [vmem:[%s593 + $0x4] sm:$0xf]
      %v596 = vunpack.c.l.bf16 %v594
      %v597 = vunpack.c.l.bf16 %v595
      %v598 = vmul.f32 %v596, %v404
      %v599 = vmul.f32 %v597, %v404
      %v600 = vadd.f32 %v598, %v412
      %v601 = vadd.f32 %v599, %v412
      %v602 = vmax.f32 %v600, 0.0
      %v603 = vmax.f32 %v601, 0.0
      %s604 = scalar_select %p584, 1, 0
      %s605 = scvt.s32.f32 %s604
      %v606 = vstv %s605
      %v607 = vmul.f32 %v602, %v606
      %v608 = vmul.f32 %v603, %v606
      %v609 = vpack.c.bf16 %v608, %v607
      %v611 = vunpack.c.l.b16 %v609
      %v612 = vunpack.c.h.b16 %v609
      %v613 = vpack.c.b16 %v611, %v611
      %v614 = vpack.c.b16 %v612, %v612
      %v615 = vrot.slane %v613, 7
      %v616 = vrot.slane %v615, 4
      %v617 = vrot.slane %v614, 7
      %v618 = vsel %vm431, %v616, %v617
      %v619 = vrot.slane %v617, 4
      %623 = vst [vmem:[#allocation2 + $0x30] sm:$0xe] %v615
      %624 = vst [vmem:[#allocation2 + $0x34] sm:$0xf] %v618
      %625 = vst [vmem:[#allocation2 + $0x38] sm:$0x1] %v619
      %s626 = sadd.s32 %s342, 3
      %p627 = scmp.ge.s32.totalorder %s626, 0
      %p628 = scmp.lt.s32.totalorder %s626, 16
      %p629 = pnand %p627, %p628
      %p630 = pneg %p629
      %p631 = scmp.gt.s32.totalorder %s626, 0
      %s632 = scalar_select %p631, %s626, 0
      %p633 = scmp.lt.s32.totalorder %s632, 15
      %s634 = scalar_select %p633, %s632, 15
      %s635 = smul.u32 %s634, 16
      %s636 = sshra.s32 %s635, 3
      %s637 = sand.u32 %s635, 7
      %s638 = smul.addr %s636, 4
      %s639 = scalar_lea.vmem %s315, %s638
      %v640 = vld [vmem:[%s639] sm:$0xf]
      %v641 = vld [vmem:[%s639 + $0x4] sm:$0xf]
      %v642 = vunpack.c.l.bf16 %v640
      %v643 = vunpack.c.l.bf16 %v641
      %v644 = vmul.f32 %v642, %v404
      %v645 = vmul.f32 %v643, %v404
      %v646 = vadd.f32 %v644, %v412
      %v647 = vadd.f32 %v645, %v412
      %v648 = vmax.f32 %v646, 0.0
      %v649 = vmax.f32 %v647, 0.0
      %s650 = scalar_select %p630, 1, 0
      %s651 = scvt.s32.f32 %s650
      %v652 = vstv %s651
      %v653 = vmul.f32 %v648, %v652
      %v654 = vmul.f32 %v649, %v652
      %v655 = vpack.c.bf16 %v654, %v653
      %v657 = vunpack.c.l.b16 %v655
      %v658 = vunpack.c.h.b16 %v655
      %v659 = vpack.c.b16 %v657, %v657
      %v660 = vpack.c.b16 %v658, %v658
      %v661 = vrot.slane %v659, 7
      %v662 = vrot.slane %v661, 4
      %v663 = vrot.slane %v660, 7
      %v664 = vsel %vm431, %v662, %v663
      %v665 = vrot.slane %v663, 4
      %669 = vst [vmem:[#allocation2 + $0x3c] sm:$0xe] %v661
      %670 = vst [vmem:[#allocation2 + $0x40] sm:$0xf] %v664
      %671 = vst [vmem:[#allocation2 + $0x44] sm:$0x1] %v665
      %s672 = sadd.s32 %s342, 4
      %p673 = scmp.ge.s32.totalorder %s672, 0
      %p674 = scmp.lt.s32.totalorder %s672, 16
      %p675 = pnand %p673, %p674
      %p676 = pneg %p675
      %p677 = scmp.gt.s32.totalorder %s672, 0
      %s678 = scalar_select %p677, %s672, 0
      %p679 = scmp.lt.s32.totalorder %s678, 15
      %s680 = scalar_select %p679, %s678, 15
      %s681 = smul.u32 %s680, 16
      %s682 = sshra.s32 %s681, 3
      %s683 = sand.u32 %s681, 7
      %s684 = smul.addr %s682, 4
      %s685 = scalar_lea.vmem %s315, %s684
      %v686 = vld [vmem:[%s685] sm:$0xf]
      %v687 = vld [vmem:[%s685 + $0x4] sm:$0xf]
      %v688 = vunpack.c.l.bf16 %v686
      %v689 = vunpack.c.l.bf16 %v687
      %v690 = vmul.f32 %v688, %v404
      %v691 = vmul.f32 %v689, %v404
      %v692 = vadd.f32 %v690, %v412
      %v693 = vadd.f32 %v691, %v412
      %v694 = vmax.f32 %v692, 0.0
      %v695 = vmax.f32 %v693, 0.0
      %s696 = scalar_select %p676, 1, 0
      %s697 = scvt.s32.f32 %s696
      %v698 = vstv %s697
      %v699 = vmul.f32 %v694, %v698
      %v700 = vmul.f32 %v695, %v698
      %v701 = vpack.c.bf16 %v700, %v699
      %v703 = vunpack.c.l.b16 %v701
      %v704 = vunpack.c.h.b16 %v701
      %v705 = vpack.c.b16 %v703, %v703
      %v706 = vpack.c.b16 %v704, %v704
      %v707 = vrot.slane %v705, 7
      %v708 = vrot.slane %v707, 4
      %v709 = vrot.slane %v706, 7
      %v710 = vsel %vm431, %v708, %v709
      %v711 = vrot.slane %v709, 4
      %715 = vst [vmem:[#allocation2 + $0x48] sm:$0xe] %v707
      %716 = vst [vmem:[#allocation2 + $0x4c] sm:$0xf] %v710
      %717 = vst [vmem:[#allocation2 + $0x50] sm:$0x1] %v711
      %s718 = sadd.s32 %s342, 5
      %p719 = scmp.ge.s32.totalorder %s718, 0
      %p720 = scmp.lt.s32.totalorder %s718, 16
      %p721 = pnand %p719, %p720
      %p722 = pneg %p721
      %p723 = scmp.gt.s32.totalorder %s718, 0
      %s724 = scalar_select %p723, %s718, 0
      %p725 = scmp.lt.s32.totalorder %s724, 15
      %s726 = scalar_select %p725, %s724, 15
      %s727 = smul.u32 %s726, 16
      %s728 = sshra.s32 %s727, 3
      %s729 = sand.u32 %s727, 7
      %s730 = smul.addr %s728, 4
      %s731 = scalar_lea.vmem %s315, %s730
      %v732 = vld [vmem:[%s731] sm:$0xf]
      %v733 = vld [vmem:[%s731 + $0x4] sm:$0xf]
      %v734 = vunpack.c.l.bf16 %v732
      %v735 = vunpack.c.l.bf16 %v733
      %v736 = vmul.f32 %v734, %v404
      %v737 = vmul.f32 %v735, %v404
      %v738 = vadd.f32 %v736, %v412
      %v739 = vadd.f32 %v737, %v412
      %v740 = vmax.f32 %v738, 0.0
      %v741 = vmax.f32 %v739, 0.0
      %s742 = scalar_select %p722, 1, 0
      %s743 = scvt.s32.f32 %s742
      %v744 = vstv %s743
      %v745 = vmul.f32 %v740, %v744
      %v746 = vmul.f32 %v741, %v744
      %v747 = vpack.c.bf16 %v746, %v745
      %v749 = vunpack.c.l.b16 %v747
      %v750 = vunpack.c.h.b16 %v747
      %v751 = vpack.c.b16 %v749, %v749
      %v752 = vpack.c.b16 %v750, %v750
      %v753 = vrot.slane %v751, 7
      %v754 = vrot.slane %v753, 4
      %v755 = vrot.slane %v752, 7
      %v756 = vsel %vm431, %v754, %v755
      %v757 = vrot.slane %v755, 4
      %761 = vst [vmem:[#allocation2 + $0x54] sm:$0xe] %v753
      %762 = vst [vmem:[#allocation2 + $0x58] sm:$0xf] %v756
      %763 = vst [vmem:[#allocation2 + $0x5c] sm:$0x1] %v757
      %s764 = sadd.s32 %s342, 6
      %p765 = scmp.ge.s32.totalorder %s764, 0
      %p766 = scmp.lt.s32.totalorder %s764, 16
      %p767 = pnand %p765, %p766
      %p768 = pneg %p767
      %p769 = scmp.gt.s32.totalorder %s764, 0
      %s770 = scalar_select %p769, %s764, 0
      %p771 = scmp.lt.s32.totalorder %s770, 15
      %s772 = scalar_select %p771, %s770, 15
      %s773 = smul.u32 %s772, 16
      %s774 = sshra.s32 %s773, 3
      %s775 = sand.u32 %s773, 7
      %s776 = smul.addr %s774, 4
      %s777 = scalar_lea.vmem %s315, %s776
      %v778 = vld [vmem:[%s777] sm:$0xf]
      %v779 = vld [vmem:[%s777 + $0x4] sm:$0xf]
      %v780 = vunpack.c.l.bf16 %v778
      %v781 = vunpack.c.l.bf16 %v779
      %v782 = vmul.f32 %v780, %v404
      %v783 = vmul.f32 %v781, %v404
      %v784 = vadd.f32 %v782, %v412
      %v785 = vadd.f32 %v783, %v412
      %v786 = vmax.f32 %v784, 0.0
      %v787 = vmax.f32 %v785, 0.0
      %s788 = scalar_select %p768, 1, 0
      %s789 = scvt.s32.f32 %s788
      %v790 = vstv %s789
      %v791 = vmul.f32 %v786, %v790
      %v792 = vmul.f32 %v787, %v790
      %v793 = vpack.c.bf16 %v792, %v791
      %v795 = vunpack.c.l.b16 %v793
      %v796 = vunpack.c.h.b16 %v793
      %v797 = vpack.c.b16 %v795, %v795
      %v798 = vpack.c.b16 %v796, %v796
      %v799 = vrot.slane %v797, 7
      %v800 = vrot.slane %v799, 4
      %v801 = vrot.slane %v798, 7
      %v802 = vsel %vm431, %v800, %v801
      %v803 = vrot.slane %v801, 4
      %807 = vst [vmem:[#allocation2 + $0x60] sm:$0xe] %v799
      %808 = vst [vmem:[#allocation2 + $0x64] sm:$0xf] %v802
      %809 = vst [vmem:[#allocation2 + $0x68] sm:$0x1] %v803
      %s810 = sadd.s32 %s342, 7
      %p811 = scmp.ge.s32.totalorder %s810, 0
      %p812 = scmp.lt.s32.totalorder %s810, 16
      %p813 = pnand %p811, %p812
      %p814 = pneg %p813
      %p815 = scmp.gt.s32.totalorder %s810, 0
      %s816 = scalar_select %p815, %s810, 0
      %p817 = scmp.lt.s32.totalorder %s816, 15
      %s818 = scalar_select %p817, %s816, 15
      %s819 = smul.u32 %s818, 16
      %s820 = sshra.s32 %s819, 3
      %s821 = sand.u32 %s819, 7
      %s822 = smul.addr %s820, 4
      %s823 = scalar_lea.vmem %s315, %s822
      %v824 = vld [vmem:[%s823] sm:$0xf]
      %v825 = vld [vmem:[%s823 + $0x4] sm:$0xf]
      %v826 = vunpack.c.l.bf16 %v824
      %v827 = vunpack.c.l.bf16 %v825
      %v828 = vmul.f32 %v826, %v404
      %v829 = vmul.f32 %v827, %v404
      %v830 = vadd.f32 %v828, %v412
      %v831 = vadd.f32 %v829, %v412
      %v832 = vmax.f32 %v830, 0.0
      %v833 = vmax.f32 %v831, 0.0
      %s834 = scalar_select %p814, 1, 0
      %s835 = scvt.s32.f32 %s834
      %v836 = vstv %s835
      %v837 = vmul.f32 %v832, %v836
      %v838 = vmul.f32 %v833, %v836
      %v839 = vpack.c.bf16 %v838, %v837
      %v841 = vunpack.c.l.b16 %v839
      %v842 = vunpack.c.h.b16 %v839
      %v843 = vpack.c.b16 %v841, %v841
      %v844 = vpack.c.b16 %v842, %v842
      %v845 = vrot.slane %v843, 7
      %v846 = vrot.slane %v845, 4
      %v847 = vrot.slane %v844, 7
      %v848 = vsel %vm431, %v846, %v847
      %v849 = vrot.slane %v847, 4
      %853 = vst [vmem:[#allocation2 + $0x6c] sm:$0xe] %v845
      %854 = vst [vmem:[#allocation2 + $0x70] sm:$0xf] %v848
      %855 = vst [vmem:[#allocation2 + $0x74] sm:$0x1] %v849
      %s856 = sadd.s32 %s342, 8
      %p857 = scmp.ge.s32.totalorder %s856, 0
      %p858 = scmp.lt.s32.totalorder %s856, 16
      %p859 = pnand %p857, %p858
      %p860 = pneg %p859
      %p861 = scmp.gt.s32.totalorder %s856, 0
      %s862 = scalar_select %p861, %s856, 0
      %p863 = scmp.lt.s32.totalorder %s862, 15
      %s864 = scalar_select %p863, %s862, 15
      %s865 = smul.u32 %s864, 16
      %s866 = sshra.s32 %s865, 3
      %s867 = sand.u32 %s865, 7
      %s868 = smul.addr %s866, 4
      %s869 = scalar_lea.vmem %s315, %s868
      %v870 = vld [vmem:[%s869] sm:$0xf]
      %v871 = vld [vmem:[%s869 + $0x4] sm:$0xf]
      %v872 = vunpack.c.l.bf16 %v870
      %v873 = vunpack.c.l.bf16 %v871
      %v874 = vmul.f32 %v872, %v404
      %v875 = vmul.f32 %v873, %v404
      %v876 = vadd.f32 %v874, %v412
      %v877 = vadd.f32 %v875, %v412
      %v878 = vmax.f32 %v876, 0.0
      %v879 = vmax.f32 %v877, 0.0
      %s880 = scalar_select %p860, 1, 0
      %s881 = scvt.s32.f32 %s880
      %v882 = vstv %s881
      %v883 = vmul.f32 %v878, %v882
      %v884 = vmul.f32 %v879, %v882
      %v885 = vpack.c.bf16 %v884, %v883
      %v887 = vunpack.c.l.b16 %v885
      %v888 = vunpack.c.h.b16 %v885
      %v889 = vpack.c.b16 %v887, %v887
      %v890 = vpack.c.b16 %v888, %v888
      %v891 = vrot.slane %v889, 7
      %v892 = vrot.slane %v891, 4
      %v893 = vrot.slane %v890, 7
      %v894 = vsel %vm431, %v892, %v893
      %v895 = vrot.slane %v893, 4
      %899 = vst [vmem:[#allocation2 + $0x78] sm:$0xe] %v891
      %900 = vst [vmem:[#allocation2 + $0x7c] sm:$0xf] %v894
      %901 = vst [vmem:[#allocation2 + $0x80] sm:$0x1] %v895
      %s902 = sadd.s32 %s342, 9
      %p903 = scmp.ge.s32.totalorder %s902, 0
      %p904 = scmp.lt.s32.totalorder %s902, 16
      %p905 = pnand %p903, %p904
      %p906 = pneg %p905
      %p907 = scmp.gt.s32.totalorder %s902, 0
      %s908 = scalar_select %p907, %s902, 0
      %p909 = scmp.lt.s32.totalorder %s908, 15
      %s910 = scalar_select %p909, %s908, 15
      %s911 = smul.u32 %s910, 16
      %s912 = sshra.s32 %s911, 3
      %s913 = sand.u32 %s911, 7
      %s914 = smul.addr %s912, 4
      %s915 = scalar_lea.vmem %s315, %s914
      %v916 = vld [vmem:[%s915] sm:$0xf]
      %v917 = vld [vmem:[%s915 + $0x4] sm:$0xf]
      %v918 = vunpack.c.l.bf16 %v916
      %v919 = vunpack.c.l.bf16 %v917
      %v920 = vmul.f32 %v918, %v404
      %v921 = vmul.f32 %v919, %v404
      %v922 = vadd.f32 %v920, %v412
      %v923 = vadd.f32 %v921, %v412
      %v924 = vmax.f32 %v922, 0.0
      %v925 = vmax.f32 %v923, 0.0
      %s926 = scalar_select %p906, 1, 0
      %s927 = scvt.s32.f32 %s926
      %v928 = vstv %s927
      %v929 = vmul.f32 %v924, %v928
      %v930 = vmul.f32 %v925, %v928
      %v931 = vpack.c.bf16 %v930, %v929
      %v933 = vunpack.c.l.b16 %v931
      %v934 = vunpack.c.h.b16 %v931
      %v935 = vpack.c.b16 %v933, %v933
      %v936 = vpack.c.b16 %v934, %v934
      %v937 = vrot.slane %v935, 7
      %v938 = vrot.slane %v937, 4
      %v939 = vrot.slane %v936, 7
      %v940 = vsel %vm431, %v938, %v939
      %v941 = vrot.slane %v939, 4
      %945 = vst [vmem:[#allocation2 + $0x84] sm:$0xe] %v937
      %946 = vst [vmem:[#allocation2 + $0x88] sm:$0xf] %v940
      %947 = vst [vmem:[#allocation2 + $0x8c] sm:$0x1] %v941
      %v948 = vld [vmem:[#allocation2] sm:$0xf]
      %v949 = vld [vmem:[#allocation2 + $0x4] sm:$0xf]
      %v950 = vld [vmem:[#allocation2 + $0x8] sm:$0xf]
      %v951 = vld [vmem:[#allocation2 + $0xc] sm:$0xf]
      %v952 = vld [vmem:[#allocation2 + $0x10] sm:$0xf]
      %v953 = vld [vmem:[#allocation2 + $0x14] sm:$0xf]
      %v954 = vld [vmem:[#allocation2 + $0x18] sm:$0xf]
      %v955 = vld [vmem:[#allocation2 + $0x1c] sm:$0xf]
      %v956 = vld [vmem:[#allocation2 + $0x20] sm:$0xf]
      %v957 = vld [vmem:[#allocation2 + $0x24] sm:$0xf]
      %v958 = vld [vmem:[#allocation2 + $0x28] sm:$0xf]
      %v959 = vld [vmem:[#allocation2 + $0x2c] sm:$0xf]
      %v960 = vld [vmem:[#allocation2 + $0x30] sm:$0xf]
      %v961 = vld [vmem:[#allocation2 + $0x34] sm:$0xf]
      %v962 = vld [vmem:[#allocation2 + $0x38] sm:$0xf]
      %v963 = vld [vmem:[#allocation2 + $0x3c] sm:$0xf]
      %v964 = vld [vmem:[#allocation2 + $0x40] sm:$0xf]
      %v965 = vld [vmem:[#allocation2 + $0x44] sm:$0xf]
      %v966 = vld [vmem:[#allocation2 + $0x48] sm:$0xf]
      %v967 = vld [vmem:[#allocation2 + $0x4c] sm:$0xf]
      %v968 = vld [vmem:[#allocation2 + $0x50] sm:$0xf]
      %v969 = vld [vmem:[#allocation2 + $0x54] sm:$0xf]
      %v970 = vld [vmem:[#allocation2 + $0x58] sm:$0xf]
      %v971 = vld [vmem:[#allocation2 + $0x5c] sm:$0xf]
      %v972 = vld [vmem:[%s4] sm:$0xf]
      %v973 = vld [vmem:[%s4 + $0x4] sm:$0xf]
      %v974 = vld [vmem:[%s4 + $0x8] sm:$0xf]
      %v975 = vld [vmem:[%s4 + $0xc] sm:$0xf]
      %v976 = vld [vmem:[%s4 + $0x10] sm:$0xf]
      %v977 = vld [vmem:[%s4 + $0x14] sm:$0xf]
      %v978 = vld [vmem:[%s4 + $0x18] sm:$0xf]
      %v979 = vld [vmem:[%s4 + $0x1c] sm:$0xf]
      %v980 = vld [vmem:[%s4 + $0x20] sm:$0xf]
      %v981 = vld [vmem:[%s4 + $0x24] sm:$0xf]
      %v982 = vld [vmem:[%s4 + $0x28] sm:$0xf]
      %v983 = vld [vmem:[%s4 + $0x2c] sm:$0xf]
      %v984 = vld [vmem:[%s4 + $0x30] sm:$0xf]
      %v985 = vld [vmem:[%s4 + $0x34] sm:$0xf]
      %v986 = vld [vmem:[%s4 + $0x38] sm:$0xf]
      %v987 = vld [vmem:[%s4 + $0x3c] sm:$0xf]
      %v988 = vld [vmem:[#allocation2] sm:$0xe]
      %v989 = vld [vmem:[#allocation2 + $0x60] sm:$0x1]
      %s990 = scalar_lea.vmem %s4, 64
      %v991 = vld [vmem:[%s990] sm:$0xf]
      %v992 = vld [vmem:[%s990 + $0x4] sm:$0xf]
      %v993 = vld [vmem:[%s990 + $0x8] sm:$0xf]
      %v994 = vld [vmem:[%s990 + $0xc] sm:$0xf]
      %v995 = vld [vmem:[%s990 + $0x10] sm:$0xf]
      %v996 = vld [vmem:[%s990 + $0x14] sm:$0xf]
      %v997 = vld [vmem:[%s990 + $0x18] sm:$0xf]
      %v998 = vld [vmem:[%s990 + $0x1c] sm:$0xf]
      %v999 = vld [vmem:[%s990 + $0x20] sm:$0xf]
      %v1000 = vld [vmem:[%s990 + $0x24] sm:$0xf]
      %v1001 = vld [vmem:[%s990 + $0x28] sm:$0xf]
      %v1002 = vld [vmem:[%s990 + $0x2c] sm:$0xf]
      %v1003 = vld [vmem:[%s990 + $0x30] sm:$0xf]
      %v1004 = vld [vmem:[%s990 + $0x34] sm:$0xf]
      %v1005 = vld [vmem:[%s990 + $0x38] sm:$0xf]
      %v1006 = vld [vmem:[%s990 + $0x3c] sm:$0xf]
      %v1032 = vunpack.c.l.b16 %v988
      %v1033 = vunpack.c.l.b16 %v949
      %v1034 = vunpack.c.l.b16 %v950
      %v1035 = vunpack.c.l.b16 %v951
      %v1036 = vunpack.c.l.b16 %v952
      %v1037 = vunpack.c.l.b16 %v953
      %v1038 = vunpack.c.l.b16 %v954
      %v1039 = vunpack.c.l.b16 %v955
      %v1040 = vunpack.c.l.b16 %v956
      %v1041 = vunpack.c.l.b16 %v957
      %v1042 = vunpack.c.l.b16 %v958
      %v1043 = vunpack.c.l.b16 %v959
      %v1044 = vunpack.c.l.b16 %v960
      %v1045 = vunpack.c.l.b16 %v961
      %v1046 = vunpack.c.l.b16 %v962
      %v1047 = vunpack.c.l.b16 %v963
      %v1048 = vunpack.c.l.b16 %v964
      %v1049 = vunpack.c.l.b16 %v965
      %v1050 = vunpack.c.l.b16 %v966
      %v1051 = vunpack.c.l.b16 %v967
      %v1052 = vunpack.c.l.b16 %v968
      %v1053 = vunpack.c.l.b16 %v969
      %v1054 = vunpack.c.l.b16 %v970
      %v1055 = vunpack.c.l.b16 %v971
      %v1056 = vunpack.c.l.b16 %v989
      %v1057 = vpack.c.b16 %v1033, %v1032
      %v1058 = vpack.c.b16 %v1035, %v1034
      %v1059 = vpack.c.b16 %v1037, %v1036
      %v1060 = vpack.c.b16 %v1039, %v1038
      %v1061 = vpack.c.b16 %v1041, %v1040
      %v1062 = vpack.c.b16 %v1043, %v1042
      %v1063 = vpack.c.b16 %v1045, %v1044
      %v1064 = vpack.c.b16 %v1047, %v1046
      %v1065 = vpack.c.b16 %v1049, %v1048
      %v1066 = vpack.c.b16 %v1051, %v1050
      %v1067 = vpack.c.b16 %v1053, %v1052
      %v1068 = vpack.c.b16 %v1055, %v1054
      %v1069 = vpack.c.b16 %v1056, %v1056
      %vm1070 = vcmask 1046528
      %v1071 = vrot.slane %v1057, 1
      %v1072 = vrot.slane %v1058, 1
      %v1073 = vsel %vm1070, %v1071, %v1072
      %v1074 = vrot.slane %v1059, 1
      %v1075 = vsel %vm1070, %v1072, %v1074
      %v1076 = vrot.slane %v1060, 1
      %v1077 = vsel %vm1070, %v1074, %v1076
      %v1078 = vrot.slane %v1061, 1
      %v1079 = vsel %vm1070, %v1076, %v1078
      %v1080 = vrot.slane %v1062, 1
      %v1081 = vsel %vm1070, %v1078, %v1080
      %v1082 = vrot.slane %v1063, 1
      %v1083 = vsel %vm1070, %v1080, %v1082
      %v1084 = vrot.slane %v1064, 1
      %v1085 = vsel %vm1070, %v1082, %v1084
      %v1086 = vrot.slane %v1065, 1
      %v1087 = vsel %vm1070, %v1084, %v1086
      %v1088 = vrot.slane %v1066, 1
      %v1089 = vsel %vm1070, %v1086, %v1088
      %v1090 = vrot.slane %v1067, 1
      %v1091 = vsel %vm1070, %v1088, %v1090
      %v1092 = vrot.slane %v1068, 1
      %v1093 = vsel %vm1070, %v1090, %v1092
      %v1094 = vrot.slane %v1069, 1
      %v1095 = vsel %vm1070, %v1092, %v1094
      %v1124 = vunpack.c.l.b16 %v991
      %v1125 = vunpack.c.l.b16 %v992
      %v1126 = vunpack.c.l.b16 %v993
      %v1127 = vunpack.c.l.b16 %v994
      %v1128 = vunpack.c.l.b16 %v995
      %v1129 = vunpack.c.l.b16 %v996
      %v1130 = vunpack.c.l.b16 %v997
      %v1131 = vunpack.c.l.b16 %v998
      %v1132 = vunpack.c.l.b16 %v999
      %v1133 = vunpack.c.l.b16 %v1000
      %v1134 = vunpack.c.l.b16 %v1001
      %v1135 = vunpack.c.l.b16 %v1002
      %v1136 = vunpack.c.l.b16 %v1003
      %v1137 = vunpack.c.l.b16 %v1004
      %v1138 = vunpack.c.l.b16 %v1005
      %v1139 = vunpack.c.l.b16 %v1006
      %v1140 = vpack.c.b16 %v1125, %v1124
      %v1141 = vpack.c.b16 %v1127, %v1126
      %v1142 = vpack.c.b16 %v1129, %v1128
      %v1143 = vpack.c.b16 %v1131, %v1130
      %v1144 = vpack.c.b16 %v1133, %v1132
      %v1145 = vpack.c.b16 %v1135, %v1134
      %v1146 = vpack.c.b16 %v1137, %v1136
      %v1147 = vpack.c.b16 %v1139, %v1138
      %1156 = vmatprep.subr.bf16.mxu0 0
      %1157 = vmatpush1.bf16.msra.mxu0 %v1140
      %1158 = vmatprep.subr.bf16.mxu0 0
      %1159 = vmatpush1.bf16.msra.mxu0 %v1141
      %1160 = vmatprep.subr.bf16.mxu0 0
      %1161 = vmatpush1.bf16.msra.mxu0 %v1142
      %1162 = vmatprep.subr.bf16.mxu0 0
      %1163 = vmatpush1.bf16.msra.mxu0 %v1143
      %1164 = vmatprep.subr.bf16.mxu0 0
      %1165 = vmatpush1.bf16.msra.mxu0 %v1144
      %1166 = vmatprep.subr.bf16.mxu0 0
      %1167 = vmatpush1.bf16.msra.mxu0 %v1145
      %1168 = vmatprep.subr.bf16.mxu0 0
      %1169 = vmatpush1.bf16.msra.mxu0 %v1146
      %1170 = vmatprep.subr.bf16.mxu0 0
      %1171 = vmatpush1.bf16.msra.mxu0 %v1147
      %1172 = vmatprep.subr.bf16.mxu0 0
      %1173 = vmatpush1.bf16.msra.mxu0 0
      %1174 = vmatprep.subr.bf16.mxu0 0
      %1175 = vmatpush1.bf16.msra.mxu0 0
      %1176 = vmatprep.subr.bf16.mxu0 0
      %1177 = vmatpush1.bf16.msra.mxu0 0
      %1178 = vmatprep.subr.bf16.mxu0 0
      %1179 = vmatpush1.bf16.msra.mxu0 0
      %1180 = vmatprep.subr.bf16.mxu0 0
      %1181 = vmatpush1.bf16.msra.mxu0 0
      %1182 = vmatprep.subr.bf16.mxu0 0
      %1183 = vmatpush1.bf16.msra.mxu0 0
      %1184 = vmatprep.subr.bf16.mxu0 0
      %1185 = vmatpush1.bf16.msra.mxu0 0
      %1186 = vmatprep.subr.bf16.mxu0 0
      %1187 = vmatpush1.bf16.msra.mxu0 0
      %1188 = vmatprep.mubr.bf16.mxu0 0
      %1189 = vmatmul.mubr.bf16.gmra.mrb[0].mxu0 %v1073
      %v1190 = vpop.f32.mrb[0].mxu0
      %v1191 = vadd.f32 0.0, %v1190
      %v1192 = vpop.f32.mrb[0].mxu0
      %v1193 = vpop.f32.mrb[0].mxu0
      %v1194 = vadd.f32 0.0, %v1193
      %v1195 = vpop.f32.mrb[0].mxu0
      %1196 = vmatprep.mubr.bf16.mxu0 0
      %1197 = vmatmul.mubr.bf16.gmra.mrb[0].mxu0 %v1075
      %v1198 = vpop.f32.mrb[0].mxu0
      %v1199 = vadd.f32 0.0, %v1198
      %v1200 = vpop.f32.mrb[0].mxu0
      %v1201 = vpop.f32.mrb[0].mxu0
      %v1202 = vadd.f32 0.0, %v1201
      %v1203 = vpop.f32.mrb[0].mxu0
      %1204 = vmatprep.mubr.bf16.mxu0 0
      %1205 = vmatmul.mubr.bf16.gmra.mrb[0].mxu0 %v1077
      %v1206 = vpop.f32.mrb[0].mxu0
      %v1207 = vadd.f32 0.0, %v1206
      %v1208 = vpop.f32.mrb[0].mxu0
      %v1209 = vpop.f32.mrb[0].mxu0
      %v1210 = vadd.f32 0.0, %v1209
      %v1211 = vpop.f32.mrb[0].mxu0
      %1212 = vmatprep.mubr.bf16.mxu0 0
      %1213 = vmatmul.mubr.bf16.gmra.mrb[0].mxu0 %v1079
      %v1214 = vpop.f32.mrb[0].mxu0
      %v1215 = vadd.f32 0.0, %v1214
      %v1216 = vpop.f32.mrb[0].mxu0
      %v1217 = vpop.f32.mrb[0].mxu0
      %v1218 = vadd.f32 0.0, %v1217
      %v1219 = vpop.f32.mrb[0].mxu0
      %1220 = vmatprep.mubr.bf16.mxu0 0
      %1221 = vmatmul.mubr.bf16.gmra.mrb[0].mxu0 %v1081
      %v1222 = vpop.f32.mrb[0].mxu0
      %v1223 = vadd.f32 0.0, %v1222
      %v1224 = vpop.f32.mrb[0].mxu0
      %v1225 = vpop.f32.mrb[0].mxu0
      %v1226 = vadd.f32 0.0, %v1225
      %v1227 = vpop.f32.mrb[0].mxu0
      %1228 = vmatprep.mubr.bf16.mxu0 0
      %1229 = vmatmul.mubr.bf16.gmra.mrb[0].mxu0 %v1083
      %v1230 = vpop.f32.mrb[0].mxu0
      %v1231 = vadd.f32 0.0, %v1230
      %v1232 = vpop.f32.mrb[0].mxu0
      %v1233 = vpop.f32.mrb[0].mxu0
      %v1234 = vadd.f32 0.0, %v1233
      %v1235 = vpop.f32.mrb[0].mxu0
      %1236 = vmatprep.mubr.bf16.mxu0 0
      %1237 = vmatmul.mubr.bf16.gmra.mrb[0].mxu0 %v1085
      %v1238 = vpop.f32.mrb[0].mxu0
      %v1239 = vadd.f32 0.0, %v1238
      %v1240 = vpop.f32.mrb[0].mxu0
      %v1241 = vpop.f32.mrb[0].mxu0
      %v1242 = vadd.f32 0.0, %v1241
      %v1243 = vpop.f32.mrb[0].mxu0
      %1244 = vmatprep.mubr.bf16.mxu0 0
      %1245 = vmatmul.mubr.bf16.gmra.mrb[0].mxu0 %v1087
      %v1246 = vpop.f32.mrb[0].mxu0
      %v1247 = vadd.f32 0.0, %v1246
      %v1248 = vpop.f32.mrb[0].mxu0
      %v1249 = vpop.f32.mrb[0].mxu0
      %v1250 = vadd.f32 0.0, %v1249
      %v1251 = vpop.f32.mrb[0].mxu0
      %1252 = vmatprep.mubr.bf16.mxu0 0
      %1253 = vmatmul.mubr.bf16.gmra.mrb[0].mxu0 %v1089
      %v1254 = vpop.f32.mrb[0].mxu0
      %v1255 = vadd.f32 0.0, %v1254
      %v1256 = vpop.f32.mrb[0].mxu0
      %v1257 = vpop.f32.mrb[0].mxu0
      %v1258 = vadd.f32 0.0, %v1257
      %v1259 = vpop.f32.mrb[0].mxu0
      %1260 = vmatprep.mubr.bf16.mxu0 0
      %1261 = vmatmul.mubr.bf16.gmra.mrb[0].mxu0 %v1091
      %v1262 = vpop.f32.mrb[0].mxu0
      %v1263 = vadd.f32 0.0, %v1262
      %v1264 = vpop.f32.mrb[0].mxu0
      %v1265 = vpop.f32.mrb[0].mxu0
      %v1266 = vadd.f32 0.0, %v1265
      %v1267 = vpop.f32.mrb[0].mxu0
      %1268 = vmatprep.mubr.bf16.mxu0 0
      %1269 = vmatmul.mubr.bf16.gmra.mrb[0].mxu0 %v1093
      %v1270 = vpop.f32.mrb[0].mxu0
      %v1271 = vadd.f32 0.0, %v1270
      %v1272 = vpop.f32.mrb[0].mxu0
      %v1273 = vpop.f32.mrb[0].mxu0
      %v1274 = vadd.f32 0.0, %v1273
      %v1275 = vpop.f32.mrb[0].mxu0
      %1276 = vmatprep.mubr.bf16.mxu0 0
      %1277 = vmatmul.mubr.bf16.gmra.mrb[0].mxu0 %v1095
      %v1278 = vpop.f32.mrb[0].mxu0
      %v1279 = vadd.f32 0.0, %v1278
      %v1280 = vpop.f32.mrb[0].mxu0
      %v1281 = vpop.f32.mrb[0].mxu0
      %v1282 = vadd.f32 0.0, %v1281
      %v1283 = vpop.f32.mrb[0].mxu0
      %1284 = vdwg.mxu0
      %v1286 = vunpack.c.l.b16 %v948
      %v1287 = vpack.c.b16 %v1033, %v1286
      %v1316 = vunpack.c.l.b16 %v972
      %v1317 = vunpack.c.l.b16 %v973
      %v1318 = vunpack.c.l.b16 %v974
      %v1319 = vunpack.c.l.b16 %v975
      %v1320 = vunpack.c.l.b16 %v976
      %v1321 = vunpack.c.l.b16 %v977
      %v1322 = vunpack.c.l.b16 %v978
      %v1323 = vunpack.c.l.b16 %v979
      %v1324 = vunpack.c.l.b16 %v980
      %v1325 = vunpack.c.l.b16 %v981
      %v1326 = vunpack.c.l.b16 %v982
      %v1327 = vunpack.c.l.b16 %v983
      %v1328 = vunpack.c.l.b16 %v984
      %v1329 = vunpack.c.l.b16 %v985
      %v1330 = vunpack.c.l.b16 %v986
      %v1331 = vunpack.c.l.b16 %v987
      %v1332 = vpack.c.b16 %v1317, %v1316
      %v1333 = vpack.c.b16 %v1319, %v1318
      %v1334 = vpack.c.b16 %v1321, %v1320
      %v1335 = vpack.c.b16 %v1323, %v1322
      %v1336 = vpack.c.b16 %v1325, %v1324
      %v1337 = vpack.c.b16 %v1327, %v1326
      %v1338 = vpack.c.b16 %v1329, %v1328
      %v1339 = vpack.c.b16 %v1331, %v1330
      %1348 = vmatprep.subr.bf16.mxu0 0
      %1349 = vmatpush1.bf16.msra.mxu0 %v1332
      %1350 = vmatprep.subr.bf16.mxu0 0
      %1351 = vmatpush1.bf16.msra.mxu0 %v1333
      %1352 = vmatprep.subr.bf16.mxu0 0
      %1353 = vmatpush1.bf16.msra.mxu0 %v1334
      %1354 = vmatprep.subr.bf16.mxu0 0
      %1355 = vmatpush1.bf16.msra.mxu0 %v1335
      %1356 = vmatprep.subr.bf16.mxu0 0
      %1357 = vmatpush1.bf16.msra.mxu0 %v1336
      %1358 = vmatprep.subr.bf16.mxu0 0
      %1359 = vmatpush1.bf16.msra.mxu0 %v1337
      %1360 = vmatprep.subr.bf16.mxu0 0
      %1361 = vmatpush1.bf16.msra.mxu0 %v1338
      %1362 = vmatprep.subr.bf16.mxu0 0
      %1363 = vmatpush1.bf16.msra.mxu0 %v1339
      %1364 = vmatprep.subr.bf16.mxu0 0
      %1365 = vmatpush1.bf16.msra.mxu0 0
      %1366 = vmatprep.subr.bf16.mxu0 0
      %1367 = vmatpush1.bf16.msra.mxu0 0
      %1368 = vmatprep.subr.bf16.mxu0 0
      %1369 = vmatpush1.bf16.msra.mxu0 0
      %1370 = vmatprep.subr.bf16.mxu0 0
      %1371 = vmatpush1.bf16.msra.mxu0 0
      %1372 = vmatprep.subr.bf16.mxu0 0
      %1373 = vmatpush1.bf16.msra.mxu0 0
      %1374 = vmatprep.subr.bf16.mxu0 0
      %1375 = vmatpush1.bf16.msra.mxu0 0
      %1376 = vmatprep.subr.bf16.mxu0 0
      %1377 = vmatpush1.bf16.msra.mxu0 0
      %1378 = vmatprep.subr.bf16.mxu0 0
      %1379 = vmatpush1.bf16.msra.mxu0 0
      %1380 = vmatprep.mubr.bf16.mxu0 0
      %1381 = vmatmul.mubr.bf16.gmra.mrb[0].mxu0 %v1287
      %v1382 = vpop.f32.mrb[0].mxu0
      %v1383 = vadd.f32 %v1191, %v1382
      %v1384 = vpop.f32.mrb[0].mxu0
      %v1385 = vpop.f32.mrb[0].mxu0
      %v1386 = vadd.f32 %v1194, %v1385
      %v1387 = vpop.f32.mrb[0].mxu0
      %1388 = vmatprep.mubr.bf16.mxu0 0
      %1389 = vmatmul.mubr.bf16.gmra.mrb[0].mxu0 %v1058
      %v1390 = vpop.f32.mrb[0].mxu0
      %v1391 = vadd.f32 %v1199, %v1390
      %v1392 = vpop.f32.mrb[0].mxu0
      %v1393 = vpop.f32.mrb[0].mxu0
      %v1394 = vadd.f32 %v1202, %v1393
      %v1395 = vpop.f32.mrb[0].mxu0
      %1396 = vmatprep.mubr.bf16.mxu0 0
      %1397 = vmatmul.mubr.bf16.gmra.mrb[0].mxu0 %v1059
      %v1398 = vpop.f32.mrb[0].mxu0
      %v1399 = vadd.f32 %v1207, %v1398
      %v1400 = vpop.f32.mrb[0].mxu0
      %v1401 = vpop.f32.mrb[0].mxu0
      %v1402 = vadd.f32 %v1210, %v1401
      %v1403 = vpop.f32.mrb[0].mxu0
      %1404 = vmatprep.mubr.bf16.mxu0 0
      %1405 = vmatmul.mubr.bf16.gmra.mrb[0].mxu0 %v1060
      %v1406 = vpop.f32.mrb[0].mxu0
      %v1407 = vadd.f32 %v1215, %v1406
      %v1408 = vpop.f32.mrb[0].mxu0
      %v1409 = vpop.f32.mrb[0].mxu0
      %v1410 = vadd.f32 %v1218, %v1409
      %v1411 = vpop.f32.mrb[0].mxu0
      %1412 = vmatprep.mubr.bf16.mxu0 0
      %1413 = vmatmul.mubr.bf16.gmra.mrb[0].mxu0 %v1061
      %v1414 = vpop.f32.mrb[0].mxu0
      %v1415 = vadd.f32 %v1223, %v1414
      %v1416 = vpop.f32.mrb[0].mxu0
      %v1417 = vpop.f32.mrb[0].mxu0
      %v1418 = vadd.f32 %v1226, %v1417
      %v1419 = vpop.f32.mrb[0].mxu0
      %1420 = vmatprep.mubr.bf16.mxu0 0
      %1421 = vmatmul.mubr.bf16.gmra.mrb[0].mxu0 %v1062
      %v1422 = vpop.f32.mrb[0].mxu0
      %v1423 = vadd.f32 %v1231, %v1422
      %v1424 = vpop.f32.mrb[0].mxu0
      %v1425 = vpop.f32.mrb[0].mxu0
      %v1426 = vadd.f32 %v1234, %v1425
      %v1427 = vpop.f32.mrb[0].mxu0
      %1428 = vmatprep.mubr.bf16.mxu0 0
      %1429 = vmatmul.mubr.bf16.gmra.mrb[0].mxu0 %v1063
      %v1430 = vpop.f32.mrb[0].mxu0
      %v1431 = vadd.f32 %v1239, %v1430
      %v1432 = vpop.f32.mrb[0].mxu0
      %v1433 = vpop.f32.mrb[0].mxu0
      %v1434 = vadd.f32 %v1242, %v1433
      %v1435 = vpop.f32.mrb[0].mxu0
      %1436 = vmatprep.mubr.bf16.mxu0 0
      %1437 = vmatmul.mubr.bf16.gmra.mrb[0].mxu0 %v1064
      %v1438 = vpop.f32.mrb[0].mxu0
      %v1439 = vadd.f32 %v1247, %v1438
      %v1440 = vpop.f32.mrb[0].mxu0
      %v1441 = vpop.f32.mrb[0].mxu0
      %v1442 = vadd.f32 %v1250, %v1441
      %v1443 = vpop.f32.mrb[0].mxu0
      %1444 = vmatprep.mubr.bf16.mxu0 0
      %1445 = vmatmul.mubr.bf16.gmra.mrb[0].mxu0 %v1065
      %v1446 = vpop.f32.mrb[0].mxu0
      %v1447 = vadd.f32 %v1255, %v1446
      %v1448 = vpop.f32.mrb[0].mxu0
      %v1449 = vpop.f32.mrb[0].mxu0
      %v1450 = vadd.f32 %v1258, %v1449
      %v1451 = vpop.f32.mrb[0].mxu0
      %1452 = vmatprep.mubr.bf16.mxu0 0
      %1453 = vmatmul.mubr.bf16.gmra.mrb[0].mxu0 %v1066
      %v1454 = vpop.f32.mrb[0].mxu0
      %v1455 = vadd.f32 %v1263, %v1454
      %v1456 = vpop.f32.mrb[0].mxu0
      %v1457 = vpop.f32.mrb[0].mxu0
      %v1458 = vadd.f32 %v1266, %v1457
      %v1459 = vpop.f32.mrb[0].mxu0
      %1460 = vmatprep.mubr.bf16.mxu0 0
      %1461 = vmatmul.mubr.bf16.gmra.mrb[0].mxu0 %v1067
      %v1462 = vpop.f32.mrb[0].mxu0
      %v1463 = vadd.f32 %v1271, %v1462
      %v1464 = vpop.f32.mrb[0].mxu0
      %v1465 = vpop.f32.mrb[0].mxu0
      %v1466 = vadd.f32 %v1274, %v1465
      %v1467 = vpop.f32.mrb[0].mxu0
      %1468 = vmatprep.mubr.bf16.mxu0 0
      %1469 = vmatmul.mubr.bf16.gmra.mrb[0].mxu0 %v1068
      %v1470 = vpop.f32.mrb[0].mxu0
      %v1471 = vadd.f32 %v1279, %v1470
      %v1472 = vpop.f32.mrb[0].mxu0
      %v1473 = vpop.f32.mrb[0].mxu0
      %v1474 = vadd.f32 %v1282, %v1473
      %v1475 = vpop.f32.mrb[0].mxu0
      %1476 = vdwg.mxu0
      %v1477 = vld [vmem:[#allocation2] sm:$0xc]
      %v1478 = vld [vmem:[#allocation2 + $0x60] sm:$0x3]
      %s1479 = scalar_lea.vmem %s4, 128
      %v1480 = vld [vmem:[%s1479] sm:$0xf]
      %v1481 = vld [vmem:[%s1479 + $0x4] sm:$0xf]
      %v1482 = vld [vmem:[%s1479 + $0x8] sm:$0xf]
      %v1483 = vld [vmem:[%s1479 + $0xc] sm:$0xf]
      %v1484 = vld [vmem:[%s1479 + $0x10] sm:$0xf]
      %v1485 = vld [vmem:[%s1479 + $0x14] sm:$0xf]
      %v1486 = vld [vmem:[%s1479 + $0x18] sm:$0xf]
      %v1487 = vld [vmem:[%s1479 + $0x1c] sm:$0xf]
      %v1488 = vld [vmem:[%s1479 + $0x20] sm:$0xf]
      %v1489 = vld [vmem:[%s1479 + $0x24] sm:$0xf]
      %v1490 = vld [vmem:[%s1479 + $0x28] sm:$0xf]
      %v1491 = vld [vmem:[%s1479 + $0x2c] sm:$0xf]
      %v1492 = vld [vmem:[%s1479 + $0x30] sm:$0xf]
      %v1493 = vld [vmem:[%s1479 + $0x34] sm:$0xf]
      %v1494 = vld [vmem:[%s1479 + $0x38] sm:$0xf]
      %v1495 = vld [vmem:[%s1479 + $0x3c] sm:$0xf]
      %v1498 = vunpack.c.l.b16 %v1477
      %v1499 = vunpack.c.l.b16 %v1478
      %v1500 = vpack.c.b16 %v1033, %v1498
      %v1501 = vpack.c.b16 %v1499, %v1499
      %vm1502 = vcmask 1045504
      %v1503 = vrot.slane %v1500, 2
      %v1504 = vrot.slane %v1058, 2
      %v1505 = vsel %vm1502, %v1503, %v1504
      %v1506 = vrot.slane %v1059, 2
      %v1507 = vsel %vm1502, %v1504, %v1506
      %v1508 = vrot.slane %v1060, 2
      %v1509 = vsel %vm1502, %v1506, %v1508
      %v1510 = vrot.slane %v1061, 2
      %v1511 = vsel %vm1502, %v1508, %v1510
      %v1512 = vrot.slane %v1062, 2
      %v1513 = vsel %vm1502, %v1510, %v1512
      %v1514 = vrot.slane %v1063, 2
      %v1515 = vsel %vm1502, %v1512, %v1514
      %v1516 = vrot.slane %v1064, 2
      %v1517 = vsel %vm1502, %v1514, %v1516
      %v1518 = vrot.slane %v1065, 2
      %v1519 = vsel %vm1502, %v1516, %v1518
      %v1520 = vrot.slane %v1066, 2
      %v1521 = vsel %vm1502, %v1518, %v1520
      %v1522 = vrot.slane %v1067, 2
      %v1523 = vsel %vm1502, %v1520, %v1522
      %v1524 = vrot.slane %v1068, 2
      %v1525 = vsel %vm1502, %v1522, %v1524
      %v1526 = vrot.slane %v1501, 2
      %v1527 = vsel %vm1502, %v1524, %v1526
      %v1556 = vunpack.c.l.b16 %v1480
      %v1557 = vunpack.c.l.b16 %v1481
      %v1558 = vunpack.c.l.b16 %v1482
      %v1559 = vunpack.c.l.b16 %v1483
      %v1560 = vunpack.c.l.b16 %v1484
      %v1561 = vunpack.c.l.b16 %v1485
      %v1562 = vunpack.c.l.b16 %v1486
      %v1563 = vunpack.c.l.b16 %v1487
      %v1564 = vunpack.c.l.b16 %v1488
      %v1565 = vunpack.c.l.b16 %v1489
      %v1566 = vunpack.c.l.b16 %v1490
      %v1567 = vunpack.c.l.b16 %v1491
      %v1568 = vunpack.c.l.b16 %v1492
      %v1569 = vunpack.c.l.b16 %v1493
      %v1570 = vunpack.c.l.b16 %v1494
      %v1571 = vunpack.c.l.b16 %v1495
      %v1572 = vpack.c.b16 %v1557, %v1556
      %v1573 = vpack.c.b16 %v1559, %v1558
      %v1574 = vpack.c.b16 %v1561, %v1560
      %v1575 = vpack.c.b16 %v1563, %v1562
      %v1576 = vpack.c.b16 %v1565, %v1564
      %v1577 = vpack.c.b16 %v1567, %v1566
      %v1578 = vpack.c.b16 %v1569, %v1568
      %v1579 = vpack.c.b16 %v1571, %v1570
      %1588 = vmatprep.subr.bf16.mxu0 0
      %1589 = vmatpush1.bf16.msra.mxu0 %v1572
      %1590 = vmatprep.subr.bf16.mxu0 0
      %1591 = vmatpush1.bf16.msra.mxu0 %v1573
      %1592 = vmatprep.subr.bf16.mxu0 0
      %1593 = vmatpush1.bf16.msra.mxu0 %v1574
      %1594 = vmatprep.subr.bf16.mxu0 0
      %1595 = vmatpush1.bf16.msra.mxu0 %v1575
      %1596 = vmatprep.subr.bf16.mxu0 0
      %1597 = vmatpush1.bf16.msra.mxu0 %v1576
      %1598 = vmatprep.subr.bf16.mxu0 0
      %1599 = vmatpush1.bf16.msra.mxu0 %v1577
      %1600 = vmatprep.subr.bf16.mxu0 0
      %1601 = vmatpush1.bf16.msra.mxu0 %v1578
      %1602 = vmatprep.subr.bf16.mxu0 0
      %1603 = vmatpush1.bf16.msra.mxu0 %v1579
      %1604 = vmatprep.subr.bf16.mxu0 0
      %1605 = vmatpush1.bf16.msra.mxu0 0
      %1606 = vmatprep.subr.bf16.mxu0 0
      %1607 = vmatpush1.bf16.msra.mxu0 0
      %1608 = vmatprep.subr.bf16.mxu0 0
      %1609 = vmatpush1.bf16.msra.mxu0 0
      %1610 = vmatprep.subr.bf16.mxu0 0
      %1611 = vmatpush1.bf16.msra.mxu0 0
      %1612 = vmatprep.subr.bf16.mxu0 0
      %1613 = vmatpush1.bf16.msra.mxu0 0
      %1614 = vmatprep.subr.bf16.mxu0 0
      %1615 = vmatpush1.bf16.msra.mxu0 0
      %1616 = vmatprep.subr.bf16.mxu0 0
      %1617 = vmatpush1.bf16.msra.mxu0 0
      %1618 = vmatprep.subr.bf16.mxu0 0
      %1619 = vmatpush1.bf16.msra.mxu0 0
      %1620 = vmatprep.mubr.bf16.mxu0 0
      %1621 = vmatmul.mubr.bf16.gmra.mrb[0].mxu0 %v1505
      %v1622 = vpop.f32.mrb[0].mxu0
      %v1623 = vadd.f32 0.0, %v1622
      %v1624 = vpop.f32.mrb[0].mxu0
      %v1625 = vpop.f32.mrb[0].mxu0
      %v1626 = vadd.f32 0.0, %v1625
      %v1627 = vpop.f32.mrb[0].mxu0
      %1628 = vmatprep.mubr.bf16.mxu0 0
      %1629 = vmatmul.mubr.bf16.gmra.mrb[0].mxu0 %v1507
      %v1630 = vpop.f32.mrb[0].mxu0
      %v1631 = vadd.f32 0.0, %v1630
      %v1632 = vpop.f32.mrb[0].mxu0
      %v1633 = vpop.f32.mrb[0].mxu0
      %v1634 = vadd.f32 0.0, %v1633
      %v1635 = vpop.f32.mrb[0].mxu0
      %1636 = vmatprep.mubr.bf16.mxu0 0
      %1637 = vmatmul.mubr.bf16.gmra.mrb[0].mxu0 %v1509
      %v1638 = vpop.f32.mrb[0].mxu0
      %v1639 = vadd.f32 0.0, %v1638
      %v1640 = vpop.f32.mrb[0].mxu0
      %v1641 = vpop.f32.mrb[0].mxu0
      %v1642 = vadd.f32 0.0, %v1641
      %v1643 = vpop.f32.mrb[0].mxu0
      %1644 = vmatprep.mubr.bf16.mxu0 0
      %1645 = vmatmul.mubr.bf16.gmra.mrb[0].mxu0 %v1511
      %v1646 = vpop.f32.mrb[0].mxu0
      %v1647 = vadd.f32 0.0, %v1646
      %v1648 = vpop.f32.mrb[0].mxu0
      %v1649 = vpop.f32.mrb[0].mxu0
      %v1650 = vadd.f32 0.0, %v1649
      %v1651 = vpop.f32.mrb[0].mxu0
      %1652 = vmatprep.mubr.bf16.mxu0 0
      %1653 = vmatmul.mubr.bf16.gmra.mrb[0].mxu0 %v1513
      %v1654 = vpop.f32.mrb[0].mxu0
      %v1655 = vadd.f32 0.0, %v1654
      %v1656 = vpop.f32.mrb[0].mxu0
      %v1657 = vpop.f32.mrb[0].mxu0
      %v1658 = vadd.f32 0.0, %v1657
      %v1659 = vpop.f32.mrb[0].mxu0
      %1660 = vmatprep.mubr.bf16.mxu0 0
      %1661 = vmatmul.mubr.bf16.gmra.mrb[0].mxu0 %v1515
      %v1662 = vpop.f32.mrb[0].mxu0
      %v1663 = vadd.f32 0.0, %v1662
      %v1664 = vpop.f32.mrb[0].mxu0
      %v1665 = vpop.f32.mrb[0].mxu0
      %v1666 = vadd.f32 0.0, %v1665
      %v1667 = vpop.f32.mrb[0].mxu0
      %1668 = vmatprep.mubr.bf16.mxu0 0
      %1669 = vmatmul.mubr.bf16.gmra.mrb[0].mxu0 %v1517
      %v1670 = vpop.f32.mrb[0].mxu0
      %v1671 = vadd.f32 0.0, %v1670
      %v1672 = vpop.f32.mrb[0].mxu0
      %v1673 = vpop.f32.mrb[0].mxu0
      %v1674 = vadd.f32 0.0, %v1673
      %v1675 = vpop.f32.mrb[0].mxu0
      %1676 = vmatprep.mubr.bf16.mxu0 0
      %1677 = vmatmul.mubr.bf16.gmra.mrb[0].mxu0 %v1519
      %v1678 = vpop.f32.mrb[0].mxu0
      %v1679 = vadd.f32 0.0, %v1678
      %v1680 = vpop.f32.mrb[0].mxu0
      %v1681 = vpop.f32.mrb[0].mxu0
      %v1682 = vadd.f32 0.0, %v1681
      %v1683 = vpop.f32.mrb[0].mxu0
      %1684 = vmatprep.mubr.bf16.mxu0 0
      %1685 = vmatmul.mubr.bf16.gmra.mrb[0].mxu0 %v1521
      %v1686 = vpop.f32.mrb[0].mxu0
      %v1687 = vadd.f32 0.0, %v1686
      %v1688 = vpop.f32.mrb[0].mxu0
      %v1689 = vpop.f32.mrb[0].mxu0
      %v1690 = vadd.f32 0.0, %v1689
      %v1691 = vpop.f32.mrb[0].mxu0
      %1692 = vmatprep.mubr.bf16.mxu0 0
      %1693 = vmatmul.mubr.bf16.gmra.mrb[0].mxu0 %v1523
      %v1694 = vpop.f32.mrb[0].mxu0
      %v1695 = vadd.f32 0.0, %v1694
      %v1696 = vpop.f32.mrb[0].mxu0
      %v1697 = vpop.f32.mrb[0].mxu0
      %v1698 = vadd.f32 0.0, %v1697
      %v1699 = vpop.f32.mrb[0].mxu0
      %1700 = vmatprep.mubr.bf16.mxu0 0
      %1701 = vmatmul.mubr.bf16.gmra.mrb[0].mxu0 %v1525
      %v1702 = vpop.f32.mrb[0].mxu0
      %v1703 = vadd.f32 0.0, %v1702
      %v1704 = vpop.f32.mrb[0].mxu0
      %v1705 = vpop.f32.mrb[0].mxu0
      %v1706 = vadd.f32 0.0, %v1705
      %v1707 = vpop.f32.mrb[0].mxu0
      %1708 = vmatprep.mubr.bf16.mxu0 0
      %1709 = vmatmul.mubr.bf16.gmra.mrb[0].mxu0 %v1527
      %v1710 = vpop.f32.mrb[0].mxu0
      %v1711 = vadd.f32 0.0, %v1710
      %v1712 = vpop.f32.mrb[0].mxu0
      %v1713 = vpop.f32.mrb[0].mxu0
      %v1714 = vadd.f32 0.0, %v1713
      %v1715 = vpop.f32.mrb[0].mxu0
      %1716 = vdwg.mxu0
      %v1717 = vadd.f32 %v1383, %v1623
      %v1718 = vadd.f32 %v1386, %v1626
      %v1719 = vadd.f32 %v1391, %v1631
      %v1720 = vadd.f32 %v1394, %v1634
      %v1721 = vadd.f32 %v1399, %v1639
      %v1722 = vadd.f32 %v1402, %v1642
      %v1723 = vadd.f32 %v1407, %v1647
      %v1724 = vadd.f32 %v1410, %v1650
      %v1725 = vadd.f32 %v1415, %v1655
      %v1726 = vadd.f32 %v1418, %v1658
      %v1727 = vadd.f32 %v1423, %v1663
      %v1728 = vadd.f32 %v1426, %v1666
      %v1729 = vadd.f32 %v1431, %v1671
      %v1730 = vadd.f32 %v1434, %v1674
      %v1731 = vadd.f32 %v1439, %v1679
      %v1732 = vadd.f32 %v1442, %v1682
      %v1733 = vadd.f32 %v1447, %v1687
      %v1734 = vadd.f32 %v1450, %v1690
      %v1735 = vadd.f32 %v1455, %v1695
      %v1736 = vadd.f32 %v1458, %v1698
      %v1737 = vadd.f32 %v1463, %v1703
      %v1738 = vadd.f32 %v1466, %v1706
      %v1739 = vadd.f32 %v1471, %v1711
      %v1740 = vadd.f32 %v1474, %v1714
      %v1741 = vld [vmem:[#allocation2 + $0x18] sm:$0xf]
      %v1742 = vld [vmem:[#allocation2 + $0x1c] sm:$0xf]
      %v1743 = vld [vmem:[#allocation2 + $0x20] sm:$0xf]
      %v1744 = vld [vmem:[#allocation2 + $0x24] sm:$0xf]
      %v1745 = vld [vmem:[#allocation2 + $0x28] sm:$0xf]
      %v1746 = vld [vmem:[#allocation2 + $0x2c] sm:$0xf]
      %v1747 = vld [vmem:[#allocation2 + $0x30] sm:$0xf]
      %v1748 = vld [vmem:[#allocation2 + $0x34] sm:$0xf]
      %v1749 = vld [vmem:[#allocation2 + $0x38] sm:$0xf]
      %v1750 = vld [vmem:[#allocation2 + $0x3c] sm:$0xf]
      %v1751 = vld [vmem:[#allocation2 + $0x40] sm:$0xf]
      %v1752 = vld [vmem:[#allocation2 + $0x44] sm:$0xf]
      %v1753 = vld [vmem:[#allocation2 + $0x48] sm:$0xf]
      %v1754 = vld [vmem:[#allocation2 + $0x4c] sm:$0xf]
      %v1755 = vld [vmem:[#allocation2 + $0x50] sm:$0xf]
      %v1756 = vld [vmem:[#allocation2 + $0x54] sm:$0xf]
      %v1757 = vld [vmem:[#allocation2 + $0x58] sm:$0xf]
      %v1758 = vld [vmem:[#allocation2 + $0x5c] sm:$0xf]
      %v1759 = vld [vmem:[#allocation2 + $0x60] sm:$0xf]
      %v1760 = vld [vmem:[#allocation2 + $0x64] sm:$0xf]
      %v1761 = vld [vmem:[#allocation2 + $0x68] sm:$0xf]
      %v1762 = vld [vmem:[#allocation2 + $0x6c] sm:$0xf]
      %v1763 = vld [vmem:[#allocation2 + $0x70] sm:$0xf]
      %v1764 = vld [vmem:[#allocation2 + $0x74] sm:$0xf]
      %s1765 = scalar_lea.vmem %s4, 192
      %v1766 = vld [vmem:[%s1765] sm:$0xf]
      %v1767 = vld [vmem:[%s1765 + $0x4] sm:$0xf]
      %v1768 = vld [vmem:[%s1765 + $0x8] sm:$0xf]
      %v1769 = vld [vmem:[%s1765 + $0xc] sm:$0xf]
      %v1770 = vld [vmem:[%s1765 + $0x10] sm:$0xf]
      %v1771 = vld [vmem:[%s1765 + $0x14] sm:$0xf]
      %v1772 = vld [vmem:[%s1765 + $0x18] sm:$0xf]
      %v1773 = vld [vmem:[%s1765 + $0x1c] sm:$0xf]
      %v1774 = vld [vmem:[%s1765 + $0x20] sm:$0xf]
      %v1775 = vld [vmem:[%s1765 + $0x24] sm:$0xf]
      %v1776 = vld [vmem:[%s1765 + $0x28] sm:$0xf]
      %v1777 = vld [vmem:[%s1765 + $0x2c] sm:$0xf]
      %v1778 = vld [vmem:[%s1765 + $0x30] sm:$0xf]
      %v1779 = vld [vmem:[%s1765 + $0x34] sm:$0xf]
      %v1780 = vld [vmem:[%s1765 + $0x38] sm:$0xf]
      %v1781 = vld [vmem:[%s1765 + $0x3c] sm:$0xf]
      %v1806 = vunpack.c.l.b16 %v1741
      %v1807 = vunpack.c.l.b16 %v1742
      %v1808 = vunpack.c.l.b16 %v1743
      %v1809 = vunpack.c.l.b16 %v1744
      %v1810 = vunpack.c.l.b16 %v1745
      %v1811 = vunpack.c.l.b16 %v1746
      %v1812 = vunpack.c.l.b16 %v1747
      %v1813 = vunpack.c.l.b16 %v1748
      %v1814 = vunpack.c.l.b16 %v1749
      %v1815 = vunpack.c.l.b16 %v1750
      %v1816 = vunpack.c.l.b16 %v1751
      %v1817 = vunpack.c.l.b16 %v1752
      %v1818 = vunpack.c.l.b16 %v1753
      %v1819 = vunpack.c.l.b16 %v1754
      %v1820 = vunpack.c.l.b16 %v1755
      %v1821 = vunpack.c.l.b16 %v1756
      %v1822 = vunpack.c.l.b16 %v1757
      %v1823 = vunpack.c.l.b16 %v1758
      %v1824 = vunpack.c.l.b16 %v1759
      %v1825 = vunpack.c.l.b16 %v1760
      %v1826 = vunpack.c.l.b16 %v1761
      %v1827 = vunpack.c.l.b16 %v1762
      %v1828 = vunpack.c.l.b16 %v1763
      %v1829 = vunpack.c.l.b16 %v1764
      %v1830 = vpack.c.b16 %v1807, %v1806
      %v1831 = vpack.c.b16 %v1809, %v1808
      %v1832 = vpack.c.b16 %v1811, %v1810
      %v1833 = vpack.c.b16 %v1813, %v1812
      %v1834 = vpack.c.b16 %v1815, %v1814
      %v1835 = vpack.c.b16 %v1817, %v1816
      %v1836 = vpack.c.b16 %v1819, %v1818
      %v1837 = vpack.c.b16 %v1821, %v1820
      %v1838 = vpack.c.b16 %v1823, %v1822
      %v1839 = vpack.c.b16 %v1825, %v1824
      %v1840 = vpack.c.b16 %v1827, %v1826
      %v1841 = vpack.c.b16 %v1829, %v1828
      %v1870 = vunpack.c.l.b16 %v1766
      %v1871 = vunpack.c.l.b16 %v1767
      %v1872 = vunpack.c.l.b16 %v1768
      %v1873 = vunpack.c.l.b16 %v1769
      %v1874 = vunpack.c.l.b16 %v1770
      %v1875 = vunpack.c.l.b16 %v1771
      %v1876 = vunpack.c.l.b16 %v1772
      %v1877 = vunpack.c.l.b16 %v1773
      %v1878 = vunpack.c.l.b16 %v1774
      %v1879 = vunpack.c.l.b16 %v1775
      %v1880 = vunpack.c.l.b16 %v1776
      %v1881 = vunpack.c.l.b16 %v1777
      %v1882 = vunpack.c.l.b16 %v1778
      %v1883 = vunpack.c.l.b16 %v1779
      %v1884 = vunpack.c.l.b16 %v1780
      %v1885 = vunpack.c.l.b16 %v1781
      %v1886 = vpack.c.b16 %v1871, %v1870
      %v1887 = vpack.c.b16 %v1873, %v1872
      %v1888 = vpack.c.b16 %v1875, %v1874
      %v1889 = vpack.c.b16 %v1877, %v1876
      %v1890 = vpack.c.b16 %v1879, %v1878
      %v1891 = vpack.c.b16 %v1881, %v1880
      %v1892 = vpack.c.b16 %v1883, %v1882
      %v1893 = vpack.c.b16 %v1885, %v1884
      %1902 = vmatprep.subr.bf16.mxu0 0
      %1903 = vmatpush1.bf16.msra.mxu0 %v1886
      %1904 = vmatprep.subr.bf16.mxu0 0
      %1905 = vmatpush1.bf16.msra.mxu0 %v1887
      %1906 = vmatprep.subr.bf16.mxu0 0
      %1907 = vmatpush1.bf16.msra.mxu0 %v1888
      %1908 = vmatprep.subr.bf16.mxu0 0
      %1909 = vmatpush1.bf16.msra.mxu0 %v1889
      %1910 = vmatprep.subr.bf16.mxu0 0
      %1911 = vmatpush1.bf16.msra.mxu0 %v1890
      %1912 = vmatprep.subr.bf16.mxu0 0
      %1913 = vmatpush1.bf16.msra.mxu0 %v1891
      %1914 = vmatprep.subr.bf16.mxu0 0
      %1915 = vmatpush1.bf16.msra.mxu0 %v1892
      %1916 = vmatprep.subr.bf16.mxu0 0
      %1917 = vmatpush1.bf16.msra.mxu0 %v1893
      %1918 = vmatprep.subr.bf16.mxu0 0
      %1919 = vmatpush1.bf16.msra.mxu0 0
      %1920 = vmatprep.subr.bf16.mxu0 0
      %1921 = vmatpush1.bf16.msra.mxu0 0
      %1922 = vmatprep.subr.bf16.mxu0 0
      %1923 = vmatpush1.bf16.msra.mxu0 0
      %1924 = vmatprep.subr.bf16.mxu0 0
      %1925 = vmatpush1.bf16.msra.mxu0 0
      %1926 = vmatprep.subr.bf16.mxu0 0
      %1927 = vmatpush1.bf16.msra.mxu0 0
      %1928 = vmatprep.subr.bf16.mxu0 0
      %1929 = vmatpush1.bf16.msra.mxu0 0
      %1930 = vmatprep.subr.bf16.mxu0 0
      %1931 = vmatpush1.bf16.msra.mxu0 0
      %1932 = vmatprep.subr.bf16.mxu0 0
      %1933 = vmatpush1.bf16.msra.mxu0 0
      %1934 = vmatprep.mubr.bf16.mxu0 0
      %1935 = vmatmul.mubr.bf16.gmra.mrb[0].mxu0 %v1830
      %v1936 = vpop.f32.mrb[0].mxu0
      %v1937 = vadd.f32 0.0, %v1936
      %v1938 = vpop.f32.mrb[0].mxu0
      %v1939 = vpop.f32.mrb[0].mxu0
      %v1940 = vadd.f32 0.0, %v1939
      %v1941 = vpop.f32.mrb[0].mxu0
      %1942 = vmatprep.mubr.bf16.mxu0 0
      %1943 = vmatmul.mubr.bf16.gmra.mrb[0].mxu0 %v1831
      %v1944 = vpop.f32.mrb[0].mxu0
      %v1945 = vadd.f32 0.0, %v1944
      %v1946 = vpop.f32.mrb[0].mxu0
      %v1947 = vpop.f32.mrb[0].mxu0
      %v1948 = vadd.f32 0.0, %v1947
      %v1949 = vpop.f32.mrb[0].mxu0
      %1950 = vmatprep.mubr.bf16.mxu0 0
      %1951 = vmatmul.mubr.bf16.gmra.mrb[0].mxu0 %v1832
      %v1952 = vpop.f32.mrb[0].mxu0
      %v1953 = vadd.f32 0.0, %v1952
      %v1954 = vpop.f32.mrb[0].mxu0
      %v1955 = vpop.f32.mrb[0].mxu0
      %v1956 = vadd.f32 0.0, %v1955
      %v1957 = vpop.f32.mrb[0].mxu0
      %1958 = vmatprep.mubr.bf16.mxu0 0
      %1959 = vmatmul.mubr.bf16.gmra.mrb[0].mxu0 %v1833
      %v1960 = vpop.f32.mrb[0].mxu0
      %v1961 = vadd.f32 0.0, %v1960
      %v1962 = vpop.f32.mrb[0].mxu0
      %v1963 = vpop.f32.mrb[0].mxu0
      %v1964 = vadd.f32 0.0, %v1963
      %v1965 = vpop.f32.mrb[0].mxu0
      %1966 = vmatprep.mubr.bf16.mxu0 0
      %1967 = vmatmul.mubr.bf16.gmra.mrb[0].mxu0 %v1834
      %v1968 = vpop.f32.mrb[0].mxu0
      %v1969 = vadd.f32 0.0, %v1968
      %v1970 = vpop.f32.mrb[0].mxu0
      %v1971 = vpop.f32.mrb[0].mxu0
      %v1972 = vadd.f32 0.0, %v1971
      %v1973 = vpop.f32.mrb[0].mxu0
      %1974 = vmatprep.mubr.bf16.mxu0 0
      %1975 = vmatmul.mubr.bf16.gmra.mrb[0].mxu0 %v1835
      %v1976 = vpop.f32.mrb[0].mxu0
      %v1977 = vadd.f32 0.0, %v1976
      %v1978 = vpop.f32.mrb[0].mxu0
      %v1979 = vpop.f32.mrb[0].mxu0
      %v1980 = vadd.f32 0.0, %v1979
      %v1981 = vpop.f32.mrb[0].mxu0
      %1982 = vmatprep.mubr.bf16.mxu0 0
      %1983 = vmatmul.mubr.bf16.gmra.mrb[0].mxu0 %v1836
      %v1984 = vpop.f32.mrb[0].mxu0
      %v1985 = vadd.f32 0.0, %v1984
      %v1986 = vpop.f32.mrb[0].mxu0
      %v1987 = vpop.f32.mrb[0].mxu0
      %v1988 = vadd.f32 0.0, %v1987
      %v1989 = vpop.f32.mrb[0].mxu0
      %1990 = vmatprep.mubr.bf16.mxu0 0
      %1991 = vmatmul.mubr.bf16.gmra.mrb[0].mxu0 %v1837
      %v1992 = vpop.f32.mrb[0].mxu0
      %v1993 = vadd.f32 0.0, %v1992
      %v1994 = vpop.f32.mrb[0].mxu0
      %v1995 = vpop.f32.mrb[0].mxu0
      %v1996 = vadd.f32 0.0, %v1995
      %v1997 = vpop.f32.mrb[0].mxu0
      %1998 = vmatprep.mubr.bf16.mxu0 0
      %1999 = vmatmul.mubr.bf16.gmra.mrb[0].mxu0 %v1838
      %v2000 = vpop.f32.mrb[0].mxu0
      %v2001 = vadd.f32 0.0, %v2000
      %v2002 = vpop.f32.mrb[0].mxu0
      %v2003 = vpop.f32.mrb[0].mxu0
      %v2004 = vadd.f32 0.0, %v2003
      %v2005 = vpop.f32.mrb[0].mxu0
      %2006 = vmatprep.mubr.bf16.mxu0 0
      %2007 = vmatmul.mubr.bf16.gmra.mrb[0].mxu0 %v1839
      %v2008 = vpop.f32.mrb[0].mxu0
      %v2009 = vadd.f32 0.0, %v2008
      %v2010 = vpop.f32.mrb[0].mxu0
      %v2011 = vpop.f32.mrb[0].mxu0
      %v2012 = vadd.f32 0.0, %v2011
      %v2013 = vpop.f32.mrb[0].mxu0
      %2014 = vmatprep.mubr.bf16.mxu0 0
      %2015 = vmatmul.mubr.bf16.gmra.mrb[0].mxu0 %v1840
      %v2016 = vpop.f32.mrb[0].mxu0
      %v2017 = vadd.f32 0.0, %v2016
      %v2018 = vpop.f32.mrb[0].mxu0
      %v2019 = vpop.f32.mrb[0].mxu0
      %v2020 = vadd.f32 0.0, %v2019
      %v2021 = vpop.f32.mrb[0].mxu0
      %2022 = vmatprep.mubr.bf16.mxu0 0
      %2023 = vmatmul.mubr.bf16.gmra.mrb[0].mxu0 %v1841
      %v2024 = vpop.f32.mrb[0].mxu0
      %v2025 = vadd.f32 0.0, %v2024
      %v2026 = vpop.f32.mrb[0].mxu0
      %v2027 = vpop.f32.mrb[0].mxu0
      %v2028 = vadd.f32 0.0, %v2027
      %v2029 = vpop.f32.mrb[0].mxu0
      %2030 = vdwg.mxu0
      %v2031 = vadd.f32 %v1717, %v1937
      %v2032 = vadd.f32 %v1718, %v1940
      %v2033 = vadd.f32 %v1719, %v1945
      %v2034 = vadd.f32 %v1720, %v1948
      %v2035 = vadd.f32 %v1721, %v1953
      %v2036 = vadd.f32 %v1722, %v1956
      %v2037 = vadd.f32 %v1723, %v1961
      %v2038 = vadd.f32 %v1724, %v1964
      %v2039 = vadd.f32 %v1725, %v1969
      %v2040 = vadd.f32 %v1726, %v1972
      %v2041 = vadd.f32 %v1727, %v1977
      %v2042 = vadd.f32 %v1728, %v1980
      %v2043 = vadd.f32 %v1729, %v1985
      %v2044 = vadd.f32 %v1730, %v1988
      %v2045 = vadd.f32 %v1731, %v1993
      %v2046 = vadd.f32 %v1732, %v1996
      %v2047 = vadd.f32 %v1733, %v2001
      %v2048 = vadd.f32 %v1734, %v2004
      %v2049 = vadd.f32 %v1735, %v2009
      %v2050 = vadd.f32 %v1736, %v2012
      %v2051 = vadd.f32 %v1737, %v2017
      %v2052 = vadd.f32 %v1738, %v2020
      %v2053 = vadd.f32 %v1739, %v2025
      %v2054 = vadd.f32 %v1740, %v2028
      %v2055 = vld [vmem:[#allocation2 + $0x18] sm:$0xe]
      %v2056 = vld [vmem:[#allocation2 + $0x1c] sm:$0xf]
      %v2057 = vld [vmem:[#allocation2 + $0x20] sm:$0xf]
      %v2058 = vld [vmem:[#allocation2 + $0x24] sm:$0xf]
      %v2059 = vld [vmem:[#allocation2 + $0x28] sm:$0xf]
      %v2060 = vld [vmem:[#allocation2 + $0x2c] sm:$0xf]
      %v2061 = vld [vmem:[#allocation2 + $0x30] sm:$0xf]
      %v2062 = vld [vmem:[#allocation2 + $0x34] sm:$0xf]
      %v2063 = vld [vmem:[#allocation2 + $0x38] sm:$0xf]
      %v2064 = vld [vmem:[#allocation2 + $0x3c] sm:$0xf]
      %v2065 = vld [vmem:[#allocation2 + $0x40] sm:$0xf]
      %v2066 = vld [vmem:[#allocation2 + $0x44] sm:$0xf]
      %v2067 = vld [vmem:[#allocation2 + $0x48] sm:$0xf]
      %v2068 = vld [vmem:[#allocation2 + $0x4c] sm:$0xf]
      %v2069 = vld [vmem:[#allocation2 + $0x50] sm:$0xf]
      %v2070 = vld [vmem:[#allocation2 + $0x54] sm:$0xf]
      %v2071 = vld [vmem:[#allocation2 + $0x58] sm:$0xf]
      %v2072 = vld [vmem:[#allocation2 + $0x5c] sm:$0xf]
      %v2073 = vld [vmem:[#allocation2 + $0x60] sm:$0xf]
      %v2074 = vld [vmem:[#allocation2 + $0x64] sm:$0xf]
      %v2075 = vld [vmem:[#allocation2 + $0x68] sm:$0xf]
      %v2076 = vld [vmem:[#allocation2 + $0x6c] sm:$0xf]
      %v2077 = vld [vmem:[#allocation2 + $0x70] sm:$0xf]
      %v2078 = vld [vmem:[#allocation2 + $0x74] sm:$0xf]
      %v2079 = vld [vmem:[#allocation2 + $0x78] sm:$0x1]
      %s2080 = scalar_lea.vmem %s4, 256
      %v2081 = vld [vmem:[%s2080] sm:$0xf]
      %v2082 = vld [vmem:[%s2080 + $0x4] sm:$0xf]
      %v2083 = vld [vmem:[%s2080 + $0x8] sm:$0xf]
      %v2084 = vld [vmem:[%s2080 + $0xc] sm:$0xf]
      %v2085 = vld [vmem:[%s2080 + $0x10] sm:$0xf]
      %v2086 = vld [vmem:[%s2080 + $0x14] sm:$0xf]
      %v2087 = vld [vmem:[%s2080 + $0x18] sm:$0xf]
      %v2088 = vld [vmem:[%s2080 + $0x1c] sm:$0xf]
      %v2089 = vld [vmem:[%s2080 + $0x20] sm:$0xf]
      %v2090 = vld [vmem:[%s2080 + $0x24] sm:$0xf]
      %v2091 = vld [vmem:[%s2080 + $0x28] sm:$0xf]
      %v2092 = vld [vmem:[%s2080 + $0x2c] sm:$0xf]
      %v2093 = vld [vmem:[%s2080 + $0x30] sm:$0xf]
      %v2094 = vld [vmem:[%s2080 + $0x34] sm:$0xf]
      %v2095 = vld [vmem:[%s2080 + $0x38] sm:$0xf]
      %v2096 = vld [vmem:[%s2080 + $0x3c] sm:$0xf]
      %v2122 = vunpack.c.l.b16 %v2055
      %v2123 = vunpack.c.l.b16 %v2056
      %v2124 = vunpack.c.l.b16 %v2057
      %v2125 = vunpack.c.l.b16 %v2058
      %v2126 = vunpack.c.l.b16 %v2059
      %v2127 = vunpack.c.l.b16 %v2060
      %v2128 = vunpack.c.l.b16 %v2061
      %v2129 = vunpack.c.l.b16 %v2062
      %v2130 = vunpack.c.l.b16 %v2063
      %v2131 = vunpack.c.l.b16 %v2064
      %v2132 = vunpack.c.l.b16 %v2065
      %v2133 = vunpack.c.l.b16 %v2066
      %v2134 = vunpack.c.l.b16 %v2067
      %v2135 = vunpack.c.l.b16 %v2068
      %v2136 = vunpack.c.l.b16 %v2069
      %v2137 = vunpack.c.l.b16 %v2070
      %v2138 = vunpack.c.l.b16 %v2071
      %v2139 = vunpack.c.l.b16 %v2072
      %v2140 = vunpack.c.l.b16 %v2073
      %v2141 = vunpack.c.l.b16 %v2074
      %v2142 = vunpack.c.l.b16 %v2075
      %v2143 = vunpack.c.l.b16 %v2076
      %v2144 = vunpack.c.l.b16 %v2077
      %v2145 = vunpack.c.l.b16 %v2078
      %v2146 = vunpack.c.l.b16 %v2079
      %v2147 = vpack.c.b16 %v2123, %v2122
      %v2148 = vpack.c.b16 %v2125, %v2124
      %v2149 = vpack.c.b16 %v2127, %v2126
      %v2150 = vpack.c.b16 %v2129, %v2128
      %v2151 = vpack.c.b16 %v2131, %v2130
      %v2152 = vpack.c.b16 %v2133, %v2132
      %v2153 = vpack.c.b16 %v2135, %v2134
      %v2154 = vpack.c.b16 %v2137, %v2136
      %v2155 = vpack.c.b16 %v2139, %v2138
      %v2156 = vpack.c.b16 %v2141, %v2140
      %v2157 = vpack.c.b16 %v2143, %v2142
      %v2158 = vpack.c.b16 %v2145, %v2144
      %v2159 = vpack.c.b16 %v2146, %v2146
      %v2160 = vrot.slane %v2147, 1
      %v2161 = vrot.slane %v2148, 1
      %v2162 = vsel %vm1070, %v2160, %v2161
      %v2163 = vrot.slane %v2149, 1
      %v2164 = vsel %vm1070, %v2161, %v2163
      %v2165 = vrot.slane %v2150, 1
      %v2166 = vsel %vm1070, %v2163, %v2165
      %v2167 = vrot.slane %v2151, 1
      %v2168 = vsel %vm1070, %v2165, %v2167
      %v2169 = vrot.slane %v2152, 1
      %v2170 = vsel %vm1070, %v2167, %v2169
      %v2171 = vrot.slane %v2153, 1
      %v2172 = vsel %vm1070, %v2169, %v2171
      %v2173 = vrot.slane %v2154, 1
      %v2174 = vsel %vm1070, %v2171, %v2173
      %v2175 = vrot.slane %v2155, 1
      %v2176 = vsel %vm1070, %v2173, %v2175
      %v2177 = vrot.slane %v2156, 1
      %v2178 = vsel %vm1070, %v2175, %v2177
      %v2179 = vrot.slane %v2157, 1
      %v2180 = vsel %vm1070, %v2177, %v2179
      %v2181 = vrot.slane %v2158, 1
      %v2182 = vsel %vm1070, %v2179, %v2181
      %v2183 = vrot.slane %v2159, 1
      %v2184 = vsel %vm1070, %v2181, %v2183
      %v2213 = vunpack.c.l.b16 %v2081
      %v2214 = vunpack.c.l.b16 %v2082
      %v2215 = vunpack.c.l.b16 %v2083
      %v2216 = vunpack.c.l.b16 %v2084
      %v2217 = vunpack.c.l.b16 %v2085
      %v2218 = vunpack.c.l.b16 %v2086
      %v2219 = vunpack.c.l.b16 %v2087
      %v2220 = vunpack.c.l.b16 %v2088
      %v2221 = vunpack.c.l.b16 %v2089
      %v2222 = vunpack.c.l.b16 %v2090
      %v2223 = vunpack.c.l.b16 %v2091
      %v2224 = vunpack.c.l.b16 %v2092
      %v2225 = vunpack.c.l.b16 %v2093
      %v2226 = vunpack.c.l.b16 %v2094
      %v2227 = vunpack.c.l.b16 %v2095
      %v2228 = vunpack.c.l.b16 %v2096
      %v2229 = vpack.c.b16 %v2214, %v2213
      %v2230 = vpack.c.b16 %v2216, %v2215
      %v2231 = vpack.c.b16 %v2218, %v2217
      %v2232 = vpack.c.b16 %v2220, %v2219
      %v2233 = vpack.c.b16 %v2222, %v2221
      %v2234 = vpack.c.b16 %v2224, %v2223
      %v2235 = vpack.c.b16 %v2226, %v2225
      %v2236 = vpack.c.b16 %v2228, %v2227
      %2245 = vmatprep.subr.bf16.mxu0 0
      %2246 = vmatpush1.bf16.msra.mxu0 %v2229
      %2247 = vmatprep.subr.bf16.mxu0 0
      %2248 = vmatpush1.bf16.msra.mxu0 %v2230
      %2249 = vmatprep.subr.bf16.mxu0 0
      %2250 = vmatpush1.bf16.msra.mxu0 %v2231
      %2251 = vmatprep.subr.bf16.mxu0 0
      %2252 = vmatpush1.bf16.msra.mxu0 %v2232
      %2253 = vmatprep.subr.bf16.mxu0 0
      %2254 = vmatpush1.bf16.msra.mxu0 %v2233
      %2255 = vmatprep.subr.bf16.mxu0 0
      %2256 = vmatpush1.bf16.msra.mxu0 %v2234
      %2257 = vmatprep.subr.bf16.mxu0 0
      %2258 = vmatpush1.bf16.msra.mxu0 %v2235
      %2259 = vmatprep.subr.bf16.mxu0 0
      %2260 = vmatpush1.bf16.msra.mxu0 %v2236
      %2261 = vmatprep.subr.bf16.mxu0 0
      %2262 = vmatpush1.bf16.msra.mxu0 0
      %2263 = vmatprep.subr.bf16.mxu0 0
      %2264 = vmatpush1.bf16.msra.mxu0 0
      %2265 = vmatprep.subr.bf16.mxu0 0
      %2266 = vmatpush1.bf16.msra.mxu0 0
      %2267 = vmatprep.subr.bf16.mxu0 0
      %2268 = vmatpush1.bf16.msra.mxu0 0
      %2269 = vmatprep.subr.bf16.mxu0 0
      %2270 = vmatpush1.bf16.msra.mxu0 0
      %2271 = vmatprep.subr.bf16.mxu0 0
      %2272 = vmatpush1.bf16.msra.mxu0 0
      %2273 = vmatprep.subr.bf16.mxu0 0
      %2274 = vmatpush1.bf16.msra.mxu0 0
      %2275 = vmatprep.subr.bf16.mxu0 0
      %2276 = vmatpush1.bf16.msra.mxu0 0
      %2277 = vmatprep.mubr.bf16.mxu0 0
      %2278 = vmatmul.mubr.bf16.gmra.mrb[0].mxu0 %v2162
      %v2279 = vpop.f32.mrb[0].mxu0
      %v2280 = vadd.f32 0.0, %v2279
      %v2281 = vpop.f32.mrb[0].mxu0
      %v2282 = vpop.f32.mrb[0].mxu0
      %v2283 = vadd.f32 0.0, %v2282
      %v2284 = vpop.f32.mrb[0].mxu0
      %2285 = vmatprep.mubr.bf16.mxu0 0
      %2286 = vmatmul.mubr.bf16.gmra.mrb[0].mxu0 %v2164
      %v2287 = vpop.f32.mrb[0].mxu0
      %v2288 = vadd.f32 0.0, %v2287
      %v2289 = vpop.f32.mrb[0].mxu0
      %v2290 = vpop.f32.mrb[0].mxu0
      %v2291 = vadd.f32 0.0, %v2290
      %v2292 = vpop.f32.mrb[0].mxu0
      %2293 = vmatprep.mubr.bf16.mxu0 0
      %2294 = vmatmul.mubr.bf16.gmra.mrb[0].mxu0 %v2166
      %v2295 = vpop.f32.mrb[0].mxu0
      %v2296 = vadd.f32 0.0, %v2295
      %v2297 = vpop.f32.mrb[0].mxu0
      %v2298 = vpop.f32.mrb[0].mxu0
      %v2299 = vadd.f32 0.0, %v2298
      %v2300 = vpop.f32.mrb[0].mxu0
      %2301 = vmatprep.mubr.bf16.mxu0 0
      %2302 = vmatmul.mubr.bf16.gmra.mrb[0].mxu0 %v2168
      %v2303 = vpop.f32.mrb[0].mxu0
      %v2304 = vadd.f32 0.0, %v2303
      %v2305 = vpop.f32.mrb[0].mxu0
      %v2306 = vpop.f32.mrb[0].mxu0
      %v2307 = vadd.f32 0.0, %v2306
      %v2308 = vpop.f32.mrb[0].mxu0
      %2309 = vmatprep.mubr.bf16.mxu0 0
      %2310 = vmatmul.mubr.bf16.gmra.mrb[0].mxu0 %v2170
      %v2311 = vpop.f32.mrb[0].mxu0
      %v2312 = vadd.f32 0.0, %v2311
      %v2313 = vpop.f32.mrb[0].mxu0
      %v2314 = vpop.f32.mrb[0].mxu0
      %v2315 = vadd.f32 0.0, %v2314
      %v2316 = vpop.f32.mrb[0].mxu0
      %2317 = vmatprep.mubr.bf16.mxu0 0
      %2318 = vmatmul.mubr.bf16.gmra.mrb[0].mxu0 %v2172
      %v2319 = vpop.f32.mrb[0].mxu0
      %v2320 = vadd.f32 0.0, %v2319
      %v2321 = vpop.f32.mrb[0].mxu0
      %v2322 = vpop.f32.mrb[0].mxu0
      %v2323 = vadd.f32 0.0, %v2322
      %v2324 = vpop.f32.mrb[0].mxu0
      %2325 = vmatprep.mubr.bf16.mxu0 0
      %2326 = vmatmul.mubr.bf16.gmra.mrb[0].mxu0 %v2174
      %v2327 = vpop.f32.mrb[0].mxu0
      %v2328 = vadd.f32 0.0, %v2327
      %v2329 = vpop.f32.mrb[0].mxu0
      %v2330 = vpop.f32.mrb[0].mxu0
      %v2331 = vadd.f32 0.0, %v2330
      %v2332 = vpop.f32.mrb[0].mxu0
      %2333 = vmatprep.mubr.bf16.mxu0 0
      %2334 = vmatmul.mubr.bf16.gmra.mrb[0].mxu0 %v2176
      %v2335 = vpop.f32.mrb[0].mxu0
      %v2336 = vadd.f32 0.0, %v2335
      %v2337 = vpop.f32.mrb[0].mxu0
      %v2338 = vpop.f32.mrb[0].mxu0
      %v2339 = vadd.f32 0.0, %v2338
      %v2340 = vpop.f32.mrb[0].mxu0
      %2341 = vmatprep.mubr.bf16.mxu0 0
      %2342 = vmatmul.mubr.bf16.gmra.mrb[0].mxu0 %v2178
      %v2343 = vpop.f32.mrb[0].mxu0
      %v2344 = vadd.f32 0.0, %v2343
      %v2345 = vpop.f32.mrb[0].mxu0
      %v2346 = vpop.f32.mrb[0].mxu0
      %v2347 = vadd.f32 0.0, %v2346
      %v2348 = vpop.f32.mrb[0].mxu0
      %2349 = vmatprep.mubr.bf16.mxu0 0
      %2350 = vmatmul.mubr.bf16.gmra.mrb[0].mxu0 %v2180
      %v2351 = vpop.f32.mrb[0].mxu0
      %v2352 = vadd.f32 0.0, %v2351
      %v2353 = vpop.f32.mrb[0].mxu0
      %v2354 = vpop.f32.mrb[0].mxu0
      %v2355 = vadd.f32 0.0, %v2354
      %v2356 = vpop.f32.mrb[0].mxu0
      %2357 = vmatprep.mubr.bf16.mxu0 0
      %2358 = vmatmul.mubr.bf16.gmra.mrb[0].mxu0 %v2182
      %v2359 = vpop.f32.mrb[0].mxu0
      %v2360 = vadd.f32 0.0, %v2359
      %v2361 = vpop.f32.mrb[0].mxu0
      %v2362 = vpop.f32.mrb[0].mxu0
      %v2363 = vadd.f32 0.0, %v2362
      %v2364 = vpop.f32.mrb[0].mxu0
      %2365 = vmatprep.mubr.bf16.mxu0 0
      %2366 = vmatmul.mubr.bf16.gmra.mrb[0].mxu0 %v2184
      %v2367 = vpop.f32.mrb[0].mxu0
      %v2368 = vadd.f32 0.0, %v2367
      %v2369 = vpop.f32.mrb[0].mxu0
      %v2370 = vpop.f32.mrb[0].mxu0
      %v2371 = vadd.f32 0.0, %v2370
      %v2372 = vpop.f32.mrb[0].mxu0
      %2373 = vdwg.mxu0
      %v2374 = vadd.f32 %v2031, %v2280
      %v2375 = vadd.f32 %v2032, %v2283
      %v2376 = vadd.f32 %v2033, %v2288
      %v2377 = vadd.f32 %v2034, %v2291
      %v2378 = vadd.f32 %v2035, %v2296
      %v2379 = vadd.f32 %v2036, %v2299
      %v2380 = vadd.f32 %v2037, %v2304
      %v2381 = vadd.f32 %v2038, %v2307
      %v2382 = vadd.f32 %v2039, %v2312
      %v2383 = vadd.f32 %v2040, %v2315
      %v2384 = vadd.f32 %v2041, %v2320
      %v2385 = vadd.f32 %v2042, %v2323
      %v2386 = vadd.f32 %v2043, %v2328
      %v2387 = vadd.f32 %v2044, %v2331
      %v2388 = vadd.f32 %v2045, %v2336
      %v2389 = vadd.f32 %v2046, %v2339
      %v2390 = vadd.f32 %v2047, %v2344
      %v2391 = vadd.f32 %v2048, %v2347
      %v2392 = vadd.f32 %v2049, %v2352
      %v2393 = vadd.f32 %v2050, %v2355
      %v2394 = vadd.f32 %v2051, %v2360
      %v2395 = vadd.f32 %v2052, %v2363
      %v2396 = vadd.f32 %v2053, %v2368
      %v2397 = vadd.f32 %v2054, %v2371
      %v2398 = vld [vmem:[#allocation2 + $0x18] sm:$0xc]
      %v2399 = vld [vmem:[#allocation2 + $0x78] sm:$0x3]
      %s2400 = scalar_lea.vmem %s4, 320
      %v2401 = vld [vmem:[%s2400] sm:$0xf]
      %v2402 = vld [vmem:[%s2400 + $0x4] sm:$0xf]
      %v2403 = vld [vmem:[%s2400 + $0x8] sm:$0xf]
      %v2404 = vld [vmem:[%s2400 + $0xc] sm:$0xf]
      %v2405 = vld [vmem:[%s2400 + $0x10] sm:$0xf]
      %v2406 = vld [vmem:[%s2400 + $0x14] sm:$0xf]
      %v2407 = vld [vmem:[%s2400 + $0x18] sm:$0xf]
      %v2408 = vld [vmem:[%s2400 + $0x1c] sm:$0xf]
      %v2409 = vld [vmem:[%s2400 + $0x20] sm:$0xf]
      %v2410 = vld [vmem:[%s2400 + $0x24] sm:$0xf]
      %v2411 = vld [vmem:[%s2400 + $0x28] sm:$0xf]
      %v2412 = vld [vmem:[%s2400 + $0x2c] sm:$0xf]
      %v2413 = vld [vmem:[%s2400 + $0x30] sm:$0xf]
      %v2414 = vld [vmem:[%s2400 + $0x34] sm:$0xf]
      %v2415 = vld [vmem:[%s2400 + $0x38] sm:$0xf]
      %v2416 = vld [vmem:[%s2400 + $0x3c] sm:$0xf]
      %v2419 = vunpack.c.l.b16 %v2398
      %v2420 = vunpack.c.l.b16 %v2399
      %v2421 = vpack.c.b16 %v2123, %v2419
      %v2422 = vpack.c.b16 %v2420, %v2420
      %v2423 = vrot.slane %v2421, 2
      %v2424 = vrot.slane %v2148, 2
      %v2425 = vsel %vm1502, %v2423, %v2424
      %v2426 = vrot.slane %v2149, 2
      %v2427 = vsel %vm1502, %v2424, %v2426
      %v2428 = vrot.slane %v2150, 2
      %v2429 = vsel %vm1502, %v2426, %v2428
      %v2430 = vrot.slane %v2151, 2
      %v2431 = vsel %vm1502, %v2428, %v2430
      %v2432 = vrot.slane %v2152, 2
      %v2433 = vsel %vm1502, %v2430, %v2432
      %v2434 = vrot.slane %v2153, 2
      %v2435 = vsel %vm1502, %v2432, %v2434
      %v2436 = vrot.slane %v2154, 2
      %v2437 = vsel %vm1502, %v2434, %v2436
      %v2438 = vrot.slane %v2155, 2
      %v2439 = vsel %vm1502, %v2436, %v2438
      %v2440 = vrot.slane %v2156, 2
      %v2441 = vsel %vm1502, %v2438, %v2440
      %v2442 = vrot.slane %v2157, 2
      %v2443 = vsel %vm1502, %v2440, %v2442
      %v2444 = vrot.slane %v2158, 2
      %v2445 = vsel %vm1502, %v2442, %v2444
      %v2446 = vrot.slane %v2422, 2
      %v2447 = vsel %vm1502, %v2444, %v2446
      %v2476 = vunpack.c.l.b16 %v2401
      %v2477 = vunpack.c.l.b16 %v2402
      %v2478 = vunpack.c.l.b16 %v2403
      %v2479 = vunpack.c.l.b16 %v2404
      %v2480 = vunpack.c.l.b16 %v2405
      %v2481 = vunpack.c.l.b16 %v2406
      %v2482 = vunpack.c.l.b16 %v2407
      %v2483 = vunpack.c.l.b16 %v2408
      %v2484 = vunpack.c.l.b16 %v2409
      %v2485 = vunpack.c.l.b16 %v2410
      %v2486 = vunpack.c.l.b16 %v2411
      %v2487 = vunpack.c.l.b16 %v2412
      %v2488 = vunpack.c.l.b16 %v2413
      %v2489 = vunpack.c.l.b16 %v2414
      %v2490 = vunpack.c.l.b16 %v2415
      %v2491 = vunpack.c.l.b16 %v2416
      %v2492 = vpack.c.b16 %v2477, %v2476
      %v2493 = vpack.c.b16 %v2479, %v2478
      %v2494 = vpack.c.b16 %v2481, %v2480
      %v2495 = vpack.c.b16 %v2483, %v2482
      %v2496 = vpack.c.b16 %v2485, %v2484
      %v2497 = vpack.c.b16 %v2487, %v2486
      %v2498 = vpack.c.b16 %v2489, %v2488
      %v2499 = vpack.c.b16 %v2491, %v2490
      %2508 = vmatprep.subr.bf16.mxu0 0
      %2509 = vmatpush1.bf16.msra.mxu0 %v2492
      %2510 = vmatprep.subr.bf16.mxu0 0
      %2511 = vmatpush1.bf16.msra.mxu0 %v2493
      %2512 = vmatprep.subr.bf16.mxu0 0
      %2513 = vmatpush1.bf16.msra.mxu0 %v2494
      %2514 = vmatprep.subr.bf16.mxu0 0
      %2515 = vmatpush1.bf16.msra.mxu0 %v2495
      %2516 = vmatprep.subr.bf16.mxu0 0
      %2517 = vmatpush1.bf16.msra.mxu0 %v2496
      %2518 = vmatprep.subr.bf16.mxu0 0
      %2519 = vmatpush1.bf16.msra.mxu0 %v2497
      %2520 = vmatprep.subr.bf16.mxu0 0
      %2521 = vmatpush1.bf16.msra.mxu0 %v2498
      %2522 = vmatprep.subr.bf16.mxu0 0
      %2523 = vmatpush1.bf16.msra.mxu0 %v2499
      %2524 = vmatprep.subr.bf16.mxu0 0
      %2525 = vmatpush1.bf16.msra.mxu0 0
      %2526 = vmatprep.subr.bf16.mxu0 0
      %2527 = vmatpush1.bf16.msra.mxu0 0
      %2528 = vmatprep.subr.bf16.mxu0 0
      %2529 = vmatpush1.bf16.msra.mxu0 0
      %2530 = vmatprep.subr.bf16.mxu0 0
      %2531 = vmatpush1.bf16.msra.mxu0 0
      %2532 = vmatprep.subr.bf16.mxu0 0
      %2533 = vmatpush1.bf16.msra.mxu0 0
      %2534 = vmatprep.subr.bf16.mxu0 0
      %2535 = vmatpush1.bf16.msra.mxu0 0
      %2536 = vmatprep.subr.bf16.mxu0 0
      %2537 = vmatpush1.bf16.msra.mxu0 0
      %2538 = vmatprep.subr.bf16.mxu0 0
      %2539 = vmatpush1.bf16.msra.mxu0 0
      %2540 = vmatprep.mubr.bf16.mxu0 0
      %2541 = vmatmul.mubr.bf16.gmra.mrb[0].mxu0 %v2425
      %v2542 = vpop.f32.mrb[0].mxu0
      %v2543 = vadd.f32 0.0, %v2542
      %v2544 = vpop.f32.mrb[0].mxu0
      %v2545 = vpop.f32.mrb[0].mxu0
      %v2546 = vadd.f32 0.0, %v2545
      %v2547 = vpop.f32.mrb[0].mxu0
      %2548 = vmatprep.mubr.bf16.mxu0 0
      %2549 = vmatmul.mubr.bf16.gmra.mrb[0].mxu0 %v2427
      %v2550 = vpop.f32.mrb[0].mxu0
      %v2551 = vadd.f32 0.0, %v2550
      %v2552 = vpop.f32.mrb[0].mxu0
      %v2553 = vpop.f32.mrb[0].mxu0
      %v2554 = vadd.f32 0.0, %v2553
      %v2555 = vpop.f32.mrb[0].mxu0
      %2556 = vmatprep.mubr.bf16.mxu0 0
      %2557 = vmatmul.mubr.bf16.gmra.mrb[0].mxu0 %v2429
      %v2558 = vpop.f32.mrb[0].mxu0
      %v2559 = vadd.f32 0.0, %v2558
      %v2560 = vpop.f32.mrb[0].mxu0
      %v2561 = vpop.f32.mrb[0].mxu0
      %v2562 = vadd.f32 0.0, %v2561
      %v2563 = vpop.f32.mrb[0].mxu0
      %2564 = vmatprep.mubr.bf16.mxu0 0
      %2565 = vmatmul.mubr.bf16.gmra.mrb[0].mxu0 %v2431
      %v2566 = vpop.f32.mrb[0].mxu0
      %v2567 = vadd.f32 0.0, %v2566
      %v2568 = vpop.f32.mrb[0].mxu0
      %v2569 = vpop.f32.mrb[0].mxu0
      %v2570 = vadd.f32 0.0, %v2569
      %v2571 = vpop.f32.mrb[0].mxu0
      %2572 = vmatprep.mubr.bf16.mxu0 0
      %2573 = vmatmul.mubr.bf16.gmra.mrb[0].mxu0 %v2433
      %v2574 = vpop.f32.mrb[0].mxu0
      %v2575 = vadd.f32 0.0, %v2574
      %v2576 = vpop.f32.mrb[0].mxu0
      %v2577 = vpop.f32.mrb[0].mxu0
      %v2578 = vadd.f32 0.0, %v2577
      %v2579 = vpop.f32.mrb[0].mxu0
      %2580 = vmatprep.mubr.bf16.mxu0 0
      %2581 = vmatmul.mubr.bf16.gmra.mrb[0].mxu0 %v2435
      %v2582 = vpop.f32.mrb[0].mxu0
      %v2583 = vadd.f32 0.0, %v2582
      %v2584 = vpop.f32.mrb[0].mxu0
      %v2585 = vpop.f32.mrb[0].mxu0
      %v2586 = vadd.f32 0.0, %v2585
      %v2587 = vpop.f32.mrb[0].mxu0
      %2588 = vmatprep.mubr.bf16.mxu0 0
      %2589 = vmatmul.mubr.bf16.gmra.mrb[0].mxu0 %v2437
      %v2590 = vpop.f32.mrb[0].mxu0
      %v2591 = vadd.f32 0.0, %v2590
      %v2592 = vpop.f32.mrb[0].mxu0
      %v2593 = vpop.f32.mrb[0].mxu0
      %v2594 = vadd.f32 0.0, %v2593
      %v2595 = vpop.f32.mrb[0].mxu0
      %2596 = vmatprep.mubr.bf16.mxu0 0
      %2597 = vmatmul.mubr.bf16.gmra.mrb[0].mxu0 %v2439
      %v2598 = vpop.f32.mrb[0].mxu0
      %v2599 = vadd.f32 0.0, %v2598
      %v2600 = vpop.f32.mrb[0].mxu0
      %v2601 = vpop.f32.mrb[0].mxu0
      %v2602 = vadd.f32 0.0, %v2601
      %v2603 = vpop.f32.mrb[0].mxu0
      %2604 = vmatprep.mubr.bf16.mxu0 0
      %2605 = vmatmul.mubr.bf16.gmra.mrb[0].mxu0 %v2441
      %v2606 = vpop.f32.mrb[0].mxu0
      %v2607 = vadd.f32 0.0, %v2606
      %v2608 = vpop.f32.mrb[0].mxu0
      %v2609 = vpop.f32.mrb[0].mxu0
      %v2610 = vadd.f32 0.0, %v2609
      %v2611 = vpop.f32.mrb[0].mxu0
      %2612 = vmatprep.mubr.bf16.mxu0 0
      %2613 = vmatmul.mubr.bf16.gmra.mrb[0].mxu0 %v2443
      %v2614 = vpop.f32.mrb[0].mxu0
      %v2615 = vadd.f32 0.0, %v2614
      %v2616 = vpop.f32.mrb[0].mxu0
      %v2617 = vpop.f32.mrb[0].mxu0
      %v2618 = vadd.f32 0.0, %v2617
      %v2619 = vpop.f32.mrb[0].mxu0
      %2620 = vmatprep.mubr.bf16.mxu0 0
      %2621 = vmatmul.mubr.bf16.gmra.mrb[0].mxu0 %v2445
      %v2622 = vpop.f32.mrb[0].mxu0
      %v2623 = vadd.f32 0.0, %v2622
      %v2624 = vpop.f32.mrb[0].mxu0
      %v2625 = vpop.f32.mrb[0].mxu0
      %v2626 = vadd.f32 0.0, %v2625
      %v2627 = vpop.f32.mrb[0].mxu0
      %2628 = vmatprep.mubr.bf16.mxu0 0
      %2629 = vmatmul.mubr.bf16.gmra.mrb[0].mxu0 %v2447
      %v2630 = vpop.f32.mrb[0].mxu0
      %v2631 = vadd.f32 0.0, %v2630
      %v2632 = vpop.f32.mrb[0].mxu0
      %v2633 = vpop.f32.mrb[0].mxu0
      %v2634 = vadd.f32 0.0, %v2633
      %v2635 = vpop.f32.mrb[0].mxu0
      %2636 = vdwg.mxu0
      %v2637 = vadd.f32 %v2374, %v2543
      %v2638 = vadd.f32 %v2375, %v2546
      %v2639 = vadd.f32 %v2376, %v2551
      %v2640 = vadd.f32 %v2377, %v2554
      %v2641 = vadd.f32 %v2378, %v2559
      %v2642 = vadd.f32 %v2379, %v2562
      %v2643 = vadd.f32 %v2380, %v2567
      %v2644 = vadd.f32 %v2381, %v2570
      %v2645 = vadd.f32 %v2382, %v2575
      %v2646 = vadd.f32 %v2383, %v2578
      %v2647 = vadd.f32 %v2384, %v2583
      %v2648 = vadd.f32 %v2385, %v2586
      %v2649 = vadd.f32 %v2386, %v2591
      %v2650 = vadd.f32 %v2387, %v2594
      %v2651 = vadd.f32 %v2388, %v2599
      %v2652 = vadd.f32 %v2389, %v2602
      %v2653 = vadd.f32 %v2390, %v2607
      %v2654 = vadd.f32 %v2391, %v2610
      %v2655 = vadd.f32 %v2392, %v2615
      %v2656 = vadd.f32 %v2393, %v2618
      %v2657 = vadd.f32 %v2394, %v2623
      %v2658 = vadd.f32 %v2395, %v2626
      %v2659 = vadd.f32 %v2396, %v2631
      %v2660 = vadd.f32 %v2397, %v2634
      %v2661 = vld [vmem:[#allocation2 + $0x30] sm:$0xf]
      %v2662 = vld [vmem:[#allocation2 + $0x34] sm:$0xf]
      %v2663 = vld [vmem:[#allocation2 + $0x38] sm:$0xf]
      %v2664 = vld [vmem:[#allocation2 + $0x3c] sm:$0xf]
      %v2665 = vld [vmem:[#allocation2 + $0x40] sm:$0xf]
      %v2666 = vld [vmem:[#allocation2 + $0x44] sm:$0xf]
      %v2667 = vld [vmem:[#allocation2 + $0x48] sm:$0xf]
      %v2668 = vld [vmem:[#allocation2 + $0x4c] sm:$0xf]
      %v2669 = vld [vmem:[#allocation2 + $0x50] sm:$0xf]
      %v2670 = vld [vmem:[#allocation2 + $0x54] sm:$0xf]
      %v2671 = vld [vmem:[#allocation2 + $0x58] sm:$0xf]
      %v2672 = vld [vmem:[#allocation2 + $0x5c] sm:$0xf]
      %v2673 = vld [vmem:[#allocation2 + $0x60] sm:$0xf]
      %v2674 = vld [vmem:[#allocation2 + $0x64] sm:$0xf]
      %v2675 = vld [vmem:[#allocation2 + $0x68] sm:$0xf]
      %v2676 = vld [vmem:[#allocation2 + $0x6c] sm:$0xf]
      %v2677 = vld [vmem:[#allocation2 + $0x70] sm:$0xf]
      %v2678 = vld [vmem:[#allocation2 + $0x74] sm:$0xf]
      %v2679 = vld [vmem:[#allocation2 + $0x78] sm:$0xf]
      %v2680 = vld [vmem:[#allocation2 + $0x7c] sm:$0xf]
      %v2681 = vld [vmem:[#allocation2 + $0x80] sm:$0xf]
      %v2682 = vld [vmem:[#allocation2 + $0x84] sm:$0xf]
      %v2683 = vld [vmem:[#allocation2 + $0x88] sm:$0xf]
      %v2684 = vld [vmem:[#allocation2 + $0x8c] sm:$0xf]
      %s2685 = scalar_lea.vmem %s4, 384
      %v2686 = vld [vmem:[%s2685] sm:$0xf]
      %v2687 = vld [vmem:[%s2685 + $0x4] sm:$0xf]
      %v2688 = vld [vmem:[%s2685 + $0x8] sm:$0xf]
      %v2689 = vld [vmem:[%s2685 + $0xc] sm:$0xf]
      %v2690 = vld [vmem:[%s2685 + $0x10] sm:$0xf]
      %v2691 = vld [vmem:[%s2685 + $0x14] sm:$0xf]
      %v2692 = vld [vmem:[%s2685 + $0x18] sm:$0xf]
      %v2693 = vld [vmem:[%s2685 + $0x1c] sm:$0xf]
      %v2694 = vld [vmem:[%s2685 + $0x20] sm:$0xf]
      %v2695 = vld [vmem:[%s2685 + $0x24] sm:$0xf]
      %v2696 = vld [vmem:[%s2685 + $0x28] sm:$0xf]
      %v2697 = vld [vmem:[%s2685 + $0x2c] sm:$0xf]
      %v2698 = vld [vmem:[%s2685 + $0x30] sm:$0xf]
      %v2699 = vld [vmem:[%s2685 + $0x34] sm:$0xf]
      %v2700 = vld [vmem:[%s2685 + $0x38] sm:$0xf]
      %v2701 = vld [vmem:[%s2685 + $0x3c] sm:$0xf]
      %v2726 = vunpack.c.l.b16 %v2661
      %v2727 = vunpack.c.l.b16 %v2662
      %v2728 = vunpack.c.l.b16 %v2663
      %v2729 = vunpack.c.l.b16 %v2664
      %v2730 = vunpack.c.l.b16 %v2665
      %v2731 = vunpack.c.l.b16 %v2666
      %v2732 = vunpack.c.l.b16 %v2667
      %v2733 = vunpack.c.l.b16 %v2668
      %v2734 = vunpack.c.l.b16 %v2669
      %v2735 = vunpack.c.l.b16 %v2670
      %v2736 = vunpack.c.l.b16 %v2671
      %v2737 = vunpack.c.l.b16 %v2672
      %v2738 = vunpack.c.l.b16 %v2673
      %v2739 = vunpack.c.l.b16 %v2674
      %v2740 = vunpack.c.l.b16 %v2675
      %v2741 = vunpack.c.l.b16 %v2676
      %v2742 = vunpack.c.l.b16 %v2677
      %v2743 = vunpack.c.l.b16 %v2678
      %v2744 = vunpack.c.l.b16 %v2679
      %v2745 = vunpack.c.l.b16 %v2680
      %v2746 = vunpack.c.l.b16 %v2681
      %v2747 = vunpack.c.l.b16 %v2682
      %v2748 = vunpack.c.l.b16 %v2683
      %v2749 = vunpack.c.l.b16 %v2684
      %v2750 = vpack.c.b16 %v2727, %v2726
      %v2751 = vpack.c.b16 %v2729, %v2728
      %v2752 = vpack.c.b16 %v2731, %v2730
      %v2753 = vpack.c.b16 %v2733, %v2732
      %v2754 = vpack.c.b16 %v2735, %v2734
      %v2755 = vpack.c.b16 %v2737, %v2736
      %v2756 = vpack.c.b16 %v2739, %v2738
      %v2757 = vpack.c.b16 %v2741, %v2740
      %v2758 = vpack.c.b16 %v2743, %v2742
      %v2759 = vpack.c.b16 %v2745, %v2744
      %v2760 = vpack.c.b16 %v2747, %v2746
      %v2761 = vpack.c.b16 %v2749, %v2748
      %v2790 = vunpack.c.l.b16 %v2686
      %v2791 = vunpack.c.l.b16 %v2687
      %v2792 = vunpack.c.l.b16 %v2688
      %v2793 = vunpack.c.l.b16 %v2689
      %v2794 = vunpack.c.l.b16 %v2690
      %v2795 = vunpack.c.l.b16 %v2691
      %v2796 = vunpack.c.l.b16 %v2692
      %v2797 = vunpack.c.l.b16 %v2693
      %v2798 = vunpack.c.l.b16 %v2694
      %v2799 = vunpack.c.l.b16 %v2695
      %v2800 = vunpack.c.l.b16 %v2696
      %v2801 = vunpack.c.l.b16 %v2697
      %v2802 = vunpack.c.l.b16 %v2698
      %v2803 = vunpack.c.l.b16 %v2699
      %v2804 = vunpack.c.l.b16 %v2700
      %v2805 = vunpack.c.l.b16 %v2701
      %v2806 = vpack.c.b16 %v2791, %v2790
      %v2807 = vpack.c.b16 %v2793, %v2792
      %v2808 = vpack.c.b16 %v2795, %v2794
      %v2809 = vpack.c.b16 %v2797, %v2796
      %v2810 = vpack.c.b16 %v2799, %v2798
      %v2811 = vpack.c.b16 %v2801, %v2800
      %v2812 = vpack.c.b16 %v2803, %v2802
      %v2813 = vpack.c.b16 %v2805, %v2804
      %2822 = vmatprep.subr.bf16.mxu0 0
      %2823 = vmatpush1.bf16.msra.mxu0 %v2806
      %2824 = vmatprep.subr.bf16.mxu0 0
      %2825 = vmatpush1.bf16.msra.mxu0 %v2807
      %2826 = vmatprep.subr.bf16.mxu0 0
      %2827 = vmatpush1.bf16.msra.mxu0 %v2808
      %2828 = vmatprep.subr.bf16.mxu0 0
      %2829 = vmatpush1.bf16.msra.mxu0 %v2809
      %2830 = vmatprep.subr.bf16.mxu0 0
      %2831 = vmatpush1.bf16.msra.mxu0 %v2810
      %2832 = vmatprep.subr.bf16.mxu0 0
      %2833 = vmatpush1.bf16.msra.mxu0 %v2811
      %2834 = vmatprep.subr.bf16.mxu0 0
      %2835 = vmatpush1.bf16.msra.mxu0 %v2812
      %2836 = vmatprep.subr.bf16.mxu0 0
      %2837 = vmatpush1.bf16.msra.mxu0 %v2813
      %2838 = vmatprep.subr.bf16.mxu0 0
      %2839 = vmatpush1.bf16.msra.mxu0 0
      %2840 = vmatprep.subr.bf16.mxu0 0
      %2841 = vmatpush1.bf16.msra.mxu0 0
      %2842 = vmatprep.subr.bf16.mxu0 0
      %2843 = vmatpush1.bf16.msra.mxu0 0
      %2844 = vmatprep.subr.bf16.mxu0 0
      %2845 = vmatpush1.bf16.msra.mxu0 0
      %2846 = vmatprep.subr.bf16.mxu0 0
      %2847 = vmatpush1.bf16.msra.mxu0 0
      %2848 = vmatprep.subr.bf16.mxu0 0
      %2849 = vmatpush1.bf16.msra.mxu0 0
      %2850 = vmatprep.subr.bf16.mxu0 0
      %2851 = vmatpush1.bf16.msra.mxu0 0
      %2852 = vmatprep.subr.bf16.mxu0 0
      %2853 = vmatpush1.bf16.msra.mxu0 0
      %2854 = vmatprep.mubr.bf16.mxu0 0
      %2855 = vmatmul.mubr.bf16.gmra.mrb[0].mxu0 %v2750
      %v2856 = vpop.f32.mrb[0].mxu0
      %v2857 = vadd.f32 0.0, %v2856
      %v2858 = vpop.f32.mrb[0].mxu0
      %v2859 = vpop.f32.mrb[0].mxu0
      %v2860 = vadd.f32 0.0, %v2859
      %v2861 = vpop.f32.mrb[0].mxu0
      %2862 = vmatprep.mubr.bf16.mxu0 0
      %2863 = vmatmul.mubr.bf16.gmra.mrb[0].mxu0 %v2751
      %v2864 = vpop.f32.mrb[0].mxu0
      %v2865 = vadd.f32 0.0, %v2864
      %v2866 = vpop.f32.mrb[0].mxu0
      %v2867 = vpop.f32.mrb[0].mxu0
      %v2868 = vadd.f32 0.0, %v2867
      %v2869 = vpop.f32.mrb[0].mxu0
      %2870 = vmatprep.mubr.bf16.mxu0 0
      %2871 = vmatmul.mubr.bf16.gmra.mrb[0].mxu0 %v2752
      %v2872 = vpop.f32.mrb[0].mxu0
      %v2873 = vadd.f32 0.0, %v2872
      %v2874 = vpop.f32.mrb[0].mxu0
      %v2875 = vpop.f32.mrb[0].mxu0
      %v2876 = vadd.f32 0.0, %v2875
      %v2877 = vpop.f32.mrb[0].mxu0
      %2878 = vmatprep.mubr.bf16.mxu0 0
      %2879 = vmatmul.mubr.bf16.gmra.mrb[0].mxu0 %v2753
      %v2880 = vpop.f32.mrb[0].mxu0
      %v2881 = vadd.f32 0.0, %v2880
      %v2882 = vpop.f32.mrb[0].mxu0
      %v2883 = vpop.f32.mrb[0].mxu0
      %v2884 = vadd.f32 0.0, %v2883
      %v2885 = vpop.f32.mrb[0].mxu0
      %2886 = vmatprep.mubr.bf16.mxu0 0
      %2887 = vmatmul.mubr.bf16.gmra.mrb[0].mxu0 %v2754
      %v2888 = vpop.f32.mrb[0].mxu0
      %v2889 = vadd.f32 0.0, %v2888
      %v2890 = vpop.f32.mrb[0].mxu0
      %v2891 = vpop.f32.mrb[0].mxu0
      %v2892 = vadd.f32 0.0, %v2891
      %v2893 = vpop.f32.mrb[0].mxu0
      %2894 = vmatprep.mubr.bf16.mxu0 0
      %2895 = vmatmul.mubr.bf16.gmra.mrb[0].mxu0 %v2755
      %v2896 = vpop.f32.mrb[0].mxu0
      %v2897 = vadd.f32 0.0, %v2896
      %v2898 = vpop.f32.mrb[0].mxu0
      %v2899 = vpop.f32.mrb[0].mxu0
      %v2900 = vadd.f32 0.0, %v2899
      %v2901 = vpop.f32.mrb[0].mxu0
      %2902 = vmatprep.mubr.bf16.mxu0 0
      %2903 = vmatmul.mubr.bf16.gmra.mrb[0].mxu0 %v2756
      %v2904 = vpop.f32.mrb[0].mxu0
      %v2905 = vadd.f32 0.0, %v2904
      %v2906 = vpop.f32.mrb[0].mxu0
      %v2907 = vpop.f32.mrb[0].mxu0
      %v2908 = vadd.f32 0.0, %v2907
      %v2909 = vpop.f32.mrb[0].mxu0
      %2910 = vmatprep.mubr.bf16.mxu0 0
      %2911 = vmatmul.mubr.bf16.gmra.mrb[0].mxu0 %v2757
      %v2912 = vpop.f32.mrb[0].mxu0
      %v2913 = vadd.f32 0.0, %v2912
      %v2914 = vpop.f32.mrb[0].mxu0
      %v2915 = vpop.f32.mrb[0].mxu0
      %v2916 = vadd.f32 0.0, %v2915
      %v2917 = vpop.f32.mrb[0].mxu0
      %2918 = vmatprep.mubr.bf16.mxu0 0
      %2919 = vmatmul.mubr.bf16.gmra.mrb[0].mxu0 %v2758
      %v2920 = vpop.f32.mrb[0].mxu0
      %v2921 = vadd.f32 0.0, %v2920
      %v2922 = vpop.f32.mrb[0].mxu0
      %v2923 = vpop.f32.mrb[0].mxu0
      %v2924 = vadd.f32 0.0, %v2923
      %v2925 = vpop.f32.mrb[0].mxu0
      %2926 = vmatprep.mubr.bf16.mxu0 0
      %2927 = vmatmul.mubr.bf16.gmra.mrb[0].mxu0 %v2759
      %v2928 = vpop.f32.mrb[0].mxu0
      %v2929 = vadd.f32 0.0, %v2928
      %v2930 = vpop.f32.mrb[0].mxu0
      %v2931 = vpop.f32.mrb[0].mxu0
      %v2932 = vadd.f32 0.0, %v2931
      %v2933 = vpop.f32.mrb[0].mxu0
      %2934 = vmatprep.mubr.bf16.mxu0 0
      %2935 = vmatmul.mubr.bf16.gmra.mrb[0].mxu0 %v2760
      %v2936 = vpop.f32.mrb[0].mxu0
      %v2937 = vadd.f32 0.0, %v2936
      %v2938 = vpop.f32.mrb[0].mxu0
      %v2939 = vpop.f32.mrb[0].mxu0
      %v2940 = vadd.f32 0.0, %v2939
      %v2941 = vpop.f32.mrb[0].mxu0
      %2942 = vmatprep.mubr.bf16.mxu0 0
      %2943 = vmatmul.mubr.bf16.gmra.mrb[0].mxu0 %v2761
      %v2944 = vpop.f32.mrb[0].mxu0
      %v2945 = vadd.f32 0.0, %v2944
      %v2946 = vpop.f32.mrb[0].mxu0
      %v2947 = vpop.f32.mrb[0].mxu0
      %v2948 = vadd.f32 0.0, %v2947
      %v2949 = vpop.f32.mrb[0].mxu0
      %2950 = vdwg.mxu0
      %v2951 = vadd.f32 %v2637, %v2857
      %v2952 = vadd.f32 %v2638, %v2860
      %v2953 = vadd.f32 %v2639, %v2865
      %v2954 = vadd.f32 %v2640, %v2868
      %v2955 = vadd.f32 %v2641, %v2873
      %v2956 = vadd.f32 %v2642, %v2876
      %v2957 = vadd.f32 %v2643, %v2881
      %v2958 = vadd.f32 %v2644, %v2884
      %v2959 = vadd.f32 %v2645, %v2889
      %v2960 = vadd.f32 %v2646, %v2892
      %v2961 = vadd.f32 %v2647, %v2897
      %v2962 = vadd.f32 %v2648, %v2900
      %v2963 = vadd.f32 %v2649, %v2905
      %v2964 = vadd.f32 %v2650, %v2908
      %v2965 = vadd.f32 %v2651, %v2913
      %v2966 = vadd.f32 %v2652, %v2916
      %v2967 = vadd.f32 %v2653, %v2921
      %v2968 = vadd.f32 %v2654, %v2924
      %v2969 = vadd.f32 %v2655, %v2929
      %v2970 = vadd.f32 %v2656, %v2932
      %v2971 = vadd.f32 %v2657, %v2937
      %v2972 = vadd.f32 %v2658, %v2940
      %v2973 = vadd.f32 %v2659, %v2945
      %v2974 = vadd.f32 %v2660, %v2948
      %v2975 = vld [vmem:[#allocation2 + $0x30] sm:$0xe]
      %v2976 = vld [vmem:[#allocation2 + $0x34] sm:$0xf]
      %v2977 = vld [vmem:[#allocation2 + $0x38] sm:$0xf]
      %v2978 = vld [vmem:[#allocation2 + $0x3c] sm:$0xf]
      %v2979 = vld [vmem:[#allocation2 + $0x40] sm:$0xf]
      %v2980 = vld [vmem:[#allocation2 + $0x44] sm:$0xf]
      %v2981 = vld [vmem:[#allocation2 + $0x48] sm:$0xf]
      %v2982 = vld [vmem:[#allocation2 + $0x4c] sm:$0xf]
      %v2983 = vld [vmem:[#allocation2 + $0x50] sm:$0xf]
      %v2984 = vld [vmem:[#allocation2 + $0x54] sm:$0xf]
      %v2985 = vld [vmem:[#allocation2 + $0x58] sm:$0xf]
      %v2986 = vld [vmem:[#allocation2 + $0x5c] sm:$0xf]
      %v2987 = vld [vmem:[#allocation2 + $0x60] sm:$0xf]
      %v2988 = vld [vmem:[#allocation2 + $0x64] sm:$0xf]
      %v2989 = vld [vmem:[#allocation2 + $0x68] sm:$0xf]
      %v2990 = vld [vmem:[#allocation2 + $0x6c] sm:$0xf]
      %v2991 = vld [vmem:[#allocation2 + $0x70] sm:$0xf]
      %v2992 = vld [vmem:[#allocation2 + $0x74] sm:$0xf]
      %v2993 = vld [vmem:[#allocation2 + $0x78] sm:$0xf]
      %v2994 = vld [vmem:[#allocation2 + $0x7c] sm:$0xf]
      %v2995 = vld [vmem:[#allocation2 + $0x80] sm:$0xf]
      %v2996 = vld [vmem:[#allocation2 + $0x84] sm:$0xf]
      %v2997 = vld [vmem:[#allocation2 + $0x88] sm:$0xf]
      %v2998 = vld [vmem:[#allocation2 + $0x8c] sm:$0xf]
      %v2999 = vld [vmem:[#allocation2 + $0x90] sm:$0x1]
      %s3000 = scalar_lea.vmem %s4, 448
      %v3001 = vld [vmem:[%s3000] sm:$0xf]
      %v3002 = vld [vmem:[%s3000 + $0x4] sm:$0xf]
      %v3003 = vld [vmem:[%s3000 + $0x8] sm:$0xf]
      %v3004 = vld [vmem:[%s3000 + $0xc] sm:$0xf]
      %v3005 = vld [vmem:[%s3000 + $0x10] sm:$0xf]
      %v3006 = vld [vmem:[%s3000 + $0x14] sm:$0xf]
      %v3007 = vld [vmem:[%s3000 + $0x18] sm:$0xf]
      %v3008 = vld [vmem:[%s3000 + $0x1c] sm:$0xf]
      %v3009 = vld [vmem:[%s3000 + $0x20] sm:$0xf]
      %v3010 = vld [vmem:[%s3000 + $0x24] sm:$0xf]
      %v3011 = vld [vmem:[%s3000 + $0x28] sm:$0xf]
      %v3012 = vld [vmem:[%s3000 + $0x2c] sm:$0xf]
      %v3013 = vld [vmem:[%s3000 + $0x30] sm:$0xf]
      %v3014 = vld [vmem:[%s3000 + $0x34] sm:$0xf]
      %v3015 = vld [vmem:[%s3000 + $0x38] sm:$0xf]
      %v3016 = vld [vmem:[%s3000 + $0x3c] sm:$0xf]
      %v3042 = vunpack.c.l.b16 %v2975
      %v3043 = vunpack.c.l.b16 %v2976
      %v3044 = vunpack.c.l.b16 %v2977
      %v3045 = vunpack.c.l.b16 %v2978
      %v3046 = vunpack.c.l.b16 %v2979
      %v3047 = vunpack.c.l.b16 %v2980
      %v3048 = vunpack.c.l.b16 %v2981
      %v3049 = vunpack.c.l.b16 %v2982
      %v3050 = vunpack.c.l.b16 %v2983
      %v3051 = vunpack.c.l.b16 %v2984
      %v3052 = vunpack.c.l.b16 %v2985
      %v3053 = vunpack.c.l.b16 %v2986
      %v3054 = vunpack.c.l.b16 %v2987
      %v3055 = vunpack.c.l.b16 %v2988
      %v3056 = vunpack.c.l.b16 %v2989
      %v3057 = vunpack.c.l.b16 %v2990
      %v3058 = vunpack.c.l.b16 %v2991
      %v3059 = vunpack.c.l.b16 %v2992
      %v3060 = vunpack.c.l.b16 %v2993
      %v3061 = vunpack.c.l.b16 %v2994
      %v3062 = vunpack.c.l.b16 %v2995
      %v3063 = vunpack.c.l.b16 %v2996
      %v3064 = vunpack.c.l.b16 %v2997
      %v3065 = vunpack.c.l.b16 %v2998
      %v3066 = vunpack.c.l.b16 %v2999
      %v3067 = vpack.c.b16 %v3043, %v3042
      %v3068 = vpack.c.b16 %v3045, %v3044
      %v3069 = vpack.c.b16 %v3047, %v3046
      %v3070 = vpack.c.b16 %v3049, %v3048
      %v3071 = vpack.c.b16 %v3051, %v3050
      %v3072 = vpack.c.b16 %v3053, %v3052
      %v3073 = vpack.c.b16 %v3055, %v3054
      %v3074 = vpack.c.b16 %v3057, %v3056
      %v3075 = vpack.c.b16 %v3059, %v3058
      %v3076 = vpack.c.b16 %v3061, %v3060
      %v3077 = vpack.c.b16 %v3063, %v3062
      %v3078 = vpack.c.b16 %v3065, %v3064
      %v3079 = vpack.c.b16 %v3066, %v3066
      %v3080 = vrot.slane %v3067, 1
      %v3081 = vrot.slane %v3068, 1
      %v3082 = vsel %vm1070, %v3080, %v3081
      %v3083 = vrot.slane %v3069, 1
      %v3084 = vsel %vm1070, %v3081, %v3083
      %v3085 = vrot.slane %v3070, 1
      %v3086 = vsel %vm1070, %v3083, %v3085
      %v3087 = vrot.slane %v3071, 1
      %v3088 = vsel %vm1070, %v3085, %v3087
      %v3089 = vrot.slane %v3072, 1
      %v3090 = vsel %vm1070, %v3087, %v3089
      %v3091 = vrot.slane %v3073, 1
      %v3092 = vsel %vm1070, %v3089, %v3091
      %v3093 = vrot.slane %v3074, 1
      %v3094 = vsel %vm1070, %v3091, %v3093
      %v3095 = vrot.slane %v3075, 1
      %v3096 = vsel %vm1070, %v3093, %v3095
      %v3097 = vrot.slane %v3076, 1
      %v3098 = vsel %vm1070, %v3095, %v3097
      %v3099 = vrot.slane %v3077, 1
      %v3100 = vsel %vm1070, %v3097, %v3099
      %v3101 = vrot.slane %v3078, 1
      %v3102 = vsel %vm1070, %v3099, %v3101
      %v3103 = vrot.slane %v3079, 1
      %v3104 = vsel %vm1070, %v3101, %v3103
      %v3133 = vunpack.c.l.b16 %v3001
      %v3134 = vunpack.c.l.b16 %v3002
      %v3135 = vunpack.c.l.b16 %v3003
      %v3136 = vunpack.c.l.b16 %v3004
      %v3137 = vunpack.c.l.b16 %v3005
      %v3138 = vunpack.c.l.b16 %v3006
      %v3139 = vunpack.c.l.b16 %v3007
      %v3140 = vunpack.c.l.b16 %v3008
      %v3141 = vunpack.c.l.b16 %v3009
      %v3142 = vunpack.c.l.b16 %v3010
      %v3143 = vunpack.c.l.b16 %v3011
      %v3144 = vunpack.c.l.b16 %v3012
      %v3145 = vunpack.c.l.b16 %v3013
      %v3146 = vunpack.c.l.b16 %v3014
      %v3147 = vunpack.c.l.b16 %v3015
      %v3148 = vunpack.c.l.b16 %v3016
      %v3149 = vpack.c.b16 %v3134, %v3133
      %v3150 = vpack.c.b16 %v3136, %v3135
      %v3151 = vpack.c.b16 %v3138, %v3137
      %v3152 = vpack.c.b16 %v3140, %v3139
      %v3153 = vpack.c.b16 %v3142, %v3141
      %v3154 = vpack.c.b16 %v3144, %v3143
      %v3155 = vpack.c.b16 %v3146, %v3145
      %v3156 = vpack.c.b16 %v3148, %v3147
      %3165 = vmatprep.subr.bf16.mxu0 0
      %3166 = vmatpush1.bf16.msra.mxu0 %v3149
      %3167 = vmatprep.subr.bf16.mxu0 0
      %3168 = vmatpush1.bf16.msra.mxu0 %v3150
      %3169 = vmatprep.subr.bf16.mxu0 0
      %3170 = vmatpush1.bf16.msra.mxu0 %v3151
      %3171 = vmatprep.subr.bf16.mxu0 0
      %3172 = vmatpush1.bf16.msra.mxu0 %v3152
      %3173 = vmatprep.subr.bf16.mxu0 0
      %3174 = vmatpush1.bf16.msra.mxu0 %v3153
      %3175 = vmatprep.subr.bf16.mxu0 0
      %3176 = vmatpush1.bf16.msra.mxu0 %v3154
      %3177 = vmatprep.subr.bf16.mxu0 0
      %3178 = vmatpush1.bf16.msra.mxu0 %v3155
      %3179 = vmatprep.subr.bf16.mxu0 0
      %3180 = vmatpush1.bf16.msra.mxu0 %v3156
      %3181 = vmatprep.subr.bf16.mxu0 0
      %3182 = vmatpush1.bf16.msra.mxu0 0
      %3183 = vmatprep.subr.bf16.mxu0 0
      %3184 = vmatpush1.bf16.msra.mxu0 0
      %3185 = vmatprep.subr.bf16.mxu0 0
      %3186 = vmatpush1.bf16.msra.mxu0 0
      %3187 = vmatprep.subr.bf16.mxu0 0
      %3188 = vmatpush1.bf16.msra.mxu0 0
      %3189 = vmatprep.subr.bf16.mxu0 0
      %3190 = vmatpush1.bf16.msra.mxu0 0
      %3191 = vmatprep.subr.bf16.mxu0 0
      %3192 = vmatpush1.bf16.msra.mxu0 0
      %3193 = vmatprep.subr.bf16.mxu0 0
      %3194 = vmatpush1.bf16.msra.mxu0 0
      %3195 = vmatprep.subr.bf16.mxu0 0
      %3196 = vmatpush1.bf16.msra.mxu0 0
      %3197 = vmatprep.mubr.bf16.mxu0 0
      %3198 = vmatmul.mubr.bf16.gmra.mrb[0].mxu0 %v3082
      %v3199 = vpop.f32.mrb[0].mxu0
      %v3200 = vadd.f32 0.0, %v3199
      %v3201 = vpop.f32.mrb[0].mxu0
      %v3202 = vpop.f32.mrb[0].mxu0
      %v3203 = vadd.f32 0.0, %v3202
      %v3204 = vpop.f32.mrb[0].mxu0
      %3205 = vmatprep.mubr.bf16.mxu0 0
      %3206 = vmatmul.mubr.bf16.gmra.mrb[0].mxu0 %v3084
      %v3207 = vpop.f32.mrb[0].mxu0
      %v3208 = vadd.f32 0.0, %v3207
      %v3209 = vpop.f32.mrb[0].mxu0
      %v3210 = vpop.f32.mrb[0].mxu0
      %v3211 = vadd.f32 0.0, %v3210
      %v3212 = vpop.f32.mrb[0].mxu0
      %3213 = vmatprep.mubr.bf16.mxu0 0
      %3214 = vmatmul.mubr.bf16.gmra.mrb[0].mxu0 %v3086
      %v3215 = vpop.f32.mrb[0].mxu0
      %v3216 = vadd.f32 0.0, %v3215
      %v3217 = vpop.f32.mrb[0].mxu0
      %v3218 = vpop.f32.mrb[0].mxu0
      %v3219 = vadd.f32 0.0, %v3218
      %v3220 = vpop.f32.mrb[0].mxu0
      %3221 = vmatprep.mubr.bf16.mxu0 0
      %3222 = vmatmul.mubr.bf16.gmra.mrb[0].mxu0 %v3088
      %v3223 = vpop.f32.mrb[0].mxu0
      %v3224 = vadd.f32 0.0, %v3223
      %v3225 = vpop.f32.mrb[0].mxu0
      %v3226 = vpop.f32.mrb[0].mxu0
      %v3227 = vadd.f32 0.0, %v3226
      %v3228 = vpop.f32.mrb[0].mxu0
      %3229 = vmatprep.mubr.bf16.mxu0 0
      %3230 = vmatmul.mubr.bf16.gmra.mrb[0].mxu0 %v3090
      %v3231 = vpop.f32.mrb[0].mxu0
      %v3232 = vadd.f32 0.0, %v3231
      %v3233 = vpop.f32.mrb[0].mxu0
      %v3234 = vpop.f32.mrb[0].mxu0
      %v3235 = vadd.f32 0.0, %v3234
      %v3236 = vpop.f32.mrb[0].mxu0
      %3237 = vmatprep.mubr.bf16.mxu0 0
      %3238 = vmatmul.mubr.bf16.gmra.mrb[0].mxu0 %v3092
      %v3239 = vpop.f32.mrb[0].mxu0
      %v3240 = vadd.f32 0.0, %v3239
      %v3241 = vpop.f32.mrb[0].mxu0
      %v3242 = vpop.f32.mrb[0].mxu0
      %v3243 = vadd.f32 0.0, %v3242
      %v3244 = vpop.f32.mrb[0].mxu0
      %3245 = vmatprep.mubr.bf16.mxu0 0
      %3246 = vmatmul.mubr.bf16.gmra.mrb[0].mxu0 %v3094
      %v3247 = vpop.f32.mrb[0].mxu0
      %v3248 = vadd.f32 0.0, %v3247
      %v3249 = vpop.f32.mrb[0].mxu0
      %v3250 = vpop.f32.mrb[0].mxu0
      %v3251 = vadd.f32 0.0, %v3250
      %v3252 = vpop.f32.mrb[0].mxu0
      %3253 = vmatprep.mubr.bf16.mxu0 0
      %3254 = vmatmul.mubr.bf16.gmra.mrb[0].mxu0 %v3096
      %v3255 = vpop.f32.mrb[0].mxu0
      %v3256 = vadd.f32 0.0, %v3255
      %v3257 = vpop.f32.mrb[0].mxu0
      %v3258 = vpop.f32.mrb[0].mxu0
      %v3259 = vadd.f32 0.0, %v3258
      %v3260 = vpop.f32.mrb[0].mxu0
      %3261 = vmatprep.mubr.bf16.mxu0 0
      %3262 = vmatmul.mubr.bf16.gmra.mrb[0].mxu0 %v3098
      %v3263 = vpop.f32.mrb[0].mxu0
      %v3264 = vadd.f32 0.0, %v3263
      %v3265 = vpop.f32.mrb[0].mxu0
      %v3266 = vpop.f32.mrb[0].mxu0
      %v3267 = vadd.f32 0.0, %v3266
      %v3268 = vpop.f32.mrb[0].mxu0
      %3269 = vmatprep.mubr.bf16.mxu0 0
      %3270 = vmatmul.mubr.bf16.gmra.mrb[0].mxu0 %v3100
      %v3271 = vpop.f32.mrb[0].mxu0
      %v3272 = vadd.f32 0.0, %v3271
      %v3273 = vpop.f32.mrb[0].mxu0
      %v3274 = vpop.f32.mrb[0].mxu0
      %v3275 = vadd.f32 0.0, %v3274
      %v3276 = vpop.f32.mrb[0].mxu0
      %3277 = vmatprep.mubr.bf16.mxu0 0
      %3278 = vmatmul.mubr.bf16.gmra.mrb[0].mxu0 %v3102
      %v3279 = vpop.f32.mrb[0].mxu0
      %v3280 = vadd.f32 0.0, %v3279
      %v3281 = vpop.f32.mrb[0].mxu0
      %v3282 = vpop.f32.mrb[0].mxu0
      %v3283 = vadd.f32 0.0, %v3282
      %v3284 = vpop.f32.mrb[0].mxu0
      %3285 = vmatprep.mubr.bf16.mxu0 0
      %3286 = vmatmul.mubr.bf16.gmra.mrb[0].mxu0 %v3104
      %v3287 = vpop.f32.mrb[0].mxu0
      %v3288 = vadd.f32 0.0, %v3287
      %v3289 = vpop.f32.mrb[0].mxu0
      %v3290 = vpop.f32.mrb[0].mxu0
      %v3291 = vadd.f32 0.0, %v3290
      %v3292 = vpop.f32.mrb[0].mxu0
      %3293 = vdwg.mxu0
      %v3294 = vadd.f32 %v2951, %v3200
      %v3295 = vadd.f32 %v2952, %v3203
      %v3296 = vadd.f32 %v2953, %v3208
      %v3297 = vadd.f32 %v2954, %v3211
      %v3298 = vadd.f32 %v2955, %v3216
      %v3299 = vadd.f32 %v2956, %v3219
      %v3300 = vadd.f32 %v2957, %v3224
      %v3301 = vadd.f32 %v2958, %v3227
      %v3302 = vadd.f32 %v2959, %v3232
      %v3303 = vadd.f32 %v2960, %v3235
      %v3304 = vadd.f32 %v2961, %v3240
      %v3305 = vadd.f32 %v2962, %v3243
      %v3306 = vadd.f32 %v2963, %v3248
      %v3307 = vadd.f32 %v2964, %v3251
      %v3308 = vadd.f32 %v2965, %v3256
      %v3309 = vadd.f32 %v2966, %v3259
      %v3310 = vadd.f32 %v2967, %v3264
      %v3311 = vadd.f32 %v2968, %v3267
      %v3312 = vadd.f32 %v2969, %v3272
      %v3313 = vadd.f32 %v2970, %v3275
      %v3314 = vadd.f32 %v2971, %v3280
      %v3315 = vadd.f32 %v2972, %v3283
      %v3316 = vadd.f32 %v2973, %v3288
      %v3317 = vadd.f32 %v2974, %v3291
      %v3318 = vld [vmem:[#allocation2 + $0x30] sm:$0xc]
      %v3319 = vld [vmem:[#allocation2 + $0x90] sm:$0x3]
      %s3320 = scalar_lea.vmem %s4, 512
      %v3321 = vld [vmem:[%s3320] sm:$0xf]
      %v3322 = vld [vmem:[%s3320 + $0x4] sm:$0xf]
      %v3323 = vld [vmem:[%s3320 + $0x8] sm:$0xf]
      %v3324 = vld [vmem:[%s3320 + $0xc] sm:$0xf]
      %v3325 = vld [vmem:[%s3320 + $0x10] sm:$0xf]
      %v3326 = vld [vmem:[%s3320 + $0x14] sm:$0xf]
      %v3327 = vld [vmem:[%s3320 + $0x18] sm:$0xf]
      %v3328 = vld [vmem:[%s3320 + $0x1c] sm:$0xf]
      %v3329 = vld [vmem:[%s3320 + $0x20] sm:$0xf]
      %v3330 = vld [vmem:[%s3320 + $0x24] sm:$0xf]
      %v3331 = vld [vmem:[%s3320 + $0x28] sm:$0xf]
      %v3332 = vld [vmem:[%s3320 + $0x2c] sm:$0xf]
      %v3333 = vld [vmem:[%s3320 + $0x30] sm:$0xf]
      %v3334 = vld [vmem:[%s3320 + $0x34] sm:$0xf]
      %v3335 = vld [vmem:[%s3320 + $0x38] sm:$0xf]
      %v3336 = vld [vmem:[%s3320 + $0x3c] sm:$0xf]
      %v3339 = vunpack.c.l.b16 %v3318
      %v3340 = vunpack.c.l.b16 %v3319
      %v3341 = vpack.c.b16 %v3043, %v3339
      %v3342 = vpack.c.b16 %v3340, %v3340
      %v3343 = vrot.slane %v3341, 2
      %v3344 = vrot.slane %v3068, 2
      %v3345 = vsel %vm1502, %v3343, %v3344
      %v3346 = vrot.slane %v3069, 2
      %v3347 = vsel %vm1502, %v3344, %v3346
      %v3348 = vrot.slane %v3070, 2
      %v3349 = vsel %vm1502, %v3346, %v3348
      %v3350 = vrot.slane %v3071, 2
      %v3351 = vsel %vm1502, %v3348, %v3350
      %v3352 = vrot.slane %v3072, 2
      %v3353 = vsel %vm1502, %v3350, %v3352
      %v3354 = vrot.slane %v3073, 2
      %v3355 = vsel %vm1502, %v3352, %v3354
      %v3356 = vrot.slane %v3074, 2
      %v3357 = vsel %vm1502, %v3354, %v3356
      %v3358 = vrot.slane %v3075, 2
      %v3359 = vsel %vm1502, %v3356, %v3358
      %v3360 = vrot.slane %v3076, 2
      %v3361 = vsel %vm1502, %v3358, %v3360
      %v3362 = vrot.slane %v3077, 2
      %v3363 = vsel %vm1502, %v3360, %v3362
      %v3364 = vrot.slane %v3078, 2
      %v3365 = vsel %vm1502, %v3362, %v3364
      %v3366 = vrot.slane %v3342, 2
      %v3367 = vsel %vm1502, %v3364, %v3366
      %v3396 = vunpack.c.l.b16 %v3321
      %v3397 = vunpack.c.l.b16 %v3322
      %v3398 = vunpack.c.l.b16 %v3323
      %v3399 = vunpack.c.l.b16 %v3324
      %v3400 = vunpack.c.l.b16 %v3325
      %v3401 = vunpack.c.l.b16 %v3326
      %v3402 = vunpack.c.l.b16 %v3327
      %v3403 = vunpack.c.l.b16 %v3328
      %v3404 = vunpack.c.l.b16 %v3329
      %v3405 = vunpack.c.l.b16 %v3330
      %v3406 = vunpack.c.l.b16 %v3331
      %v3407 = vunpack.c.l.b16 %v3332
      %v3408 = vunpack.c.l.b16 %v3333
      %v3409 = vunpack.c.l.b16 %v3334
      %v3410 = vunpack.c.l.b16 %v3335
      %v3411 = vunpack.c.l.b16 %v3336
      %v3412 = vpack.c.b16 %v3397, %v3396
      %v3413 = vpack.c.b16 %v3399, %v3398
      %v3414 = vpack.c.b16 %v3401, %v3400
      %v3415 = vpack.c.b16 %v3403, %v3402
      %v3416 = vpack.c.b16 %v3405, %v3404
      %v3417 = vpack.c.b16 %v3407, %v3406
      %v3418 = vpack.c.b16 %v3409, %v3408
      %v3419 = vpack.c.b16 %v3411, %v3410
      %3428 = vmatprep.subr.bf16.mxu0 0
      %3429 = vmatpush1.bf16.msra.mxu0 %v3412
      %3430 = vmatprep.subr.bf16.mxu0 0
      %3431 = vmatpush1.bf16.msra.mxu0 %v3413
      %3432 = vmatprep.subr.bf16.mxu0 0
      %3433 = vmatpush1.bf16.msra.mxu0 %v3414
      %3434 = vmatprep.subr.bf16.mxu0 0
      %3435 = vmatpush1.bf16.msra.mxu0 %v3415
      %3436 = vmatprep.subr.bf16.mxu0 0
      %3437 = vmatpush1.bf16.msra.mxu0 %v3416
      %3438 = vmatprep.subr.bf16.mxu0 0
      %3439 = vmatpush1.bf16.msra.mxu0 %v3417
      %3440 = vmatprep.subr.bf16.mxu0 0
      %3441 = vmatpush1.bf16.msra.mxu0 %v3418
      %3442 = vmatprep.subr.bf16.mxu0 0
      %3443 = vmatpush1.bf16.msra.mxu0 %v3419
      %3444 = vmatprep.subr.bf16.mxu0 0
      %3445 = vmatpush1.bf16.msra.mxu0 0
      %3446 = vmatprep.subr.bf16.mxu0 0
      %3447 = vmatpush1.bf16.msra.mxu0 0
      %3448 = vmatprep.subr.bf16.mxu0 0
      %3449 = vmatpush1.bf16.msra.mxu0 0
      %3450 = vmatprep.subr.bf16.mxu0 0
      %3451 = vmatpush1.bf16.msra.mxu0 0
      %3452 = vmatprep.subr.bf16.mxu0 0
      %3453 = vmatpush1.bf16.msra.mxu0 0
      %3454 = vmatprep.subr.bf16.mxu0 0
      %3455 = vmatpush1.bf16.msra.mxu0 0
      %3456 = vmatprep.subr.bf16.mxu0 0
      %3457 = vmatpush1.bf16.msra.mxu0 0
      %3458 = vmatprep.subr.bf16.mxu0 0
      %3459 = vmatpush1.bf16.msra.mxu0 0
      %3460 = vmatprep.mubr.bf16.mxu0 0
      %3461 = vmatmul.mubr.bf16.gmra.mrb[0].mxu0 %v3345
      %v3462 = vpop.f32.mrb[0].mxu0
      %v3463 = vadd.f32 0.0, %v3462
      %v3464 = vpop.f32.mrb[0].mxu0
      %v3465 = vpop.f32.mrb[0].mxu0
      %v3466 = vadd.f32 0.0, %v3465
      %v3467 = vpop.f32.mrb[0].mxu0
      %3468 = vmatprep.mubr.bf16.mxu0 0
      %3469 = vmatmul.mubr.bf16.gmra.mrb[0].mxu0 %v3347
      %v3470 = vpop.f32.mrb[0].mxu0
      %v3471 = vadd.f32 0.0, %v3470
      %v3472 = vpop.f32.mrb[0].mxu0
      %v3473 = vpop.f32.mrb[0].mxu0
      %v3474 = vadd.f32 0.0, %v3473
      %v3475 = vpop.f32.mrb[0].mxu0
      %3476 = vmatprep.mubr.bf16.mxu0 0
      %3477 = vmatmul.mubr.bf16.gmra.mrb[0].mxu0 %v3349
      %v3478 = vpop.f32.mrb[0].mxu0
      %v3479 = vadd.f32 0.0, %v3478
      %v3480 = vpop.f32.mrb[0].mxu0
      %v3481 = vpop.f32.mrb[0].mxu0
      %v3482 = vadd.f32 0.0, %v3481
      %v3483 = vpop.f32.mrb[0].mxu0
      %3484 = vmatprep.mubr.bf16.mxu0 0
      %3485 = vmatmul.mubr.bf16.gmra.mrb[0].mxu0 %v3351
      %v3486 = vpop.f32.mrb[0].mxu0
      %v3487 = vadd.f32 0.0, %v3486
      %v3488 = vpop.f32.mrb[0].mxu0
      %v3489 = vpop.f32.mrb[0].mxu0
      %v3490 = vadd.f32 0.0, %v3489
      %v3491 = vpop.f32.mrb[0].mxu0
      %3492 = vmatprep.mubr.bf16.mxu0 0
      %3493 = vmatmul.mubr.bf16.gmra.mrb[0].mxu0 %v3353
      %v3494 = vpop.f32.mrb[0].mxu0
      %v3495 = vadd.f32 0.0, %v3494
      %v3496 = vpop.f32.mrb[0].mxu0
      %v3497 = vpop.f32.mrb[0].mxu0
      %v3498 = vadd.f32 0.0, %v3497
      %v3499 = vpop.f32.mrb[0].mxu0
      %3500 = vmatprep.mubr.bf16.mxu0 0
      %3501 = vmatmul.mubr.bf16.gmra.mrb[0].mxu0 %v3355
      %v3502 = vpop.f32.mrb[0].mxu0
      %v3503 = vadd.f32 0.0, %v3502
      %v3504 = vpop.f32.mrb[0].mxu0
      %v3505 = vpop.f32.mrb[0].mxu0
      %v3506 = vadd.f32 0.0, %v3505
      %v3507 = vpop.f32.mrb[0].mxu0
      %3508 = vmatprep.mubr.bf16.mxu0 0
      %3509 = vmatmul.mubr.bf16.gmra.mrb[0].mxu0 %v3357
      %v3510 = vpop.f32.mrb[0].mxu0
      %v3511 = vadd.f32 0.0, %v3510
      %v3512 = vpop.f32.mrb[0].mxu0
      %v3513 = vpop.f32.mrb[0].mxu0
      %v3514 = vadd.f32 0.0, %v3513
      %v3515 = vpop.f32.mrb[0].mxu0
      %3516 = vmatprep.mubr.bf16.mxu0 0
      %3517 = vmatmul.mubr.bf16.gmra.mrb[0].mxu0 %v3359
      %v3518 = vpop.f32.mrb[0].mxu0
      %v3519 = vadd.f32 0.0, %v3518
      %v3520 = vpop.f32.mrb[0].mxu0
      %v3521 = vpop.f32.mrb[0].mxu0
      %v3522 = vadd.f32 0.0, %v3521
      %v3523 = vpop.f32.mrb[0].mxu0
      %3524 = vmatprep.mubr.bf16.mxu0 0
      %3525 = vmatmul.mubr.bf16.gmra.mrb[0].mxu0 %v3361
      %v3526 = vpop.f32.mrb[0].mxu0
      %v3527 = vadd.f32 0.0, %v3526
      %v3528 = vpop.f32.mrb[0].mxu0
      %v3529 = vpop.f32.mrb[0].mxu0
      %v3530 = vadd.f32 0.0, %v3529
      %v3531 = vpop.f32.mrb[0].mxu0
      %3532 = vmatprep.mubr.bf16.mxu0 0
      %3533 = vmatmul.mubr.bf16.gmra.mrb[0].mxu0 %v3363
      %v3534 = vpop.f32.mrb[0].mxu0
      %v3535 = vadd.f32 0.0, %v3534
      %v3536 = vpop.f32.mrb[0].mxu0
      %v3537 = vpop.f32.mrb[0].mxu0
      %v3538 = vadd.f32 0.0, %v3537
      %v3539 = vpop.f32.mrb[0].mxu0
      %3540 = vmatprep.mubr.bf16.mxu0 0
      %3541 = vmatmul.mubr.bf16.gmra.mrb[0].mxu0 %v3365
      %v3542 = vpop.f32.mrb[0].mxu0
      %v3543 = vadd.f32 0.0, %v3542
      %v3544 = vpop.f32.mrb[0].mxu0
      %v3545 = vpop.f32.mrb[0].mxu0
      %v3546 = vadd.f32 0.0, %v3545
      %v3547 = vpop.f32.mrb[0].mxu0
      %3548 = vmatprep.mubr.bf16.mxu0 0
      %3549 = vmatmul.mubr.bf16.gmra.mrb[0].mxu0 %v3367
      %v3550 = vpop.f32.mrb[0].mxu0
      %v3551 = vadd.f32 0.0, %v3550
      %v3552 = vpop.f32.mrb[0].mxu0
      %v3553 = vpop.f32.mrb[0].mxu0
      %v3554 = vadd.f32 0.0, %v3553
      %v3555 = vpop.f32.mrb[0].mxu0
      %3556 = vdwg.mxu0
      %v3557 = vadd.f32 %v3294, %v3463
      %v3558 = vadd.f32 %v3295, %v3466
      %v3559 = vadd.f32 %v3296, %v3471
      %v3560 = vadd.f32 %v3297, %v3474
      %v3561 = vadd.f32 %v3298, %v3479
      %v3562 = vadd.f32 %v3299, %v3482
      %v3563 = vadd.f32 %v3300, %v3487
      %v3564 = vadd.f32 %v3301, %v3490
      %v3565 = vadd.f32 %v3302, %v3495
      %v3566 = vadd.f32 %v3303, %v3498
      %v3567 = vadd.f32 %v3304, %v3503
      %v3568 = vadd.f32 %v3305, %v3506
      %v3569 = vadd.f32 %v3306, %v3511
      %v3570 = vadd.f32 %v3307, %v3514
      %v3571 = vadd.f32 %v3308, %v3519
      %v3572 = vadd.f32 %v3309, %v3522
      %v3573 = vadd.f32 %v3310, %v3527
      %v3574 = vadd.f32 %v3311, %v3530
      %v3575 = vadd.f32 %v3312, %v3535
      %v3576 = vadd.f32 %v3313, %v3538
      %v3577 = vadd.f32 %v3314, %v3543
      %v3578 = vadd.f32 %v3315, %v3546
      %v3579 = vadd.f32 %v3316, %v3551
      %v3580 = vadd.f32 %v3317, %v3554
      %3581 = vst [vmem:[%s323] sm:$0xff] %v3557
      %3582 = vst [vmem:[%s323 + $0x8] sm:$0xff] %v3558
      %3583 = vst [vmem:[%s323 + $0x10] sm:$0xff] %v3559
      %3584 = vst [vmem:[%s323 + $0x18] sm:$0xff] %v3560
      %3585 = vst [vmem:[%s323 + $0x20] sm:$0xff] %v3561
      %3586 = vst [vmem:[%s323 + $0x28] sm:$0xff] %v3562
      %3587 = vst [vmem:[%s323 + $0x30] sm:$0xff] %v3563
      %3588 = vst [vmem:[%s323 + $0x38] sm:$0xff] %v3564
      %3589 = vst [vmem:[%s323 + $0x40] sm:$0xff] %v3565
      %3590 = vst [vmem:[%s323 + $0x48] sm:$0xff] %v3566
      %3591 = vst [vmem:[%s323 + $0x50] sm:$0xff] %v3567
      %3592 = vst [vmem:[%s323 + $0x58] sm:$0xff] %v3568
      %3593 = vst [vmem:[%s323 + $0x60] sm:$0xff] %v3569
      %3594 = vst [vmem:[%s323 + $0x68] sm:$0xff] %v3570
      %3595 = vst [vmem:[%s323 + $0x70] sm:$0xff] %v3571
      %3596 = vst [vmem:[%s323 + $0x78] sm:$0xff] %v3572
      %3597 = vst [vmem:[%s323 + $0x80] sm:$0xff] %v3573
      %3598 = vst [vmem:[%s323 + $0x88] sm:$0xff] %v3574
      %3599 = vst [vmem:[%s323 + $0x90] sm:$0xff] %v3575
      %3600 = vst [vmem:[%s323 + $0x98] sm:$0xff] %v3576
      %3601 = vst [vmem:[%s323 + $0xa0] sm:$0xff] %v3577
      %3602 = vst [vmem:[%s323 + $0xa8] sm:$0xff] %v3578
      %3603 = vst [vmem:[%s323 + $0xb0] sm:$0xff] %v3579
      %3604 = vst [vmem:[%s323 + $0xb8] sm:$0xff] %v3580
      %v3605 = vld [vmem:[%s3] sm:$0xff]
      %v3606 = vld [vmem:[%s3 + $0x8] sm:$0xff]
      %v3607 = vld [vmem:[%s3 + $0x10] sm:$0xff]
      %v3608 = vld [vmem:[%s3 + $0x18] sm:$0xff]
      %v3609 = vld [vmem:[%s3 + $0x20] sm:$0xff]
      %v3610 = vld [vmem:[%s3 + $0x28] sm:$0xff]
      %v3611 = vld [vmem:[%s3 + $0x30] sm:$0xff]
      %v3612 = vld [vmem:[%s3 + $0x38] sm:$0xff]
      %v3613 = vld [vmem:[%s3 + $0x40] sm:$0xff]
      %v3614 = vld [vmem:[%s3 + $0x48] sm:$0xff]
      %v3615 = vld [vmem:[%s3 + $0x50] sm:$0xff]
      %v3616 = vld [vmem:[%s3 + $0x58] sm:$0xff]
      %v3617 = vld [vmem:[%s3 + $0x60] sm:$0xff]
      %v3618 = vld [vmem:[%s3 + $0x68] sm:$0xff]
      %v3619 = vld [vmem:[%s3 + $0x70] sm:$0xff]
      %v3620 = vld [vmem:[%s3 + $0x78] sm:$0xff]
      %v3621 = vld [vmem:[%s3 + $0x80] sm:$0xff]
      %v3622 = vld [vmem:[%s3 + $0x88] sm:$0xff]
      %v3623 = vld [vmem:[%s3 + $0x90] sm:$0xff]
      %v3624 = vld [vmem:[%s3 + $0x98] sm:$0xff]
      %v3625 = vld [vmem:[%s3 + $0xa0] sm:$0xff]
      %v3626 = vld [vmem:[%s3 + $0xa8] sm:$0xff]
      %v3627 = vld [vmem:[%s3 + $0xb0] sm:$0xff]
      %v3628 = vld [vmem:[%s3 + $0xb8] sm:$0xff]
      %3630 = vset.pattern.permute.xlu0 0
      %3631 = vperm.xlu0 %3630, %v3605
      %v3632 = vpop.permute.xlu0 %3631
      %3635 = vset.pattern.permute.xlu0 0
      %3636 = vperm.xlu0 %3635, %v3606
      %v3637 = vpop.permute.xlu0 %3636
      %3640 = vset.pattern.permute.xlu0 0
      %3641 = vperm.xlu0 %3640, %v3607
      %v3642 = vpop.permute.xlu0 %3641
      %3645 = vset.pattern.permute.xlu0 0
      %3646 = vperm.xlu0 %3645, %v3608
      %v3647 = vpop.permute.xlu0 %3646
      %3650 = vset.pattern.permute.xlu0 0
      %3651 = vperm.xlu0 %3650, %v3609
      %v3652 = vpop.permute.xlu0 %3651
      %3655 = vset.pattern.permute.xlu0 0
      %3656 = vperm.xlu0 %3655, %v3610
      %v3657 = vpop.permute.xlu0 %3656
      %3660 = vset.pattern.permute.xlu0 0
      %3661 = vperm.xlu0 %3660, %v3611
      %v3662 = vpop.permute.xlu0 %3661
      %3665 = vset.pattern.permute.xlu0 0
      %3666 = vperm.xlu0 %3665, %v3612
      %v3667 = vpop.permute.xlu0 %3666
      %3670 = vset.pattern.permute.xlu0 0
      %3671 = vperm.xlu0 %3670, %v3613
      %v3672 = vpop.permute.xlu0 %3671
      %3675 = vset.pattern.permute.xlu0 0
      %3676 = vperm.xlu0 %3675, %v3614
      %v3677 = vpop.permute.xlu0 %3676
      %3680 = vset.pattern.permute.xlu0 0
      %3681 = vperm.xlu0 %3680, %v3615
      %v3682 = vpop.permute.xlu0 %3681
      %3685 = vset.pattern.permute.xlu0 0
      %3686 = vperm.xlu0 %3685, %v3616
      %v3687 = vpop.permute.xlu0 %3686
      %3690 = vset.pattern.permute.xlu0 0
      %3691 = vperm.xlu0 %3690, %v3617
      %v3692 = vpop.permute.xlu0 %3691
      %3695 = vset.pattern.permute.xlu0 0
      %3696 = vperm.xlu0 %3695, %v3618
      %v3697 = vpop.permute.xlu0 %3696
      %3700 = vset.pattern.permute.xlu0 0
      %3701 = vperm.xlu0 %3700, %v3619
      %v3702 = vpop.permute.xlu0 %3701
      %3705 = vset.pattern.permute.xlu0 0
      %3706 = vperm.xlu0 %3705, %v3620
      %v3707 = vpop.permute.xlu0 %3706
      %3710 = vset.pattern.permute.xlu0 0
      %3711 = vperm.xlu0 %3710, %v3621
      %v3712 = vpop.permute.xlu0 %3711
      %3715 = vset.pattern.permute.xlu0 0
      %3716 = vperm.xlu0 %3715, %v3622
      %v3717 = vpop.permute.xlu0 %3716
      %3720 = vset.pattern.permute.xlu0 0
      %3721 = vperm.xlu0 %3720, %v3623
      %v3722 = vpop.permute.xlu0 %3721
      %3725 = vset.pattern.permute.xlu0 0
      %3726 = vperm.xlu0 %3725, %v3624
      %v3727 = vpop.permute.xlu0 %3726
      %3730 = vset.pattern.permute.xlu0 0
      %3731 = vperm.xlu0 %3730, %v3625
      %v3732 = vpop.permute.xlu0 %3731
      %3735 = vset.pattern.permute.xlu0 0
      %3736 = vperm.xlu0 %3735, %v3626
      %v3737 = vpop.permute.xlu0 %3736
      %3740 = vset.pattern.permute.xlu0 0
      %3741 = vperm.xlu0 %3740, %v3627
      %v3742 = vpop.permute.xlu0 %3741
      %3745 = vset.pattern.permute.xlu0 0
      %3746 = vperm.xlu0 %3745, %v3628
      %v3747 = vpop.permute.xlu0 %3746
      %v3749 = vmul.f32 %v3557, %v3632
      %v3750 = vmul.f32 %v3558, %v3637
      %v3751 = vmul.f32 %v3559, %v3642
      %v3752 = vmul.f32 %v3560, %v3647
      %v3753 = vmul.f32 %v3561, %v3652
      %v3754 = vmul.f32 %v3562, %v3657
      %v3755 = vmul.f32 %v3563, %v3662
      %v3756 = vmul.f32 %v3564, %v3667
      %v3757 = vmul.f32 %v3565, %v3672
      %v3758 = vmul.f32 %v3566, %v3677
      %v3759 = vmul.f32 %v3567, %v3682
      %v3760 = vmul.f32 %v3568, %v3687
      %v3761 = vmul.f32 %v3569, %v3692
      %v3762 = vmul.f32 %v3570, %v3697
      %v3763 = vmul.f32 %v3571, %v3702
      %v3764 = vmul.f32 %v3572, %v3707
      %v3765 = vmul.f32 %v3573, %v3712
      %v3766 = vmul.f32 %v3574, %v3717
      %v3767 = vmul.f32 %v3575, %v3722
      %v3768 = vmul.f32 %v3576, %v3727
      %v3769 = vmul.f32 %v3577, %v3732
      %v3770 = vmul.f32 %v3578, %v3737
      %v3771 = vmul.f32 %v3579, %v3742
      %v3772 = vmul.f32 %v3580, %v3747
      %v3773 = vadd.f32 %v3749, %v3750
      %v3774 = vadd.f32 %v3773, %v3751
      %v3775 = vadd.f32 %v3774, %v3752
      %v3776 = vadd.f32 %v3775, %v3753
      %v3777 = vadd.f32 %v3776, %v3754
      %v3778 = vadd.f32 %v3777, %v3755
      %v3779 = vadd.f32 %v3778, %v3756
      %v3780 = vadd.f32 %v3779, %v3757
      %v3781 = vadd.f32 %v3780, %v3758
      %v3782 = vadd.f32 %v3781, %v3759
      %v3783 = vadd.f32 %v3782, %v3760
      %v3784 = vadd.f32 %v3783, %v3761
      %v3785 = vadd.f32 %v3784, %v3762
      %v3786 = vadd.f32 %v3785, %v3763
      %v3787 = vadd.f32 %v3786, %v3764
      %v3788 = vadd.f32 %v3787, %v3765
      %v3789 = vadd.f32 %v3788, %v3766
      %v3790 = vadd.f32 %v3789, %v3767
      %v3791 = vadd.f32 %v3790, %v3768
      %v3792 = vadd.f32 %v3791, %v3769
      %v3793 = vadd.f32 %v3792, %v3770
      %v3794 = vadd.f32 %v3793, %v3771
      %v3795 = vadd.f32 %v3794, %v3772
      %v3796 = vrot.slane %v3795, 4
      %v3797 = vadd.f32 %v3795, %v3796
      %v3798 = vrot.slane %v3797, 2
      %v3799 = vadd.f32 %v3797, %v3798
      %v3800 = vrot.slane %v3799, 1
      %v3801 = vadd.f32 %v3799, %v3800
      %3802 = vst [vmem:[%s331] sm:$0x1] %v3801
      %v3803 = vmul.f32 %v3557, %v3749
      %v3804 = vmul.f32 %v3558, %v3750
      %v3805 = vmul.f32 %v3559, %v3751
      %v3806 = vmul.f32 %v3560, %v3752
      %v3807 = vmul.f32 %v3561, %v3753
      %v3808 = vmul.f32 %v3562, %v3754
      %v3809 = vmul.f32 %v3563, %v3755
      %v3810 = vmul.f32 %v3564, %v3756
      %v3811 = vmul.f32 %v3565, %v3757
      %v3812 = vmul.f32 %v3566, %v3758
      %v3813 = vmul.f32 %v3567, %v3759
      %v3814 = vmul.f32 %v3568, %v3760
      %v3815 = vmul.f32 %v3569, %v3761
      %v3816 = vmul.f32 %v3570, %v3762
      %v3817 = vmul.f32 %v3571, %v3763
      %v3818 = vmul.f32 %v3572, %v3764
      %v3819 = vmul.f32 %v3573, %v3765
      %v3820 = vmul.f32 %v3574, %v3766
      %v3821 = vmul.f32 %v3575, %v3767
      %v3822 = vmul.f32 %v3576, %v3768
      %v3823 = vmul.f32 %v3577, %v3769
      %v3824 = vmul.f32 %v3578, %v3770
      %v3825 = vmul.f32 %v3579, %v3771
      %v3826 = vmul.f32 %v3580, %v3772
      %v3827 = vadd.f32 %v3803, %v3804
      %v3828 = vadd.f32 %v3827, %v3805
      %v3829 = vadd.f32 %v3828, %v3806
      %v3830 = vadd.f32 %v3829, %v3807
      %v3831 = vadd.f32 %v3830, %v3808
      %v3832 = vadd.f32 %v3831, %v3809
      %v3833 = vadd.f32 %v3832, %v3810
      %v3834 = vadd.f32 %v3833, %v3811
      %v3835 = vadd.f32 %v3834, %v3812
      %v3836 = vadd.f32 %v3835, %v3813
      %v3837 = vadd.f32 %v3836, %v3814
      %v3838 = vadd.f32 %v3837, %v3815
      %v3839 = vadd.f32 %v3838, %v3816
      %v3840 = vadd.f32 %v3839, %v3817
      %v3841 = vadd.f32 %v3840, %v3818
      %v3842 = vadd.f32 %v3841, %v3819
      %v3843 = vadd.f32 %v3842, %v3820
      %v3844 = vadd.f32 %v3843, %v3821
      %v3845 = vadd.f32 %v3844, %v3822
      %v3846 = vadd.f32 %v3845, %v3823
      %v3847 = vadd.f32 %v3846, %v3824
      %v3848 = vadd.f32 %v3847, %v3825
      %v3849 = vadd.f32 %v3848, %v3826
      %v3850 = vrot.slane %v3849, 4
      %v3851 = vadd.f32 %v3849, %v3850
      %v3852 = vrot.slane %v3851, 2
      %v3853 = vadd.f32 %v3851, %v3852
      %v3854 = vrot.slane %v3853, 1
      %v3855 = vadd.f32 %v3853, %v3854
      %3856 = vst [vmem:[%s338] sm:$0x1] %v3855
      %s3857 = smul.u32 %s23, 2
      %s3858 = sadd.s32 %s3857, %s24
      %s3859 = smul.u32 24, %s3858
      %p3860 = scmp.lt.s32.totalorder %s3859, 95
      %s3861 = scalar_select %p3860, %s3859, 95
      %s3862 = smul.addr %s3861, 8
      %s3863 = scalar_lea.vmem %s5, %s3862
      %s3864 = smul.u32 %s23, 2
      %s3865 = sadd.s32 %s3864, %s24
      %p3866 = scmp.lt.s32.totalorder %s3865, 3
      %s3867 = scalar_select %p3866, %s3865, 3
      %s3868 = scalar_lea.vmem %s6, %s3867
      %s3869 = smul.u32 %s23, 2
      %s3870 = sadd.s32 %s3869, %s24
      %p3871 = scmp.lt.s32.totalorder %s3870, 3
      %s3872 = scalar_select %p3871, %s3870, 3
      %s3873 = scalar_lea.vmem %s7, %s3872
      // Predicated region
      $region41: #{model_forward.4} parent=39 // pred_check
        %p3874 = pneg %p163
      $region42: #{model_forward.4} parent=39 // pred_check_branch
        %3876 = sbr.rel (%p3874) target = $region44
      $region43: #{model_forward.4} parent=39 // pred_region
        %s3877 = smul.u32 %s23, 2
        %s3878 = sadd.s32 %s3877, %s24
        %s3879 = smul.u32 24, %s3878
      $region44: #{model_forward.4} parent=39 // pred_fallthru
        _
      // Predicated region
      $region45: #{model_forward.4} parent=39 // pred_check
        %p3880 = pneg %p193
      $region46: #{model_forward.4} parent=39 // pred_check_branch
        %3882 = sbr.rel (%p3880) target = $region48
      $region47: #{model_forward.4} parent=39 // pred_region
        %s3883 = smul.u32 %s23, 2
        %s3884 = sadd.s32 %s3883, %s24
      $region48: #{model_forward.4} parent=39 // pred_fallthru
        _
      // Predicated region
      $region49: #{model_forward.4} parent=39 // pred_check
        %p3885 = pneg %p223
      $region50: #{model_forward.4} parent=39 // pred_check_branch
        %3887 = sbr.rel (%p3885) target = $region52
      $region51: #{model_forward.4} parent=39 // pred_region
        %s3888 = smul.u32 %s23, 2
        %s3889 = sadd.s32 %s3888, %s24
      $region52: #{model_forward.4} parent=39 // pred_fallthru
        _
    $region40: #{model_forward.4} parent=5 // pred_fallthru
      _
    %p3890 = scmp.le.s32.totalorder 2, %s14
    // Predicated region
    $region53: #{model_forward.4} parent=5 // pred_check
      %p3891 = pneg %p3890
    $region54: #{model_forward.4} parent=5 // pred_check_branch
      %3893 = sbr.rel (%p3891) target = $region56
    $region55: #{model_forward.4} parent=5 // pred_region
      %s3894 = ssub.s32 %s14, 2
      // Predicated region
      $region57: #{model_forward.4} parent=55 // pred_check
        %p3895 = pneg %p169
      $region58: #{model_forward.4} parent=55 // pred_check_branch
        %3897 = sbr.rel (%p3895) target = $region60
      $region59: #{model_forward.4} parent=55 // pred_region
        %s3898 = smul.u32 %s25, 2
        %s3899 = sadd.s32 %s3898, %s26
        %s3900 = smul.u32 24, %s3899
        %p3901 = scmp.lt.s32.totalorder %s3900, 95
        %s3902 = scalar_select %p3901, %s3900, 95
        %s3903 = smul.addr %s3902, 8
        %s3904 = scalar_lea.vmem %s5, %s3903
      $region60: #{model_forward.4} parent=55 // pred_fallthru
        _
      // Predicated region
      $region61: #{model_forward.4} parent=55 // pred_check
        %p3905 = pneg %p199
      $region62: #{model_forward.4} parent=55 // pred_check_branch
        %3907 = sbr.rel (%p3905) target = $region64
      $region63: #{model_forward.4} parent=55 // pred_region
        %s3908 = smul.u32 %s25, 2
        %s3909 = sadd.s32 %s3908, %s26
        %p3910 = scmp.lt.s32.totalorder %s3909, 3
        %s3911 = scalar_select %p3910, %s3909, 3
        %s3912 = scalar_lea.vmem %s6, %s3911
      $region64: #{model_forward.4} parent=55 // pred_fallthru
        _
      // Predicated region
      $region65: #{model_forward.4} parent=55 // pred_check
        %p3913 = pneg %p229
      $region66: #{model_forward.4} parent=55 // pred_check_branch
        %3915 = sbr.rel (%p3913) target = $region68
      $region67: #{model_forward.4} parent=55 // pred_region
        %s3916 = smul.u32 %s25, 2
        %s3917 = sadd.s32 %s3916, %s26
        %p3918 = scmp.lt.s32.totalorder %s3917, 3
        %s3919 = scalar_select %p3918, %s3917, 3
        %s3920 = scalar_lea.vmem %s7, %s3919
      $region68: #{model_forward.4} parent=55 // pred_fallthru
        _
    $region56: #{model_forward.4} parent=5 // pred_fallthru
      _
  $region6: #{model_forward.4} parent=0 // loop_footer
    %s18 = sadd.s32 1, %s14
  $region7: #{model_forward.4} parent=0 // loop_footer_branch
    %13 = sbr.rel target = $region3
  $region8: #{model_forward.4} parent=0 // loop_exit
    _

</llo_original>
